<compile_context>
chip_gen: v7x
topology: tpu7x:2x2x1
jax: 0.10.0
libtpu: 0.0.40
codegen_flags: <defaults>
</compile_context>

<pallas_src>
import functools

import jax
import jax.numpy as jnp
from jax.experimental import pallas as pl
from jax.experimental.pallas import tpu as pltpu


_LANE = 128


def _ceil_to(v, m):
    return ((v + m - 1) // m) * m


# ----------------------------- Pallas kernel -----------------------------

def _conv_bn_act_kernel(*refs, taps, out_hw, apply_relu, has_residual):
    """Fused conv (tap-accumulated matmuls) + folded-BN bias + residual + ReLU.

    refs = (x_ref, w_ref, b_ref, [res_ref,] o_ref)
      x_ref  : (1, P, Hs, Ws, Cin) f32  space-to-depth'd padded input, 1 image
      w_ref  : (T, Cin, Cpad)      bf16 per-tap weights, BN scale pre-folded
      b_ref  : (1, Cpad)           f32  folded BN bias
      res_ref: (1, M, Cpad)        bf16 residual (only when has_residual)
      o_ref  : (1, M, Cpad)             M = Ho*Wo
    """
    if has_residual:
        x_ref, w_ref, b_ref, r_ref, o_ref = refs
    else:
        x_ref, w_ref, b_ref, o_ref = refs
        r_ref = None
    ho, wo = out_hw
    cin = x_ref.shape[-1]

    acc = None
    for t, (phase, qi, qj) in enumerate(taps):
        # Static window slice of the current image's VMEM block (no HBM
        # im2col).  Slices/reshape run on the native 32-bit tiled layout;
        # the MXU operands are cast to bf16.
        tap = x_ref[0, phase, qi:qi + ho, qj:qj + wo, :]        # (ho, wo, cin)
        lhs = tap.reshape(ho * wo, cin).astype(jnp.bfloat16)    # (M, cin)
        part = jnp.dot(lhs, w_ref[t], preferred_element_type=jnp.float32)
        acc = part if acc is None else acc + part

    y = acc + b_ref[...]                     # BN scale already folded into w
    if has_residual:
        y = y + r_ref[0].astype(jnp.float32)
    if apply_relu:
        y = jnp.maximum(y, 0.0)
    o_ref[0] = y.astype(o_ref.dtype)


def _pallas_conv_bn_act(x_s2d, w, b, residual, *, taps, out_hw, apply_relu,
                        out_dtype):
    """x_s2d: (N, P, Hs, Ws, Cin) f32; w: (T, Cin, Cpad) bf16; b: (1, Cpad) f32;
    residual: (N, M, Cpad) bf16 or None.  Returns (N, M, Cpad) out_dtype."""
    n = x_s2d.shape[0]
    ho, wo = out_hw
    m = ho * wo
    t, cin, cpad = w.shape
    has_res = residual is not None

    kernel = functools.partial(
        _conv_bn_act_kernel, taps=tuple(taps), out_hw=(ho, wo),
        apply_relu=apply_relu, has_residual=has_res)

    in_specs = [
        pl.BlockSpec((1,) + x_s2d.shape[1:],
                     lambda i: (i, 0, 0, 0, 0)),               # one image
        pl.BlockSpec(w.shape, lambda i: (0, 0, 0)),            # full weights
        pl.BlockSpec(b.shape, lambda i: (0, 0)),               # folded bias
    ]
    args = [x_s2d, w, b]
    if has_res:
        in_specs.append(pl.BlockSpec((1, m, cpad), lambda i: (i, 0, 0)))
        args.append(residual)

    flops = 2 * n * m * t * cin * cpad
    bytes_accessed = int(
        x_s2d.size * x_s2d.dtype.itemsize
        + w.size * w.dtype.itemsize
        + b.size * b.dtype.itemsize
        + (residual.size * residual.dtype.itemsize if has_res else 0)
        + n * m * cpad * jnp.dtype(out_dtype).itemsize)

    return pl.pallas_call(
        kernel,
        out_shape=jax.ShapeDtypeStruct((n, m, cpad), out_dtype),
        grid_spec=pltpu.PrefetchScalarGridSpec(
            num_scalar_prefetch=0,
            grid=(n,),
            in_specs=in_specs,
            out_specs=pl.BlockSpec((1, m, cpad), lambda i: (i, 0, 0)),
        ),
        compiler_params=pltpu.CompilerParams(
            dimension_semantics=("parallel",)),
        cost_estimate=pl.CostEstimate(
            flops=int(flops), transcendentals=0,
            bytes_accessed=bytes_accessed),
    )(*args)


# ------------------------------ JAX glue ---------------------------------

def _space_to_depth_pad1(x, stride):
    """x: (N, H, W, C) -> (N, stride*stride, Hs, Ws, C) f32 with 1px zero pad,
    laid out so every 3x3 (or centered 1x1) tap at this stride is a contiguous
    in-kernel window slice.  Also returns (Ho, Wo) of the 3x3/pad=1 conv."""
    n, h, w, c = x.shape
    s = stride
    ho = (h - 1) // s + 1
    wo = (w - 1) // s + 1
    qmax = 2 // s                                  # max(di // s) for a 3x3 tap
    hs = max(-(-(h + 2) // s), qmax + ho)
    ws = max(-(-(w + 2) // s), qmax + wo)
    xp = jnp.pad(x.astype(jnp.float32),
                 ((0, 0), (1, s * hs - h - 1), (1, s * ws - w - 1), (0, 0)))
    xt = xp.reshape(n, hs, s, ws, s, c)
    xt = jnp.transpose(xt, (0, 2, 4, 1, 3, 5)).reshape(n, s * s, hs, ws, c)
    return xt, ho, wo


def _tap(di, dj, s):
    """Conv tap (di, dj) in padded coords -> (phase, qi, qj) in s2d coords."""
    return ((di % s) * s + (dj % s), di // s, dj // s)


def _fold_conv_bn(w, gamma, beta, mean, var, cpad, eps=1e-5):
    """w: (Cout, Cin, KH, KW) -> ((KH*KW, Cin, cpad) bf16, (1, cpad) f32) with
    the BN scale folded into the weights (inference-mode BatchNorm)."""
    cout, cin, kh, kw = w.shape
    scale = gamma / jnp.sqrt(var + eps)
    bias = beta - mean * scale
    wm = jnp.transpose(w, (2, 3, 1, 0)).reshape(kh * kw, cin, cout)
    wm = wm * scale[None, None, :]
    wm = jnp.pad(wm, ((0, 0), (0, 0), (0, cpad - cout)))
    bm = jnp.pad(bias, (0, cpad - cout)).reshape(1, cpad)
    return wm.astype(jnp.bfloat16), bm.astype(jnp.float32)


def basic_block_forward(x_nchw, params, stride):
    """Matches BasicBlock.forward (eval-mode BN).  x_nchw: (N, Cin, H, W)."""
    x = jnp.transpose(x_nchw, (0, 2, 3, 1)).astype(jnp.float32)   # NHWC
    n, h, w, cin = x.shape
    planes = params["conv1_w"].shape[0]
    cpad = _ceil_to(planes, _LANE)

    # conv1 (3x3, stride) + bn1 + relu
    taps3 = tuple(_tap(di, dj, stride) for di in range(3) for dj in range(3))
    x1, ho, wo = _space_to_depth_pad1(x, stride)
    w1, b1 = _fold_conv_bn(params["conv1_w"], params["bn1_gamma"],
                           params["bn1_beta"], params["bn1_mean"],
                           params["bn1_var"], cpad)
    out1 = _pallas_conv_bn_act(x1, w1, b1, None, taps=taps3, out_hw=(ho, wo),
                               apply_relu=True, out_dtype=jnp.bfloat16)

    # identity path: 1x1 strided conv + bn (reuses x1 -- the 1x1/stride conv is
    # exactly the center tap of the padded 3x3 frame), else channel-padded x.
    if stride != 1 or cin != planes:
        wd, bd = _fold_conv_bn(params["down_w"], params["down_gamma"],
                               params["down_beta"], params["down_mean"],
                               params["down_var"], cpad)
        identity = _pallas_conv_bn_act(
            x1, wd, bd, None, taps=(_tap(1, 1, stride),), out_hw=(ho, wo),
            apply_relu=False, out_dtype=jnp.bfloat16)
    else:
        identity = jnp.pad(x.reshape(n, h * w, cin),
                           ((0, 0), (0, 0), (0, cpad - cin))
                           ).astype(jnp.bfloat16)

    # conv2 (3x3, stride=1) + bn2 + residual add + relu (fused in-kernel)
    out1_img = out1[..., :planes].reshape(n, ho, wo, planes)
    taps3_1 = tuple(_tap(di, dj, 1) for di in range(3) for dj in range(3))
    x2, ho2, wo2 = _space_to_depth_pad1(out1_img, 1)
    w2, b2 = _fold_conv_bn(params["conv2_w"], params["bn2_gamma"],
                           params["bn2_beta"], params["bn2_mean"],
                           params["bn2_var"], cpad)
    out2 = _pallas_conv_bn_act(x2, w2, b2, identity, taps=taps3_1,
                               out_hw=(ho2, wo2), apply_relu=True,
                               out_dtype=jnp.float32)

    out = out2.reshape(n, ho, wo, cpad)[..., :planes]
    return jnp.transpose(out, (0, 3, 1, 2))                      # back to NCHW


# ------------------------------ example ----------------------------------

if __name__ == "__main__":
    key = jax.random.PRNGKey(0)
    ks = jax.random.split(key, 12)

    in_planes, planes, stride = 4, 8, 2
    N, H, W = 2, 16, 16

    x = jax.random.normal(ks[0], (N, in_planes, H, W), jnp.float32)

    params = {
        "conv1_w": 0.1 * jax.random.normal(ks[1], (planes, in_planes, 3, 3), jnp.float32),
        "bn1_gamma": 1.0 + 0.1 * jax.random.normal(ks[2], (planes,), jnp.float32),
        "bn1_beta": 0.1 * jax.random.normal(ks[3], (planes,), jnp.float32),
        "bn1_mean": 0.05 * jax.random.normal(ks[4], (planes,), jnp.float32),
        "bn1_var": jnp.ones((planes,), jnp.float32),
        "conv2_w": 0.1 * jax.random.normal(ks[5], (planes, planes, 3, 3), jnp.float32),
        "bn2_gamma": 1.0 + 0.1 * jax.random.normal(ks[6], (planes,), jnp.float32),
        "bn2_beta": 0.1 * jax.random.normal(ks[7], (planes,), jnp.float32),
        "bn2_mean": 0.05 * jax.random.normal(ks[8], (planes,), jnp.float32),
        "bn2_var": jnp.ones((planes,), jnp.float32),
        "down_w": 0.1 * jax.random.normal(ks[9], (planes, in_planes, 1, 1), jnp.float32),
        "down_gamma": 1.0 + 0.1 * jax.random.normal(ks[10], (planes,), jnp.float32),
        "down_beta": 0.1 * jax.random.normal(ks[11], (planes,), jnp.float32),
        "down_mean": jnp.zeros((planes,), jnp.float32),
        "down_var": jnp.ones((planes,), jnp.float32),
    }

    fwd = jax.jit(functools.partial(basic_block_forward, stride=stride))
    out = fwd(x, params)
    jax.block_until_ready(out)
    assert out.shape == (N, planes, H // stride, W // stride), out.shape
    print("KERNEL_OK")
</pallas_src>

<mosaic_0001>
module attributes {stable_mosaic.version = 11 : i64} {
  func.func @_conv_bn_act_kernel(%arg0: i32, %arg1: memref<1x4x9x9x4xf32, #tpu.memory_space<vmem>>, %arg2: memref<9x4x128xbf16, #tpu.memory_space<vmem>>, %arg3: memref<1x128xf32, #tpu.memory_space<vmem>>, %arg4: memref<1x64x128xbf16, #tpu.memory_space<vmem>>) attributes {dimension_semantics = [#tpu.dimension_semantics<parallel>], iteration_bounds = array<i64: 2>, scalar_prefetch = 0 : i64, scratch_operands = 0 : i64, tpu.core_type = #tpu.core_type<tc>, window_params = [{transform_indices = @transform_0, window_bounds = array<i64: 1, 4, 9, 9, 4>}, {pipeline_mode = #tpu.pipeline_mode<synchronous>, transform_indices = @transform_1, window_bounds = array<i64: 9, 4, 128>}, {pipeline_mode = #tpu.pipeline_mode<synchronous>, transform_indices = @transform_2, window_bounds = array<i64: 1, 128>}, {transform_indices = @transform_3, window_bounds = array<i64: 1, 64, 128>}]} {
    %c0 = arith.constant 0 : index
    %c0_0 = arith.constant 0 : index
    %c0_1 = arith.constant 0 : index
    %c0_2 = arith.constant 0 : index
    %c0_3 = arith.constant 0 : index
    %0 = vector.load %arg1[%c0, %c0_0, %c0_1, %c0_2, %c0_3] : memref<1x4x9x9x4xf32, #tpu.memory_space<vmem>>, vector<1x1x8x8x4xf32>
    %1 = vector.shape_cast %0 : vector<1x1x8x8x4xf32> to vector<8x8x4xf32>
    %2 = vector.shape_cast %1 : vector<8x8x4xf32> to vector<64x4xf32>
    %3 = arith.truncf %2 : vector<64x4xf32> to vector<64x4xbf16>
    %c0_4 = arith.constant 0 : index
    %c0_5 = arith.constant 0 : index
    %c0_6 = arith.constant 0 : index
    %4 = vector.load %arg2[%c0_4, %c0_5, %c0_6] : memref<9x4x128xbf16, #tpu.memory_space<vmem>>, vector<1x4x128xbf16>
    %5 = vector.shape_cast %4 : vector<1x4x128xbf16> to vector<4x128xbf16>
    %cst = arith.constant dense<0.000000e+00> : vector<64x128xf32>
    %6 = tpu.matmul %3, %5, %cst {dimension_numbers = #tpu.dot_dimension_numbers<[1], [0], [0], [1], [0, 0, 1, 1], [], []>} : vector<64x4xbf16>, vector<4x128xbf16>, vector<64x128xf32> -> vector<64x128xf32>
    %c0_7 = arith.constant 0 : index
    %c1 = arith.constant 1 : index
    %c0_8 = arith.constant 0 : index
    %c0_9 = arith.constant 0 : index
    %c0_10 = arith.constant 0 : index
    %7 = vector.load %arg1[%c0_7, %c1, %c0_8, %c0_9, %c0_10] : memref<1x4x9x9x4xf32, #tpu.memory_space<vmem>>, vector<1x1x8x8x4xf32>
    %8 = vector.shape_cast %7 : vector<1x1x8x8x4xf32> to vector<8x8x4xf32>
    %9 = vector.shape_cast %8 : vector<8x8x4xf32> to vector<64x4xf32>
    %10 = arith.truncf %9 : vector<64x4xf32> to vector<64x4xbf16>
    %c1_11 = arith.constant 1 : index
    %c0_12 = arith.constant 0 : index
    %c0_13 = arith.constant 0 : index
    %11 = vector.load %arg2[%c1_11, %c0_12, %c0_13] : memref<9x4x128xbf16, #tpu.memory_space<vmem>>, vector<1x4x128xbf16>
    %12 = vector.shape_cast %11 : vector<1x4x128xbf16> to vector<4x128xbf16>
    %cst_14 = arith.constant dense<0.000000e+00> : vector<64x128xf32>
    %13 = tpu.matmul %10, %12, %cst_14 {dimension_numbers = #tpu.dot_dimension_numbers<[1], [0], [0], [1], [0, 0, 1, 1], [], []>} : vector<64x4xbf16>, vector<4x128xbf16>, vector<64x128xf32> -> vector<64x128xf32>
    %14 = arith.addf %6, %13 : vector<64x128xf32>
    %c0_15 = arith.constant 0 : index
    %c0_16 = arith.constant 0 : index
    %c0_17 = arith.constant 0 : index
    %c1_18 = arith.constant 1 : index
    %c0_19 = arith.constant 0 : index
    %15 = vector.load %arg1[%c0_15, %c0_16, %c0_17, %c1_18, %c0_19] : memref<1x4x9x9x4xf32, #tpu.memory_space<vmem>>, vector<1x1x8x8x4xf32>
    %16 = vector.shape_cast %15 : vector<1x1x8x8x4xf32> to vector<8x8x4xf32>
    %17 = vector.shape_cast %16 : vector<8x8x4xf32> to vector<64x4xf32>
    %18 = arith.truncf %17 : vector<64x4xf32> to vector<64x4xbf16>
    %c2 = arith.constant 2 : index
    %c0_20 = arith.constant 0 : index
    %c0_21 = arith.constant 0 : index
    %19 = vector.load %arg2[%c2, %c0_20, %c0_21] : memref<9x4x128xbf16, #tpu.memory_space<vmem>>, vector<1x4x128xbf16>
    %20 = vector.shape_cast %19 : vector<1x4x128xbf16> to vector<4x128xbf16>
    %cst_22 = arith.constant dense<0.000000e+00> : vector<64x128xf32>
    %21 = tpu.matmul %18, %20, %cst_22 {dimension_numbers = #tpu.dot_dimension_numbers<[1], [0], [0], [1], [0, 0, 1, 1], [], []>} : vector<64x4xbf16>, vector<4x128xbf16>, vector<64x128xf32> -> vector<64x128xf32>
    %22 = arith.addf %14, %21 : vector<64x128xf32>
    %c0_23 = arith.constant 0 : index
    %c2_24 = arith.constant 2 : index
    %c0_25 = arith.constant 0 : index
    %c0_26 = arith.constant 0 : index
    %c0_27 = arith.constant 0 : index
    %23 = vector.load %arg1[%c0_23, %c2_24, %c0_25, %c0_26, %c0_27] : memref<1x4x9x9x4xf32, #tpu.memory_space<vmem>>, vector<1x1x8x8x4xf32>
    %24 = vector.shape_cast %23 : vector<1x1x8x8x4xf32> to vector<8x8x4xf32>
    %25 = vector.shape_cast %24 : vector<8x8x4xf32> to vector<64x4xf32>
    %26 = arith.truncf %25 : vector<64x4xf32> to vector<64x4xbf16>
    %c3 = arith.constant 3 : index
    %c0_28 = arith.constant 0 : index
    %c0_29 = arith.constant 0 : index
    %27 = vector.load %arg2[%c3, %c0_28, %c0_29] : memref<9x4x128xbf16, #tpu.memory_space<vmem>>, vector<1x4x128xbf16>
    %28 = vector.shape_cast %27 : vector<1x4x128xbf16> to vector<4x128xbf16>
    %cst_30 = arith.constant dense<0.000000e+00> : vector<64x128xf32>
    %29 = tpu.matmul %26, %28, %cst_30 {dimension_numbers = #tpu.dot_dimension_numbers<[1], [0], [0], [1], [0, 0, 1, 1], [], []>} : vector<64x4xbf16>, vector<4x128xbf16>, vector<64x128xf32> -> vector<64x128xf32>
    %30 = arith.addf %22, %29 : vector<64x128xf32>
    %c0_31 = arith.constant 0 : index
    %c3_32 = arith.constant 3 : index
    %c0_33 = arith.constant 0 : index
    %c0_34 = arith.constant 0 : index
    %c0_35 = arith.constant 0 : index
    %31 = vector.load %arg1[%c0_31, %c3_32, %c0_33, %c0_34, %c0_35] : memref<1x4x9x9x4xf32, #tpu.memory_space<vmem>>, vector<1x1x8x8x4xf32>
    %32 = vector.shape_cast %31 : vector<1x1x8x8x4xf32> to vector<8x8x4xf32>
    %33 = vector.shape_cast %32 : vector<8x8x4xf32> to vector<64x4xf32>
    %34 = arith.truncf %33 : vector<64x4xf32> to vector<64x4xbf16>
    %c4 = arith.constant 4 : index
    %c0_36 = arith.constant 0 : index
    %c0_37 = arith.constant 0 : index
    %35 = vector.load %arg2[%c4, %c0_36, %c0_37] : memref<9x4x128xbf16, #tpu.memory_space<vmem>>, vector<1x4x128xbf16>
    %36 = vector.shape_cast %35 : vector<1x4x128xbf16> to vector<4x128xbf16>
    %cst_38 = arith.constant dense<0.000000e+00> : vector<64x128xf32>
    %37 = tpu.matmul %34, %36, %cst_38 {dimension_numbers = #tpu.dot_dimension_numbers<[1], [0], [0], [1], [0, 0, 1, 1], [], []>} : vector<64x4xbf16>, vector<4x128xbf16>, vector<64x128xf32> -> vector<64x128xf32>
    %38 = arith.addf %30, %37 : vector<64x128xf32>
    %c0_39 = arith.constant 0 : index
    %c2_40 = arith.constant 2 : index
    %c0_41 = arith.constant 0 : index
    %c1_42 = arith.constant 1 : index
    %c0_43 = arith.constant 0 : index
    %39 = vector.load %arg1[%c0_39, %c2_40, %c0_41, %c1_42, %c0_43] : memref<1x4x9x9x4xf32, #tpu.memory_space<vmem>>, vector<1x1x8x8x4xf32>
    %40 = vector.shape_cast %39 : vector<1x1x8x8x4xf32> to vector<8x8x4xf32>
    %41 = vector.shape_cast %40 : vector<8x8x4xf32> to vector<64x4xf32>
    %42 = arith.truncf %41 : vector<64x4xf32> to vector<64x4xbf16>
    %c5 = arith.constant 5 : index
    %c0_44 = arith.constant 0 : index
    %c0_45 = arith.constant 0 : index
    %43 = vector.load %arg2[%c5, %c0_44, %c0_45] : memref<9x4x128xbf16, #tpu.memory_space<vmem>>, vector<1x4x128xbf16>
    %44 = vector.shape_cast %43 : vector<1x4x128xbf16> to vector<4x128xbf16>
    %cst_46 = arith.constant dense<0.000000e+00> : vector<64x128xf32>
    %45 = tpu.matmul %42, %44, %cst_46 {dimension_numbers = #tpu.dot_dimension_numbers<[1], [0], [0], [1], [0, 0, 1, 1], [], []>} : vector<64x4xbf16>, vector<4x128xbf16>, vector<64x128xf32> -> vector<64x128xf32>
    %46 = arith.addf %38, %45 : vector<64x128xf32>
    %c0_47 = arith.constant 0 : index
    %c0_48 = arith.constant 0 : index
    %c1_49 = arith.constant 1 : index
    %c0_50 = arith.constant 0 : index
    %c0_51 = arith.constant 0 : index
    %47 = vector.load %arg1[%c0_47, %c0_48, %c1_49, %c0_50, %c0_51] : memref<1x4x9x9x4xf32, #tpu.memory_space<vmem>>, vector<1x1x8x8x4xf32>
    %48 = vector.shape_cast %47 : vector<1x1x8x8x4xf32> to vector<8x8x4xf32>
    %49 = vector.shape_cast %48 : vector<8x8x4xf32> to vector<64x4xf32>
    %50 = arith.truncf %49 : vector<64x4xf32> to vector<64x4xbf16>
    %c6 = arith.constant 6 : index
    %c0_52 = arith.constant 0 : index
    %c0_53 = arith.constant 0 : index
    %51 = vector.load %arg2[%c6, %c0_52, %c0_53] : memref<9x4x128xbf16, #tpu.memory_space<vmem>>, vector<1x4x128xbf16>
    %52 = vector.shape_cast %51 : vector<1x4x128xbf16> to vector<4x128xbf16>
    %cst_54 = arith.constant dense<0.000000e+00> : vector<64x128xf32>
    %53 = tpu.matmul %50, %52, %cst_54 {dimension_numbers = #tpu.dot_dimension_numbers<[1], [0], [0], [1], [0, 0, 1, 1], [], []>} : vector<64x4xbf16>, vector<4x128xbf16>, vector<64x128xf32> -> vector<64x128xf32>
    %54 = arith.addf %46, %53 : vector<64x128xf32>
    %c0_55 = arith.constant 0 : index
    %c1_56 = arith.constant 1 : index
    %c1_57 = arith.constant 1 : index
    %c0_58 = arith.constant 0 : index
    %c0_59 = arith.constant 0 : index
    %55 = vector.load %arg1[%c0_55, %c1_56, %c1_57, %c0_58, %c0_59] : memref<1x4x9x9x4xf32, #tpu.memory_space<vmem>>, vector<1x1x8x8x4xf32>
    %56 = vector.shape_cast %55 : vector<1x1x8x8x4xf32> to vector<8x8x4xf32>
    %57 = vector.shape_cast %56 : vector<8x8x4xf32> to vector<64x4xf32>
    %58 = arith.truncf %57 : vector<64x4xf32> to vector<64x4xbf16>
    %c7 = arith.constant 7 : index
    %c0_60 = arith.constant 0 : index
    %c0_61 = arith.constant 0 : index
    %59 = vector.load %arg2[%c7, %c0_60, %c0_61] : memref<9x4x128xbf16, #tpu.memory_space<vmem>>, vector<1x4x128xbf16>
    %60 = vector.shape_cast %59 : vector<1x4x128xbf16> to vector<4x128xbf16>
    %cst_62 = arith.constant dense<0.000000e+00> : vector<64x128xf32>
    %61 = tpu.matmul %58, %60, %cst_62 {dimension_numbers = #tpu.dot_dimension_numbers<[1], [0], [0], [1], [0, 0, 1, 1], [], []>} : vector<64x4xbf16>, vector<4x128xbf16>, vector<64x128xf32> -> vector<64x128xf32>
    %62 = arith.addf %54, %61 : vector<64x128xf32>
    %c0_63 = arith.constant 0 : index
    %c0_64 = arith.constant 0 : index
    %c1_65 = arith.constant 1 : index
    %c1_66 = arith.constant 1 : index
    %c0_67 = arith.constant 0 : index
    %63 = vector.load %arg1[%c0_63, %c0_64, %c1_65, %c1_66, %c0_67] : memref<1x4x9x9x4xf32, #tpu.memory_space<vmem>>, vector<1x1x8x8x4xf32>
    %64 = vector.shape_cast %63 : vector<1x1x8x8x4xf32> to vector<8x8x4xf32>
    %65 = vector.shape_cast %64 : vector<8x8x4xf32> to vector<64x4xf32>
    %66 = arith.truncf %65 : vector<64x4xf32> to vector<64x4xbf16>
    %c8 = arith.constant 8 : index
    %c0_68 = arith.constant 0 : index
    %c0_69 = arith.constant 0 : index
    %67 = vector.load %arg2[%c8, %c0_68, %c0_69] : memref<9x4x128xbf16, #tpu.memory_space<vmem>>, vector<1x4x128xbf16>
    %68 = vector.shape_cast %67 : vector<1x4x128xbf16> to vector<4x128xbf16>
    %cst_70 = arith.constant dense<0.000000e+00> : vector<64x128xf32>
    %69 = tpu.matmul %66, %68, %cst_70 {dimension_numbers = #tpu.dot_dimension_numbers<[1], [0], [0], [1], [0, 0, 1, 1], [], []>} : vector<64x4xbf16>, vector<4x128xbf16>, vector<64x128xf32> -> vector<64x128xf32>
    %70 = arith.addf %62, %69 : vector<64x128xf32>
    %c0_71 = arith.constant 0 : index
    %c0_72 = arith.constant 0 : index
    %71 = vector.load %arg3[%c0_71, %c0_72] : memref<1x128xf32, #tpu.memory_space<vmem>>, vector<1x128xf32>
    %72 = vector.broadcast %71 : vector<1x128xf32> to vector<64x128xf32>
    %73 = arith.addf %70, %72 : vector<64x128xf32>
    %cst_73 = arith.constant 0.000000e+00 : f32
    %74 = vector.broadcast %cst_73 : f32 to vector<64x128xf32>
    %75 = arith.maximumf %73, %74 : vector<64x128xf32>
    %76 = arith.truncf %75 : vector<64x128xf32> to vector<64x128xbf16>
    %c0_74 = arith.constant 0 : index
    %c0_75 = arith.constant 0 : index
    %c0_76 = arith.constant 0 : index
    %77 = vector.load %arg4[%c0_74, %c0_75, %c0_76] : memref<1x64x128xbf16, #tpu.memory_space<vmem>>, vector<1x64x128xbf16>
    %78 = vector.shape_cast %77 : vector<1x64x128xbf16> to vector<64x128xbf16>
    %79 = vector.shape_cast %76 : vector<64x128xbf16> to vector<1x64x128xbf16>
    tpu.vector_store %arg4[%c0_74, %c0_75, %c0_76], %79 {strides = array<i32>} : memref<1x64x128xbf16, #tpu.memory_space<vmem>>, vector<1x64x128xbf16>,
    return
  }
  func.func @transform_0(%arg0: i32) -> (i32, i32, i32, i32, i32) {
    %c0_i32 = arith.constant 0 : i32
    %c0_i32_0 = arith.constant 0 : i32
    %c0_i32_1 = arith.constant 0 : i32
    %c0_i32_2 = arith.constant 0 : i32
    %c0_i32_3 = arith.constant 0 : i32
    return %arg0, %c0_i32, %c0_i32_0, %c0_i32_1, %c0_i32_2 : i32, i32, i32, i32, i32
  }
  func.func @transform_1(%arg0: i32) -> (i32, i32, i32) {
    %c0_i32 = arith.constant 0 : i32
    %c0_i32_0 = arith.constant 0 : i32
    %c0_i32_1 = arith.constant 0 : i32
    %c0_i32_2 = arith.constant 0 : i32
    return %c0_i32, %c0_i32_0, %c0_i32_1 : i32, i32, i32
  }
  func.func @transform_2(%arg0: i32) -> (i32, i32) {
    %c0_i32 = arith.constant 0 : i32
    %c0_i32_0 = arith.constant 0 : i32
    %c0_i32_1 = arith.constant 0 : i32
    return %c0_i32, %c0_i32_0 : i32, i32
  }
  func.func @transform_3(%arg0: i32) -> (i32, i32, i32) {
    %c0_i32 = arith.constant 0 : i32
    %c0_i32_0 = arith.constant 0 : i32
    %c0_i32_1 = arith.constant 0 : i32
    return %arg0, %c0_i32, %c0_i32_0 : i32, i32, i32
  }
}

module attributes {stable_mosaic.version = 11 : i64} {
  func.func @_conv_bn_act_kernel(%arg0: i32, %arg1: memref<1x4x9x9x4xf32, #tpu.memory_space<vmem>>, %arg2: memref<1x4x128xbf16, #tpu.memory_space<vmem>>, %arg3: memref<1x128xf32, #tpu.memory_space<vmem>>, %arg4: memref<1x64x128xbf16, #tpu.memory_space<vmem>>) attributes {dimension_semantics = [#tpu.dimension_semantics<parallel>], iteration_bounds = array<i64: 2>, scalar_prefetch = 0 : i64, scratch_operands = 0 : i64, tpu.core_type = #tpu.core_type<tc>, window_params = [{transform_indices = @transform_0, window_bounds = array<i64: 1, 4, 9, 9, 4>}, {pipeline_mode = #tpu.pipeline_mode<synchronous>, transform_indices = @transform_1, window_bounds = array<i64: 1, 4, 128>}, {pipeline_mode = #tpu.pipeline_mode<synchronous>, transform_indices = @transform_2, window_bounds = array<i64: 1, 128>}, {transform_indices = @transform_3, window_bounds = array<i64: 1, 64, 128>}]} {
    %c0 = arith.constant 0 : index
    %c3 = arith.constant 3 : index
    %c0_0 = arith.constant 0 : index
    %c0_1 = arith.constant 0 : index
    %c0_2 = arith.constant 0 : index
    %0 = vector.load %arg1[%c0, %c3, %c0_0, %c0_1, %c0_2] : memref<1x4x9x9x4xf32, #tpu.memory_space<vmem>>, vector<1x1x8x8x4xf32>
    %1 = vector.shape_cast %0 : vector<1x1x8x8x4xf32> to vector<8x8x4xf32>
    %2 = vector.shape_cast %1 : vector<8x8x4xf32> to vector<64x4xf32>
    %3 = arith.truncf %2 : vector<64x4xf32> to vector<64x4xbf16>
    %c0_3 = arith.constant 0 : index
    %c0_4 = arith.constant 0 : index
    %c0_5 = arith.constant 0 : index
    %4 = vector.load %arg2[%c0_3, %c0_4, %c0_5] : memref<1x4x128xbf16, #tpu.memory_space<vmem>>, vector<1x4x128xbf16>
    %5 = vector.shape_cast %4 : vector<1x4x128xbf16> to vector<4x128xbf16>
    %cst = arith.constant dense<0.000000e+00> : vector<64x128xf32>
    %6 = tpu.matmul %3, %5, %cst {dimension_numbers = #tpu.dot_dimension_numbers<[1], [0], [0], [1], [0, 0, 1, 1], [], []>} : vector<64x4xbf16>, vector<4x128xbf16>, vector<64x128xf32> -> vector<64x128xf32>
    %c0_6 = arith.constant 0 : index
    %c0_7 = arith.constant 0 : index
    %7 = vector.load %arg3[%c0_6, %c0_7] : memref<1x128xf32, #tpu.memory_space<vmem>>, vector<1x128xf32>
    %8 = vector.broadcast %7 : vector<1x128xf32> to vector<64x128xf32>
    %9 = arith.addf %6, %8 : vector<64x128xf32>
    %10 = arith.truncf %9 : vector<64x128xf32> to vector<64x128xbf16>
    %c0_8 = arith.constant 0 : index
    %c0_9 = arith.constant 0 : index
    %c0_10 = arith.constant 0 : index
    %11 = vector.load %arg4[%c0_8, %c0_9, %c0_10] : memref<1x64x128xbf16, #tpu.memory_space<vmem>>, vector<1x64x128xbf16>
    %12 = vector.shape_cast %11 : vector<1x64x128xbf16> to vector<64x128xbf16>
    %13 = vector.shape_cast %10 : vector<64x128xbf16> to vector<1x64x128xbf16>
    tpu.vector_store %arg4[%c0_8, %c0_9, %c0_10], %13 {strides = array<i32>} : memref<1x64x128xbf16, #tpu.memory_space<vmem>>, vector<1x64x128xbf16>,
    return
  }
  func.func @transform_0(%arg0: i32) -> (i32, i32, i32, i32, i32) {
    %c0_i32 = arith.constant 0 : i32
    %c0_i32_0 = arith.constant 0 : i32
    %c0_i32_1 = arith.constant 0 : i32
    %c0_i32_2 = arith.constant 0 : i32
    %c0_i32_3 = arith.constant 0 : i32
    return %arg0, %c0_i32, %c0_i32_0, %c0_i32_1, %c0_i32_2 : i32, i32, i32, i32, i32
  }
  func.func @transform_1(%arg0: i32) -> (i32, i32, i32) {
    %c0_i32 = arith.constant 0 : i32
    %c0_i32_0 = arith.constant 0 : i32
    %c0_i32_1 = arith.constant 0 : i32
    %c0_i32_2 = arith.constant 0 : i32
    return %c0_i32, %c0_i32_0, %c0_i32_1 : i32, i32, i32
  }
  func.func @transform_2(%arg0: i32) -> (i32, i32) {
    %c0_i32 = arith.constant 0 : i32
    %c0_i32_0 = arith.constant 0 : i32
    %c0_i32_1 = arith.constant 0 : i32
    return %c0_i32, %c0_i32_0 : i32, i32
  }
  func.func @transform_3(%arg0: i32) -> (i32, i32, i32) {
    %c0_i32 = arith.constant 0 : i32
    %c0_i32_0 = arith.constant 0 : i32
    %c0_i32_1 = arith.constant 0 : i32
    return %arg0, %c0_i32, %c0_i32_0 : i32, i32, i32
  }
}

module attributes {stable_mosaic.version = 11 : i64} {
  func.func @_conv_bn_act_kernel(%arg0: i32, %arg1: memref<1x1x10x10x8xf32, #tpu.memory_space<vmem>>, %arg2: memref<9x8x128xbf16, #tpu.memory_space<vmem>>, %arg3: memref<1x128xf32, #tpu.memory_space<vmem>>, %arg4: memref<1x64x128xbf16, #tpu.memory_space<vmem>>, %arg5: memref<1x64x128xf32, #tpu.memory_space<vmem>>) attributes {dimension_semantics = [#tpu.dimension_semantics<parallel>], iteration_bounds = array<i64: 2>, scalar_prefetch = 0 : i64, scratch_operands = 0 : i64, tpu.core_type = #tpu.core_type<tc>, window_params = [{transform_indices = @transform_0, window_bounds = array<i64: 1, 1, 10, 10, 8>}, {pipeline_mode = #tpu.pipeline_mode<synchronous>, transform_indices = @transform_1, window_bounds = array<i64: 9, 8, 128>}, {pipeline_mode = #tpu.pipeline_mode<synchronous>, transform_indices = @transform_2, window_bounds = array<i64: 1, 128>}, {transform_indices = @transform_3, window_bounds = array<i64: 1, 64, 128>}, {transform_indices = @transform_4, window_bounds = array<i64: 1, 64, 128>}]} {
    %c0 = arith.constant 0 : index
    %c0_0 = arith.constant 0 : index
    %c0_1 = arith.constant 0 : index
    %c0_2 = arith.constant 0 : index
    %c0_3 = arith.constant 0 : index
    %0 = vector.load %arg1[%c0, %c0_0, %c0_1, %c0_2, %c0_3] : memref<1x1x10x10x8xf32, #tpu.memory_space<vmem>>, vector<1x1x8x8x8xf32>
    %1 = vector.shape_cast %0 : vector<1x1x8x8x8xf32> to vector<8x8x8xf32>
    %2 = vector.shape_cast %1 : vector<8x8x8xf32> to vector<64x8xf32>
    %3 = arith.truncf %2 : vector<64x8xf32> to vector<64x8xbf16>
    %c0_4 = arith.constant 0 : index
    %c0_5 = arith.constant 0 : index
    %c0_6 = arith.constant 0 : index
    %4 = vector.load %arg2[%c0_4, %c0_5, %c0_6] : memref<9x8x128xbf16, #tpu.memory_space<vmem>>, vector<1x8x128xbf16>
    %5 = vector.shape_cast %4 : vector<1x8x128xbf16> to vector<8x128xbf16>
    %cst = arith.constant dense<0.000000e+00> : vector<64x128xf32>
    %6 = tpu.matmul %3, %5, %cst {dimension_numbers = #tpu.dot_dimension_numbers<[1], [0], [0], [1], [0, 0, 1, 1], [], []>} : vector<64x8xbf16>, vector<8x128xbf16>, vector<64x128xf32> -> vector<64x128xf32>
    %c0_7 = arith.constant 0 : index
    %c0_8 = arith.constant 0 : index
    %c0_9 = arith.constant 0 : index
    %c1 = arith.constant 1 : index
    %c0_10 = arith.constant 0 : index
    %7 = vector.load %arg1[%c0_7, %c0_8, %c0_9, %c1, %c0_10] : memref<1x1x10x10x8xf32, #tpu.memory_space<vmem>>, vector<1x1x8x8x8xf32>
    %8 = vector.shape_cast %7 : vector<1x1x8x8x8xf32> to vector<8x8x8xf32>
    %9 = vector.shape_cast %8 : vector<8x8x8xf32> to vector<64x8xf32>
    %10 = arith.truncf %9 : vector<64x8xf32> to vector<64x8xbf16>
    %c1_11 = arith.constant 1 : index
    %c0_12 = arith.constant 0 : index
    %c0_13 = arith.constant 0 : index
    %11 = vector.load %arg2[%c1_11, %c0_12, %c0_13] : memref<9x8x128xbf16, #tpu.memory_space<vmem>>, vector<1x8x128xbf16>
    %12 = vector.shape_cast %11 : vector<1x8x128xbf16> to vector<8x128xbf16>
    %cst_14 = arith.constant dense<0.000000e+00> : vector<64x128xf32>
    %13 = tpu.matmul %10, %12, %cst_14 {dimension_numbers = #tpu.dot_dimension_numbers<[1], [0], [0], [1], [0, 0, 1, 1], [], []>} : vector<64x8xbf16>, vector<8x128xbf16>, vector<64x128xf32> -> vector<64x128xf32>
    %14 = arith.addf %6, %13 : vector<64x128xf32>
    %c0_15 = arith.constant 0 : index
    %c0_16 = arith.constant 0 : index
    %c0_17 = arith.constant 0 : index
    %c2 = arith.constant 2 : index
    %c0_18 = arith.constant 0 : index
    %15 = vector.load %arg1[%c0_15, %c0_16, %c0_17, %c2, %c0_18] : memref<1x1x10x10x8xf32, #tpu.memory_space<vmem>>, vector<1x1x8x8x8xf32>
    %16 = vector.shape_cast %15 : vector<1x1x8x8x8xf32> to vector<8x8x8xf32>
    %17 = vector.shape_cast %16 : vector<8x8x8xf32> to vector<64x8xf32>
    %18 = arith.truncf %17 : vector<64x8xf32> to vector<64x8xbf16>
    %c2_19 = arith.constant 2 : index
    %c0_20 = arith.constant 0 : index
    %c0_21 = arith.constant 0 : index
    %19 = vector.load %arg2[%c2_19, %c0_20, %c0_21] : memref<9x8x128xbf16, #tpu.memory_space<vmem>>, vector<1x8x128xbf16>
    %20 = vector.shape_cast %19 : vector<1x8x128xbf16> to vector<8x128xbf16>
    %cst_22 = arith.constant dense<0.000000e+00> : vector<64x128xf32>
    %21 = tpu.matmul %18, %20, %cst_22 {dimension_numbers = #tpu.dot_dimension_numbers<[1], [0], [0], [1], [0, 0, 1, 1], [], []>} : vector<64x8xbf16>, vector<8x128xbf16>, vector<64x128xf32> -> vector<64x128xf32>
    %22 = arith.addf %14, %21 : vector<64x128xf32>
    %c0_23 = arith.constant 0 : index
    %c0_24 = arith.constant 0 : index
    %c1_25 = arith.constant 1 : index
    %c0_26 = arith.constant 0 : index
    %c0_27 = arith.constant 0 : index
    %23 = vector.load %arg1[%c0_23, %c0_24, %c1_25, %c0_26, %c0_27] : memref<1x1x10x10x8xf32, #tpu.memory_space<vmem>>, vector<1x1x8x8x8xf32>
    %24 = vector.shape_cast %23 : vector<1x1x8x8x8xf32> to vector<8x8x8xf32>
    %25 = vector.shape_cast %24 : vector<8x8x8xf32> to vector<64x8xf32>
    %26 = arith.truncf %25 : vector<64x8xf32> to vector<64x8xbf16>
    %c3 = arith.constant 3 : index
    %c0_28 = arith.constant 0 : index
    %c0_29 = arith.constant 0 : index
    %27 = vector.load %arg2[%c3, %c0_28, %c0_29] : memref<9x8x128xbf16, #tpu.memory_space<vmem>>, vector<1x8x128xbf16>
    %28 = vector.shape_cast %27 : vector<1x8x128xbf16> to vector<8x128xbf16>
    %cst_30 = arith.constant dense<0.000000e+00> : vector<64x128xf32>
    %29 = tpu.matmul %26, %28, %cst_30 {dimension_numbers = #tpu.dot_dimension_numbers<[1], [0], [0], [1], [0, 0, 1, 1], [], []>} : vector<64x8xbf16>, vector<8x128xbf16>, vector<64x128xf32> -> vector<64x128xf32>
    %30 = arith.addf %22, %29 : vector<64x128xf32>
    %c0_31 = arith.constant 0 : index
    %c0_32 = arith.constant 0 : index
    %c1_33 = arith.constant 1 : index
    %c1_34 = arith.constant 1 : index
    %c0_35 = arith.constant 0 : index
    %31 = vector.load %arg1[%c0_31, %c0_32, %c1_33, %c1_34, %c0_35] : memref<1x1x10x10x8xf32, #tpu.memory_space<vmem>>, vector<1x1x8x8x8xf32>
    %32 = vector.shape_cast %31 : vector<1x1x8x8x8xf32> to vector<8x8x8xf32>
    %33 = vector.shape_cast %32 : vector<8x8x8xf32> to vector<64x8xf32>
    %34 = arith.truncf %33 : vector<64x8xf32> to vector<64x8xbf16>
    %c4 = arith.constant 4 : index
    %c0_36 = arith.constant 0 : index
    %c0_37 = arith.constant 0 : index
    %35 = vector.load %arg2[%c4, %c0_36, %c0_37] : memref<9x8x128xbf16, #tpu.memory_space<vmem>>, vector<1x8x128xbf16>
    %36 = vector.shape_cast %35 : vector<1x8x128xbf16> to vector<8x128xbf16>
    %cst_38 = arith.constant dense<0.000000e+00> : vector<64x128xf32>
    %37 = tpu.matmul %34, %36, %cst_38 {dimension_numbers = #tpu.dot_dimension_numbers<[1], [0], [0], [1], [0, 0, 1, 1], [], []>} : vector<64x8xbf16>, vector<8x128xbf16>, vector<64x128xf32> -> vector<64x128xf32>
    %38 = arith.addf %30, %37 : vector<64x128xf32>
    %c0_39 = arith.constant 0 : index
    %c0_40 = arith.constant 0 : index
    %c1_41 = arith.constant 1 : index
    %c2_42 = arith.constant 2 : index
    %c0_43 = arith.constant 0 : index
    %39 = vector.load %arg1[%c0_39, %c0_40, %c1_41, %c2_42, %c0_43] : memref<1x1x10x10x8xf32, #tpu.memory_space<vmem>>, vector<1x1x8x8x8xf32>
    %40 = vector.shape_cast %39 : vector<1x1x8x8x8xf32> to vector<8x8x8xf32>
    %41 = vector.shape_cast %40 : vector<8x8x8xf32> to vector<64x8xf32>
    %42 = arith.truncf %41 : vector<64x8xf32> to vector<64x8xbf16>
    %c5 = arith.constant 5 : index
    %c0_44 = arith.constant 0 : index
    %c0_45 = arith.constant 0 : index
    %43 = vector.load %arg2[%c5, %c0_44, %c0_45] : memref<9x8x128xbf16, #tpu.memory_space<vmem>>, vector<1x8x128xbf16>
    %44 = vector.shape_cast %43 : vector<1x8x128xbf16> to vector<8x128xbf16>
    %cst_46 = arith.constant dense<0.000000e+00> : vector<64x128xf32>
    %45 = tpu.matmul %42, %44, %cst_46 {dimension_numbers = #tpu.dot_dimension_numbers<[1], [0], [0], [1], [0, 0, 1, 1], [], []>} : vector<64x8xbf16>, vector<8x128xbf16>, vector<64x128xf32> -> vector<64x128xf32>
    %46 = arith.addf %38, %45 : vector<64x128xf32>
    %c0_47 = arith.constant 0 : index
    %c0_48 = arith.constant 0 : index
    %c2_49 = arith.constant 2 : index
    %c0_50 = arith.constant 0 : index
    %c0_51 = arith.constant 0 : index
    %47 = vector.load %arg1[%c0_47, %c0_48, %c2_49, %c0_50, %c0_51] : memref<1x1x10x10x8xf32, #tpu.memory_space<vmem>>, vector<1x1x8x8x8xf32>
    %48 = vector.shape_cast %47 : vector<1x1x8x8x8xf32> to vector<8x8x8xf32>
    %49 = vector.shape_cast %48 : vector<8x8x8xf32> to vector<64x8xf32>
    %50 = arith.truncf %49 : vector<64x8xf32> to vector<64x8xbf16>
    %c6 = arith.constant 6 : index
    %c0_52 = arith.constant 0 : index
    %c0_53 = arith.constant 0 : index
    %51 = vector.load %arg2[%c6, %c0_52, %c0_53] : memref<9x8x128xbf16, #tpu.memory_space<vmem>>, vector<1x8x128xbf16>
    %52 = vector.shape_cast %51 : vector<1x8x128xbf16> to vector<8x128xbf16>
    %cst_54 = arith.constant dense<0.000000e+00> : vector<64x128xf32>
    %53 = tpu.matmul %50, %52, %cst_54 {dimension_numbers = #tpu.dot_dimension_numbers<[1], [0], [0], [1], [0, 0, 1, 1], [], []>} : vector<64x8xbf16>, vector<8x128xbf16>, vector<64x128xf32> -> vector<64x128xf32>
    %54 = arith.addf %46, %53 : vector<64x128xf32>
    %c0_55 = arith.constant 0 : index
    %c0_56 = arith.constant 0 : index
    %c2_57 = arith.constant 2 : index
    %c1_58 = arith.constant 1 : index
    %c0_59 = arith.constant 0 : index
    %55 = vector.load %arg1[%c0_55, %c0_56, %c2_57, %c1_58, %c0_59] : memref<1x1x10x10x8xf32, #tpu.memory_space<vmem>>, vector<1x1x8x8x8xf32>
    %56 = vector.shape_cast %55 : vector<1x1x8x8x8xf32> to vector<8x8x8xf32>
    %57 = vector.shape_cast %56 : vector<8x8x8xf32> to vector<64x8xf32>
    %58 = arith.truncf %57 : vector<64x8xf32> to vector<64x8xbf16>
    %c7 = arith.constant 7 : index
    %c0_60 = arith.constant 0 : index
    %c0_61 = arith.constant 0 : index
    %59 = vector.load %arg2[%c7, %c0_60, %c0_61] : memref<9x8x128xbf16, #tpu.memory_space<vmem>>, vector<1x8x128xbf16>
    %60 = vector.shape_cast %59 : vector<1x8x128xbf16> to vector<8x128xbf16>
    %cst_62 = arith.constant dense<0.000000e+00> : vector<64x128xf32>
    %61 = tpu.matmul %58, %60, %cst_62 {dimension_numbers = #tpu.dot_dimension_numbers<[1], [0], [0], [1], [0, 0, 1, 1], [], []>} : vector<64x8xbf16>, vector<8x128xbf16>, vector<64x128xf32> -> vector<64x128xf32>
    %62 = arith.addf %54, %61 : vector<64x128xf32>
    %c0_63 = arith.constant 0 : index
    %c0_64 = arith.constant 0 : index
    %c2_65 = arith.constant 2 : index
    %c2_66 = arith.constant 2 : index
    %c0_67 = arith.constant 0 : index
    %63 = vector.load %arg1[%c0_63, %c0_64, %c2_65, %c2_66, %c0_67] : memref<1x1x10x10x8xf32, #tpu.memory_space<vmem>>, vector<1x1x8x8x8xf32>
    %64 = vector.shape_cast %63 : vector<1x1x8x8x8xf32> to vector<8x8x8xf32>
    %65 = vector.shape_cast %64 : vector<8x8x8xf32> to vector<64x8xf32>
    %66 = arith.truncf %65 : vector<64x8xf32> to vector<64x8xbf16>
    %c8 = arith.constant 8 : index
    %c0_68 = arith.constant 0 : index
    %c0_69 = arith.constant 0 : index
    %67 = vector.load %arg2[%c8, %c0_68, %c0_69] : memref<9x8x128xbf16, #tpu.memory_space<vmem>>, vector<1x8x128xbf16>
    %68 = vector.shape_cast %67 : vector<1x8x128xbf16> to vector<8x128xbf16>
    %cst_70 = arith.constant dense<0.000000e+00> : vector<64x128xf32>
    %69 = tpu.matmul %66, %68, %cst_70 {dimension_numbers = #tpu.dot_dimension_numbers<[1], [0], [0], [1], [0, 0, 1, 1], [], []>} : vector<64x8xbf16>, vector<8x128xbf16>, vector<64x128xf32> -> vector<64x128xf32>
    %70 = arith.addf %62, %69 : vector<64x128xf32>
    %c0_71 = arith.constant 0 : index
    %c0_72 = arith.constant 0 : index
    %71 = vector.load %arg3[%c0_71, %c0_72] : memref<1x128xf32, #tpu.memory_space<vmem>>, vector<1x128xf32>
    %72 = vector.broadcast %71 : vector<1x128xf32> to vector<64x128xf32>
    %73 = arith.addf %70, %72 : vector<64x128xf32>
    %c0_73 = arith.constant 0 : index
    %c0_74 = arith.constant 0 : index
    %c0_75 = arith.constant 0 : index
    %74 = vector.load %arg4[%c0_73, %c0_74, %c0_75] : memref<1x64x128xbf16, #tpu.memory_space<vmem>>, vector<1x64x128xbf16>
    %75 = vector.shape_cast %74 : vector<1x64x128xbf16> to vector<64x128xbf16>
    %76 = arith.extf %75 : vector<64x128xbf16> to vector<64x128xf32>
    %77 = arith.addf %73, %76 : vector<64x128xf32>
    %cst_76 = arith.constant 0.000000e+00 : f32
    %78 = vector.broadcast %cst_76 : f32 to vector<64x128xf32>
    %79 = arith.maximumf %77, %78 : vector<64x128xf32>
    %c0_77 = arith.constant 0 : index
    %c0_78 = arith.constant 0 : index
    %c0_79 = arith.constant 0 : index
    %80 = vector.load %arg5[%c0_77, %c0_78, %c0_79] : memref<1x64x128xf32, #tpu.memory_space<vmem>>, vector<1x64x128xf32>
    %81 = vector.shape_cast %80 : vector<1x64x128xf32> to vector<64x128xf32>
    %82 = vector.shape_cast %79 : vector<64x128xf32> to vector<1x64x128xf32>
    tpu.vector_store %arg5[%c0_77, %c0_78, %c0_79], %82 {strides = array<i32>} : memref<1x64x128xf32, #tpu.memory_space<vmem>>, vector<1x64x128xf32>,
    return
  }
  func.func @transform_0(%arg0: i32) -> (i32, i32, i32, i32, i32) {
    %c0_i32 = arith.constant 0 : i32
    %c0_i32_0 = arith.constant 0 : i32
    %c0_i32_1 = arith.constant 0 : i32
    %c0_i32_2 = arith.constant 0 : i32
    %c0_i32_3 = arith.constant 0 : i32
    return %arg0, %c0_i32, %c0_i32_0, %c0_i32_1, %c0_i32_2 : i32, i32, i32, i32, i32
  }
  func.func @transform_1(%arg0: i32) -> (i32, i32, i32) {
    %c0_i32 = arith.constant 0 : i32
    %c0_i32_0 = arith.constant 0 : i32
    %c0_i32_1 = arith.constant 0 : i32
    %c0_i32_2 = arith.constant 0 : i32
    return %c0_i32, %c0_i32_0, %c0_i32_1 : i32, i32, i32
  }
  func.func @transform_2(%arg0: i32) -> (i32, i32) {
    %c0_i32 = arith.constant 0 : i32
    %c0_i32_0 = arith.constant 0 : i32
    %c0_i32_1 = arith.constant 0 : i32
    return %c0_i32, %c0_i32_0 : i32, i32
  }
  func.func @transform_3(%arg0: i32) -> (i32, i32, i32) {
    %c0_i32 = arith.constant 0 : i32
    %c0_i32_0 = arith.constant 0 : i32
    %c0_i32_1 = arith.constant 0 : i32
    return %arg0, %c0_i32, %c0_i32_0 : i32, i32, i32
  }
  func.func @transform_4(%arg0: i32) -> (i32, i32, i32) {
    %c0_i32 = arith.constant 0 : i32
    %c0_i32_0 = arith.constant 0 : i32
    %c0_i32_1 = arith.constant 0 : i32
    return %arg0, %c0_i32, %c0_i32_0 : i32, i32, i32
  }
}

</mosaic_0001>

<llo_original>
// kernel: basic_block_forward.4
$region0: #{basic_block_forward.4}
  #allocation0 [shape = 'u32[]', space=smem, size = 0x4, offset = 0x4, fixed_abs, tag = 'smem constant byte address 0x4 - core index']
  #allocation1 [shape = 'u32[144,128]{1,0:T(1,128)}', space=vmem, size = 0x12000, scoped, tag = 'internal scratch']
  %s0 = inlined_call_operand.vmem [shape: f32[2,4,9,9,4], index: 0, kind: input, shape index: {}]
  %s1 = inlined_call_operand.vmem [shape: bf16[1,4,128], index: 1, kind: input, shape index: {}]
  %s2 = inlined_call_operand.vmem [shape: f32[1,128], index: 2, kind: input, shape index: {}]
  %s3 = inlined_call_operand.vmem [shape: bf16[2,64,128], index: 3, kind: output, shape index: {}]
  %s4 = sld [smem:[#allocation0]]
  $region45: #{basic_block_forward.4} parent=0
    _
  %s6 = ssub.s32 1, %s4
  %s7 = scalar_select 0, %s6, %s4
  loop: start=0, step=1, limit=4
  $region2: #{basic_block_forward.4} parent=0 // loop_pre_header
    _
  $region3: #{basic_block_forward.4} parent=0 // loop_header
    %s9 = sphi 0, %s13
    %p10 = scmp.ge.s32.totalorder %s9, 4
    %s19 = sphi 0, %s21
    %s22 = sphi 0, %s19
    %s23 = sphi 0, %s22
    %s39 = sphi 0, %s23
    %s43 = sphi 0, %s43
    %s45 = sphi 0, %s43
    %s46 = sphi 0, %s45
    %s60 = sphi 0, %s46
    %s64 = sphi 0, %s64
    %s66 = sphi 0, %s64
    %s67 = sphi 0, %s66
    %s81 = sphi 0, %s67
    %s87 = sphi 0, %s89
    %s90 = sphi 0, %s87
    %s91 = sphi 0, %s90
    %s107 = sphi 0, %s91
  $region4: #{basic_block_forward.4} parent=0 // loop_header_branch
    %12 = sbr.rel (%p10) target = $region8
  $region5: #{basic_block_forward.4} parent=0 // loop_body
    %s14 = ssub.s32 %s9, 1
    %s15 = ssub.s32 %s9, 2
    %s16 = sadd.s32 %s9, 1
    %s17 = ssub.s32 %s9, %s16
    %p18 = scmp.eq.s32.totalorder %s17, 0
    %s20 = sadd.s32 %s19, 1
    %s21 = scalar_select %p18, %s19, %s20
    %p24 = pneg %p18
    %p25 = scmp.eq.s32.totalorder %s9, 1
    %p26 = por %p24, %p25
    %p27 = scmp.ne.s32.totalorder %s19, %s22
    %p28 = scmp.eq.s32.totalorder %s9, 0
    %p29 = por %p27, %p28
    %p30 = scmp.ne.s32.totalorder %s19, %s22
    %p31 = scmp.eq.s32.totalorder %s14, 1
    %p32 = por %p30, %p31
    %p33 = scmp.ne.s32.totalorder %s22, %s23
    %p34 = scmp.eq.s32.totalorder %s14, 0
    %p35 = por %p33, %p34
    %p36 = scmp.ne.s32.totalorder %s22, %s23
    %p37 = scmp.eq.s32.totalorder %s15, 1
    %p38 = por %p36, %p37
    %p40 = scmp.ne.s32.totalorder %s23, %s39
    %p41 = scmp.eq.s32.totalorder %s15, 0
    %p42 = por %p40, %p41
    %s44 = sadd.s32 %s43, 1
    %p47 = scmp.eq.s32.totalorder %s9, 1
    %p48 = scmp.ne.s32.totalorder %s43, %s45
    %p49 = scmp.eq.s32.totalorder %s9, 0
    %p50 = por %p48, %p49
    %p51 = scmp.ne.s32.totalorder %s43, %s45
    %p52 = scmp.eq.s32.totalorder %s14, 1
    %p53 = por %p51, %p52
    %p54 = scmp.ne.s32.totalorder %s45, %s46
    %p55 = scmp.eq.s32.totalorder %s14, 0
    %p56 = por %p54, %p55
    %p57 = scmp.ne.s32.totalorder %s45, %s46
    %p58 = scmp.eq.s32.totalorder %s15, 1
    %p59 = por %p57, %p58
    %p61 = scmp.ne.s32.totalorder %s46, %s60
    %p62 = scmp.eq.s32.totalorder %s15, 0
    %p63 = por %p61, %p62
    %s65 = sadd.s32 %s64, 1
    %p68 = scmp.eq.s32.totalorder %s9, 1
    %p69 = scmp.ne.s32.totalorder %s64, %s66
    %p70 = scmp.eq.s32.totalorder %s9, 0
    %p71 = por %p69, %p70
    %p72 = scmp.ne.s32.totalorder %s64, %s66
    %p73 = scmp.eq.s32.totalorder %s14, 1
    %p74 = por %p72, %p73
    %p75 = scmp.ne.s32.totalorder %s66, %s67
    %p76 = scmp.eq.s32.totalorder %s14, 0
    %p77 = por %p75, %p76
    %p78 = scmp.ne.s32.totalorder %s66, %s67
    %p79 = scmp.eq.s32.totalorder %s15, 1
    %p80 = por %p78, %p79
    %p82 = scmp.ne.s32.totalorder %s67, %s81
    %p83 = scmp.eq.s32.totalorder %s15, 0
    %p84 = por %p82, %p83
    %s85 = ssub.s32 %s9, %s16
    %p86 = scmp.eq.s32.totalorder %s85, 0
    %s88 = sadd.s32 %s87, 1
    %s89 = scalar_select %p86, %s87, %s88
    %p92 = pneg %p86
    %p93 = scmp.eq.s32.totalorder %s9, 1
    %p94 = por %p92, %p93
    %p95 = scmp.ne.s32.totalorder %s87, %s90
    %p96 = scmp.eq.s32.totalorder %s9, 0
    %p97 = por %p95, %p96
    %p98 = scmp.ne.s32.totalorder %s87, %s90
    %p99 = scmp.eq.s32.totalorder %s14, 1
    %p100 = por %p98, %p99
    %p101 = scmp.ne.s32.totalorder %s90, %s91
    %p102 = scmp.eq.s32.totalorder %s14, 0
    %p103 = por %p101, %p102
    %p104 = scmp.ne.s32.totalorder %s90, %s91
    %p105 = scmp.eq.s32.totalorder %s15, 1
    %p106 = por %p104, %p105
    %p108 = scmp.ne.s32.totalorder %s91, %s107
    %p109 = scmp.eq.s32.totalorder %s15, 0
    %p110 = por %p108, %p109
    %p111 = scmp.le.s32.totalorder 1, %s9
    %p112 = scmp.lt.s32.totalorder %s9, 3
    %p113 = pnand %p111, %p112
    %p114 = pneg %p113
    // Predicated region
    $region9: #{basic_block_forward.4} parent=5 // pred_check
      _
    $region10: #{basic_block_forward.4} parent=5 // pred_check_branch
      %116 = sbr.rel (%p113) target = $region12
    $region11: #{basic_block_forward.4} parent=5 // pred_region
      %s117 = ssub.s32 %s9, 1
      // Predicated region
      $region13: #{basic_block_forward.4} parent=11 // pred_check
        %p118 = pneg %p56
      $region14: #{basic_block_forward.4} parent=11 // pred_check_branch
        %120 = sbr.rel (%p118) target = $region16
      $region15: #{basic_block_forward.4} parent=11 // pred_region
        _
      $region16: #{basic_block_forward.4} parent=11 // pred_fallthru
        _
      // Predicated region
      $region17: #{basic_block_forward.4} parent=11 // pred_check
        %p121 = pneg %p77
      $region18: #{basic_block_forward.4} parent=11 // pred_check_branch
        %123 = sbr.rel (%p121) target = $region20
      $region19: #{basic_block_forward.4} parent=11 // pred_region
        _
      $region20: #{basic_block_forward.4} parent=11 // pred_fallthru
        _
    $region12: #{basic_block_forward.4} parent=5 // pred_fallthru
      _
    %p124 = scmp.lt.s32.totalorder %s9, 2
    // Predicated region
    $region21: #{basic_block_forward.4} parent=5 // pred_check
      %p125 = pneg %p124
    $region22: #{basic_block_forward.4} parent=5 // pred_check_branch
      %127 = sbr.rel (%p125) target = $region24
    $region23: #{basic_block_forward.4} parent=5 // pred_region
      // Predicated region
      $region25: #{basic_block_forward.4} parent=23 // pred_check
        %p128 = pneg %p29
      $region26: #{basic_block_forward.4} parent=23 // pred_check_branch
        %130 = sbr.rel (%p128) target = $region28
      $region27: #{basic_block_forward.4} parent=23 // pred_region
        %p131 = scmp.lt.s32.totalorder %s9, 1
        %s132 = scalar_select %p131, %s9, 1
        %s133 = smul.addr %s132, 72
        %s134 = smul.addr %s133, 8
        %s135 = scalar_lea.vmem %s0, %s134
      $region28: #{basic_block_forward.4} parent=23 // pred_fallthru
        _
    $region24: #{basic_block_forward.4} parent=5 // pred_fallthru
      _
    %p136 = scmp.le.s32.totalorder 1, %s9
    %p137 = scmp.lt.s32.totalorder %s9, 3
    %p138 = pnand %p136, %p137
    %p139 = pneg %p138
    // Predicated region
    $region29: #{basic_block_forward.4} parent=5 // pred_check
      _
    $region30: #{basic_block_forward.4} parent=5 // pred_check_branch
      %141 = sbr.rel (%p138) target = $region32
    $region31: #{basic_block_forward.4} parent=5 // pred_region
      %s142 = ssub.s32 %s9, 1
      %p143 = scmp.lt.s32.totalorder %s14, 1
      %s144 = scalar_select %p143, %s14, 1
      %s145 = smul.addr %s144, 72
      %s146 = smul.addr %s145, 8
      %s147 = scalar_lea.vmem %s0, %s146
      %p148 = pneg %p35
      %p149 = pneg %p32
      %p150 = pneg %p56
      %p151 = pneg %p53
      %p152 = pneg %p77
      %p153 = pneg %p74
      %p154 = pneg %p103
      %p155 = pneg %p100
      %p156 = scmp.lt.s32.totalorder %s14, 1
      %s157 = scalar_select %p156, %s14, 1
      %s158 = smul.addr %s157, 8
      %s159 = smul.addr %s158, 4
      %s160 = scalar_lea.vmem %s3, %s159
      %p161 = scmp.lt.s32.totalorder %s14, 1
      %s162 = scalar_select %p161, %s14, 1
      %s163 = smul.addr %s162, 72
      %s164 = smul.addr %s163, 8
      %s165 = scalar_lea.vmem %s0, %s164
      %p166 = scmp.lt.s32.totalorder %s14, 1
      %s167 = scalar_select %p166, %s14, 1
      %s168 = smul.addr %s167, 8
      %s169 = smul.addr %s168, 4
      %s170 = scalar_lea.vmem %s3, %s169
      %s172 = scalar_lea.vmem %s165, 432
      %v173 = vld [vmem:[%s172] sm:$0xff]
      %v174 = vld [vmem:[%s172 + $0x10] sm:$0xff]
      %v175 = vld [vmem:[%s172 + $0x20] sm:$0xff]
      %v176 = vld [vmem:[%s172 + $0x30] sm:$0xff]
      %v177 = vld [vmem:[%s172 + $0x40] sm:$0xff]
      %v178 = vld [vmem:[%s172 + $0x50] sm:$0xff]
      %v179 = vld [vmem:[%s172 + $0x60] sm:$0xff]
      %v180 = vld [vmem:[%s172 + $0x70] sm:$0xff]
      %v181 = vpack.c.bf16 %v174, %v173
      %v182 = vpack.c.bf16 %v176, %v175
      %v183 = vpack.c.bf16 %v178, %v177
      %v184 = vpack.c.bf16 %v180, %v179
      %v185 = vld [vmem:[%s1] sm:$0x3]
      %v186 = vld [vmem:[%s2] sm:$0x1]
      %v188 = vlaneseq
      %v189 = vshrl.u32 %v188, 7
      %v190 = vsub.s32 0, %v189
      %v191 = vrot.slane %v186, %v190
      %vm193 = vcmask 31744
      %v195 = vsel %vm193, %v181, 0
      %v198 = vsel %vm193, %v182, 0
      %v201 = vsel %vm193, %v183, 0
      %v204 = vsel %vm193, %v184, 0
      %vm206 = vcmask 1041408
      %v208 = vsel %vm206, %v185, 0
      %210 = vmatprep.subr.bf16.mxu0 0
      %211 = vmatpush1.bf16.msra.mxu0 %v208
      %212 = vmatprep.subr.bf16.mxu0 0
      %213 = vmatpush1.bf16.msra.mxu0 0
      %214 = vmatprep.subr.bf16.mxu0 0
      %215 = vmatpush1.bf16.msra.mxu0 0
      %216 = vmatprep.subr.bf16.mxu0 0
      %217 = vmatpush1.bf16.msra.mxu0 0
      %218 = vmatprep.subr.bf16.mxu0 0
      %219 = vmatpush1.bf16.msra.mxu0 0
      %220 = vmatprep.subr.bf16.mxu0 0
      %221 = vmatpush1.bf16.msra.mxu0 0
      %222 = vmatprep.subr.bf16.mxu0 0
      %223 = vmatpush1.bf16.msra.mxu0 0
      %224 = vmatprep.subr.bf16.mxu0 0
      %225 = vmatpush1.bf16.msra.mxu0 0
      %226 = vmatprep.subr.bf16.mxu0 0
      %227 = vmatpush1.bf16.msra.mxu0 0
      %228 = vmatprep.subr.bf16.mxu0 0
      %229 = vmatpush1.bf16.msra.mxu0 0
      %230 = vmatprep.subr.bf16.mxu0 0
      %231 = vmatpush1.bf16.msra.mxu0 0
      %232 = vmatprep.subr.bf16.mxu0 0
      %233 = vmatpush1.bf16.msra.mxu0 0
      %234 = vmatprep.subr.bf16.mxu0 0
      %235 = vmatpush1.bf16.msra.mxu0 0
      %236 = vmatprep.subr.bf16.mxu0 0
      %237 = vmatpush1.bf16.msra.mxu0 0
      %238 = vmatprep.subr.bf16.mxu0 0
      %239 = vmatpush1.bf16.msra.mxu0 0
      %240 = vmatprep.subr.bf16.mxu0 0
      %241 = vmatpush1.bf16.msra.mxu0 0
      %242 = vmatprep.mubr.bf16.mxu0 0
      %243 = vmatmul.mubr.bf16.gmra.mrb[0].mxu0 %v195
      %v244 = vpop.f32.mrb[0].mxu0
      %v245 = vadd.f32 %v191, %v244
      %v246 = vpop.f32.mrb[0].mxu0
      %v247 = vpop.f32.mrb[0].mxu0
      %v248 = vadd.f32 %v191, %v247
      %v249 = vpop.f32.mrb[0].mxu0
      %250 = vmatprep.mubr.bf16.mxu0 0
      %251 = vmatmul.mubr.bf16.gmra.mrb[0].mxu0 %v198
      %v252 = vpop.f32.mrb[0].mxu0
      %v253 = vadd.f32 %v191, %v252
      %v254 = vpop.f32.mrb[0].mxu0
      %v255 = vpop.f32.mrb[0].mxu0
      %v256 = vadd.f32 %v191, %v255
      %v257 = vpop.f32.mrb[0].mxu0
      %258 = vmatprep.mubr.bf16.mxu0 0
      %259 = vmatmul.mubr.bf16.gmra.mrb[0].mxu0 %v201
      %v260 = vpop.f32.mrb[0].mxu0
      %v261 = vadd.f32 %v191, %v260
      %v262 = vpop.f32.mrb[0].mxu0
      %v263 = vpop.f32.mrb[0].mxu0
      %v264 = vadd.f32 %v191, %v263
      %v265 = vpop.f32.mrb[0].mxu0
      %266 = vmatprep.mubr.bf16.mxu0 0
      %267 = vmatmul.mubr.bf16.gmra.mrb[0].mxu0 %v204
      %v268 = vpop.f32.mrb[0].mxu0
      %v269 = vadd.f32 %v191, %v268
      %v270 = vpop.f32.mrb[0].mxu0
      %v271 = vpop.f32.mrb[0].mxu0
      %v272 = vadd.f32 %v191, %v271
      %v273 = vpop.f32.mrb[0].mxu0
      %274 = vdwg.mxu0
      %v275 = vpack.c.bf16 %v248, %v245
      %v276 = vpack.c.bf16 %v256, %v253
      %v277 = vpack.c.bf16 %v264, %v261
      %v278 = vpack.c.bf16 %v272, %v269
      %v283 = vunpack.c.l.b16 %v275
      %v284 = vunpack.c.h.b16 %v275
      %v285 = vunpack.c.l.b16 %v276
      %v286 = vunpack.c.h.b16 %v276
      %v287 = vunpack.c.l.b16 %v277
      %v288 = vunpack.c.h.b16 %v277
      %v289 = vunpack.c.l.b16 %v278
      %v290 = vunpack.c.h.b16 %v278
      %v291 = vpack.c.b16 %v283, %v283
      %v292 = vpack.c.b16 %v284, %v284
      %v293 = vpack.c.b16 %v285, %v285
      %v294 = vpack.c.b16 %v286, %v286
      %v295 = vpack.c.b16 %v287, %v287
      %v296 = vpack.c.b16 %v288, %v288
      %v297 = vpack.c.b16 %v289, %v289
      %v298 = vpack.c.b16 %v290, %v290
      %307 = vst [vmem:[%s170] sm:$0xf] %v291
      %308 = vst [vmem:[%s170 + $0x4] sm:$0xf] %v292
      %309 = vst [vmem:[%s170 + $0x8] sm:$0xf] %v293
      %310 = vst [vmem:[%s170 + $0xc] sm:$0xf] %v294
      %311 = vst [vmem:[%s170 + $0x10] sm:$0xf] %v295
      %312 = vst [vmem:[%s170 + $0x14] sm:$0xf] %v296
      %313 = vst [vmem:[%s170 + $0x18] sm:$0xf] %v297
      %314 = vst [vmem:[%s170 + $0x1c] sm:$0xf] %v298
      %p315 = scmp.lt.s32.totalorder %s14, 1
      %s316 = scalar_select %p315, %s14, 1
      %s317 = smul.addr %s316, 8
      %s318 = smul.addr %s317, 4
      %s319 = scalar_lea.vmem %s3, %s318
      // Predicated region
      $region33: #{basic_block_forward.4} parent=31 // pred_check
        %p320 = pneg %p100
      $region34: #{basic_block_forward.4} parent=31 // pred_check_branch
        %322 = sbr.rel (%p320) target = $region36
      $region35: #{basic_block_forward.4} parent=31 // pred_region
        _
      $region36: #{basic_block_forward.4} parent=31 // pred_fallthru
        _
    $region32: #{basic_block_forward.4} parent=5 // pred_fallthru
      _
    %p323 = scmp.le.s32.totalorder 2, %s9
    // Predicated region
    $region37: #{basic_block_forward.4} parent=5 // pred_check
      %p324 = pneg %p323
    $region38: #{basic_block_forward.4} parent=5 // pred_check_branch
      %326 = sbr.rel (%p324) target = $region40
    $region39: #{basic_block_forward.4} parent=5 // pred_region
      %s327 = ssub.s32 %s9, 2
      // Predicated region
      $region41: #{basic_block_forward.4} parent=39 // pred_check
        %p328 = pneg %p106
      $region42: #{basic_block_forward.4} parent=39 // pred_check_branch
        %330 = sbr.rel (%p328) target = $region44
      $region43: #{basic_block_forward.4} parent=39 // pred_region
        %p331 = scmp.lt.s32.totalorder %s15, 1
        %s332 = scalar_select %p331, %s15, 1
        %s333 = smul.addr %s332, 8
        %s334 = smul.addr %s333, 4
        %s335 = scalar_lea.vmem %s3, %s334
      $region44: #{basic_block_forward.4} parent=39 // pred_fallthru
        _
    $region40: #{basic_block_forward.4} parent=5 // pred_fallthru
      _
  $region6: #{basic_block_forward.4} parent=0 // loop_footer
    %s13 = sadd.s32 1, %s9
  $region7: #{basic_block_forward.4} parent=0 // loop_footer_branch
    %8 = sbr.rel target = $region3
  $region8: #{basic_block_forward.4} parent=0 // loop_exit
    _

// kernel: basic_block_forward.3
$region0: #{basic_block_forward.3}
  #allocation0 [shape = 'u32[]', space=smem, size = 0x4, offset = 0x4, fixed_abs, tag = 'smem constant byte address 0x4 - core index']
  #allocation1 [shape = 'u32[144,128]{1,0:T(1,128)}', space=vmem, size = 0x12000, scoped, tag = 'internal scratch']
  %s0 = inlined_call_operand.vmem [shape: f32[2,4,9,9,4], index: 0, kind: input, shape index: {}]
  %s1 = inlined_call_operand.vmem [shape: bf16[9,4,128], index: 1, kind: input, shape index: {}]
  %s2 = inlined_call_operand.vmem [shape: f32[1,128], index: 2, kind: input, shape index: {}]
  %s3 = inlined_call_operand.vmem [shape: bf16[2,64,128], index: 3, kind: output, shape index: {}]
  %s4 = sld [smem:[#allocation0]]
  $region45: #{basic_block_forward.3} parent=0
    _
  %s6 = ssub.s32 1, %s4
  %s7 = scalar_select 0, %s6, %s4
  loop: start=0, step=1, limit=4
  $region2: #{basic_block_forward.3} parent=0 // loop_pre_header
    _
  $region3: #{basic_block_forward.3} parent=0 // loop_header
    %s9 = sphi 0, %s13
    %p10 = scmp.ge.s32.totalorder %s9, 4
    %s19 = sphi 0, %s21
    %s22 = sphi 0, %s19
    %s23 = sphi 0, %s22
    %s39 = sphi 0, %s23
    %s43 = sphi 0, %s43
    %s45 = sphi 0, %s43
    %s46 = sphi 0, %s45
    %s60 = sphi 0, %s46
    %s64 = sphi 0, %s64
    %s66 = sphi 0, %s64
    %s67 = sphi 0, %s66
    %s81 = sphi 0, %s67
    %s87 = sphi 0, %s89
    %s90 = sphi 0, %s87
    %s91 = sphi 0, %s90
    %s107 = sphi 0, %s91
  $region4: #{basic_block_forward.3} parent=0 // loop_header_branch
    %12 = sbr.rel (%p10) target = $region8
  $region5: #{basic_block_forward.3} parent=0 // loop_body
    %s14 = ssub.s32 %s9, 1
    %s15 = ssub.s32 %s9, 2
    %s16 = sadd.s32 %s9, 1
    %s17 = ssub.s32 %s9, %s16
    %p18 = scmp.eq.s32.totalorder %s17, 0
    %s20 = sadd.s32 %s19, 1
    %s21 = scalar_select %p18, %s19, %s20
    %p24 = pneg %p18
    %p25 = scmp.eq.s32.totalorder %s9, 1
    %p26 = por %p24, %p25
    %p27 = scmp.ne.s32.totalorder %s19, %s22
    %p28 = scmp.eq.s32.totalorder %s9, 0
    %p29 = por %p27, %p28
    %p30 = scmp.ne.s32.totalorder %s19, %s22
    %p31 = scmp.eq.s32.totalorder %s14, 1
    %p32 = por %p30, %p31
    %p33 = scmp.ne.s32.totalorder %s22, %s23
    %p34 = scmp.eq.s32.totalorder %s14, 0
    %p35 = por %p33, %p34
    %p36 = scmp.ne.s32.totalorder %s22, %s23
    %p37 = scmp.eq.s32.totalorder %s15, 1
    %p38 = por %p36, %p37
    %p40 = scmp.ne.s32.totalorder %s23, %s39
    %p41 = scmp.eq.s32.totalorder %s15, 0
    %p42 = por %p40, %p41
    %s44 = sadd.s32 %s43, 1
    %p47 = scmp.eq.s32.totalorder %s9, 1
    %p48 = scmp.ne.s32.totalorder %s43, %s45
    %p49 = scmp.eq.s32.totalorder %s9, 0
    %p50 = por %p48, %p49
    %p51 = scmp.ne.s32.totalorder %s43, %s45
    %p52 = scmp.eq.s32.totalorder %s14, 1
    %p53 = por %p51, %p52
    %p54 = scmp.ne.s32.totalorder %s45, %s46
    %p55 = scmp.eq.s32.totalorder %s14, 0
    %p56 = por %p54, %p55
    %p57 = scmp.ne.s32.totalorder %s45, %s46
    %p58 = scmp.eq.s32.totalorder %s15, 1
    %p59 = por %p57, %p58
    %p61 = scmp.ne.s32.totalorder %s46, %s60
    %p62 = scmp.eq.s32.totalorder %s15, 0
    %p63 = por %p61, %p62
    %s65 = sadd.s32 %s64, 1
    %p68 = scmp.eq.s32.totalorder %s9, 1
    %p69 = scmp.ne.s32.totalorder %s64, %s66
    %p70 = scmp.eq.s32.totalorder %s9, 0
    %p71 = por %p69, %p70
    %p72 = scmp.ne.s32.totalorder %s64, %s66
    %p73 = scmp.eq.s32.totalorder %s14, 1
    %p74 = por %p72, %p73
    %p75 = scmp.ne.s32.totalorder %s66, %s67
    %p76 = scmp.eq.s32.totalorder %s14, 0
    %p77 = por %p75, %p76
    %p78 = scmp.ne.s32.totalorder %s66, %s67
    %p79 = scmp.eq.s32.totalorder %s15, 1
    %p80 = por %p78, %p79
    %p82 = scmp.ne.s32.totalorder %s67, %s81
    %p83 = scmp.eq.s32.totalorder %s15, 0
    %p84 = por %p82, %p83
    %s85 = ssub.s32 %s9, %s16
    %p86 = scmp.eq.s32.totalorder %s85, 0
    %s88 = sadd.s32 %s87, 1
    %s89 = scalar_select %p86, %s87, %s88
    %p92 = pneg %p86
    %p93 = scmp.eq.s32.totalorder %s9, 1
    %p94 = por %p92, %p93
    %p95 = scmp.ne.s32.totalorder %s87, %s90
    %p96 = scmp.eq.s32.totalorder %s9, 0
    %p97 = por %p95, %p96
    %p98 = scmp.ne.s32.totalorder %s87, %s90
    %p99 = scmp.eq.s32.totalorder %s14, 1
    %p100 = por %p98, %p99
    %p101 = scmp.ne.s32.totalorder %s90, %s91
    %p102 = scmp.eq.s32.totalorder %s14, 0
    %p103 = por %p101, %p102
    %p104 = scmp.ne.s32.totalorder %s90, %s91
    %p105 = scmp.eq.s32.totalorder %s15, 1
    %p106 = por %p104, %p105
    %p108 = scmp.ne.s32.totalorder %s91, %s107
    %p109 = scmp.eq.s32.totalorder %s15, 0
    %p110 = por %p108, %p109
    %p111 = scmp.le.s32.totalorder 1, %s9
    %p112 = scmp.lt.s32.totalorder %s9, 3
    %p113 = pnand %p111, %p112
    %p114 = pneg %p113
    // Predicated region
    $region9: #{basic_block_forward.3} parent=5 // pred_check
      _
    $region10: #{basic_block_forward.3} parent=5 // pred_check_branch
      %116 = sbr.rel (%p113) target = $region12
    $region11: #{basic_block_forward.3} parent=5 // pred_region
      %s117 = ssub.s32 %s9, 1
      // Predicated region
      $region13: #{basic_block_forward.3} parent=11 // pred_check
        %p118 = pneg %p56
      $region14: #{basic_block_forward.3} parent=11 // pred_check_branch
        %120 = sbr.rel (%p118) target = $region16
      $region15: #{basic_block_forward.3} parent=11 // pred_region
        _
      $region16: #{basic_block_forward.3} parent=11 // pred_fallthru
        _
      // Predicated region
      $region17: #{basic_block_forward.3} parent=11 // pred_check
        %p121 = pneg %p77
      $region18: #{basic_block_forward.3} parent=11 // pred_check_branch
        %123 = sbr.rel (%p121) target = $region20
      $region19: #{basic_block_forward.3} parent=11 // pred_region
        _
      $region20: #{basic_block_forward.3} parent=11 // pred_fallthru
        _
    $region12: #{basic_block_forward.3} parent=5 // pred_fallthru
      _
    %p124 = scmp.lt.s32.totalorder %s9, 2
    // Predicated region
    $region21: #{basic_block_forward.3} parent=5 // pred_check
      %p125 = pneg %p124
    $region22: #{basic_block_forward.3} parent=5 // pred_check_branch
      %127 = sbr.rel (%p125) target = $region24
    $region23: #{basic_block_forward.3} parent=5 // pred_region
      // Predicated region
      $region25: #{basic_block_forward.3} parent=23 // pred_check
        %p128 = pneg %p29
      $region26: #{basic_block_forward.3} parent=23 // pred_check_branch
        %130 = sbr.rel (%p128) target = $region28
      $region27: #{basic_block_forward.3} parent=23 // pred_region
        %p131 = scmp.lt.s32.totalorder %s9, 1
        %s132 = scalar_select %p131, %s9, 1
        %s133 = smul.addr %s132, 72
        %s134 = smul.addr %s133, 8
        %s135 = scalar_lea.vmem %s0, %s134
      $region28: #{basic_block_forward.3} parent=23 // pred_fallthru
        _
    $region24: #{basic_block_forward.3} parent=5 // pred_fallthru
      _
    %p136 = scmp.le.s32.totalorder 1, %s9
    %p137 = scmp.lt.s32.totalorder %s9, 3
    %p138 = pnand %p136, %p137
    %p139 = pneg %p138
    // Predicated region
    $region29: #{basic_block_forward.3} parent=5 // pred_check
      _
    $region30: #{basic_block_forward.3} parent=5 // pred_check_branch
      %141 = sbr.rel (%p138) target = $region32
    $region31: #{basic_block_forward.3} parent=5 // pred_region
      %s142 = ssub.s32 %s9, 1
      %p143 = scmp.lt.s32.totalorder %s14, 1
      %s144 = scalar_select %p143, %s14, 1
      %s145 = smul.addr %s144, 72
      %s146 = smul.addr %s145, 8
      %s147 = scalar_lea.vmem %s0, %s146
      %p148 = pneg %p35
      %p149 = pneg %p32
      %p150 = pneg %p56
      %p151 = pneg %p53
      %p152 = pneg %p77
      %p153 = pneg %p74
      %p154 = pneg %p103
      %p155 = pneg %p100
      %p156 = scmp.lt.s32.totalorder %s14, 1
      %s157 = scalar_select %p156, %s14, 1
      %s158 = smul.addr %s157, 8
      %s159 = smul.addr %s158, 4
      %s160 = scalar_lea.vmem %s3, %s159
      %p161 = scmp.lt.s32.totalorder %s14, 1
      %s162 = scalar_select %p161, %s14, 1
      %s163 = smul.addr %s162, 72
      %s164 = smul.addr %s163, 8
      %s165 = scalar_lea.vmem %s0, %s164
      %p166 = scmp.lt.s32.totalorder %s14, 1
      %s167 = scalar_select %p166, %s14, 1
      %s168 = smul.addr %s167, 8
      %s169 = smul.addr %s168, 4
      %s170 = scalar_lea.vmem %s3, %s169
      %v172 = vld [vmem:[%s165] sm:$0xff]
      %v173 = vld [vmem:[%s165 + $0x10] sm:$0xff]
      %v174 = vld [vmem:[%s165 + $0x20] sm:$0xff]
      %v175 = vld [vmem:[%s165 + $0x30] sm:$0xff]
      %v176 = vld [vmem:[%s165 + $0x40] sm:$0xff]
      %v177 = vld [vmem:[%s165 + $0x50] sm:$0xff]
      %v178 = vld [vmem:[%s165 + $0x60] sm:$0xff]
      %v179 = vld [vmem:[%s165 + $0x70] sm:$0xff]
      %v180 = vpack.c.bf16 %v173, %v172
      %v181 = vpack.c.bf16 %v175, %v174
      %v182 = vpack.c.bf16 %v177, %v176
      %v183 = vpack.c.bf16 %v179, %v178
      %v184 = vld [vmem:[%s1] sm:$0x3]
      %s185 = scalar_lea.vmem %s165, 144
      %v186 = vld [vmem:[%s185] sm:$0xff]
      %v187 = vld [vmem:[%s185 + $0x10] sm:$0xff]
      %v188 = vld [vmem:[%s185 + $0x20] sm:$0xff]
      %v189 = vld [vmem:[%s185 + $0x30] sm:$0xff]
      %v190 = vld [vmem:[%s185 + $0x40] sm:$0xff]
      %v191 = vld [vmem:[%s185 + $0x50] sm:$0xff]
      %v192 = vld [vmem:[%s185 + $0x60] sm:$0xff]
      %v193 = vld [vmem:[%s185 + $0x70] sm:$0xff]
      %v194 = vpack.c.bf16 %v187, %v186
      %v195 = vpack.c.bf16 %v189, %v188
      %v196 = vpack.c.bf16 %v191, %v190
      %v197 = vpack.c.bf16 %v193, %v192
      %s198 = scalar_lea.vmem %s1, 2
      %v199 = vld [vmem:[%s198] sm:$0x3]
      %vm200 = vcmask 31744
      %v202 = vsel %vm200, %v194, 0
      %v205 = vsel %vm200, %v195, 0
      %v208 = vsel %vm200, %v196, 0
      %v211 = vsel %vm200, %v197, 0
      %vm213 = vcmask 1041408
      %v215 = vsel %vm213, %v199, 0
      %217 = vmatprep.subr.bf16.mxu0 0
      %218 = vmatpush1.bf16.msra.mxu0 %v215
      %219 = vmatprep.subr.bf16.mxu0 0
      %220 = vmatpush1.bf16.msra.mxu0 0
      %221 = vmatprep.subr.bf16.mxu0 0
      %222 = vmatpush1.bf16.msra.mxu0 0
      %223 = vmatprep.subr.bf16.mxu0 0
      %224 = vmatpush1.bf16.msra.mxu0 0
      %225 = vmatprep.subr.bf16.mxu0 0
      %226 = vmatpush1.bf16.msra.mxu0 0
      %227 = vmatprep.subr.bf16.mxu0 0
      %228 = vmatpush1.bf16.msra.mxu0 0
      %229 = vmatprep.subr.bf16.mxu0 0
      %230 = vmatpush1.bf16.msra.mxu0 0
      %231 = vmatprep.subr.bf16.mxu0 0
      %232 = vmatpush1.bf16.msra.mxu0 0
      %233 = vmatprep.subr.bf16.mxu0 0
      %234 = vmatpush1.bf16.msra.mxu0 0
      %235 = vmatprep.subr.bf16.mxu0 0
      %236 = vmatpush1.bf16.msra.mxu0 0
      %237 = vmatprep.subr.bf16.mxu0 0
      %238 = vmatpush1.bf16.msra.mxu0 0
      %239 = vmatprep.subr.bf16.mxu0 0
      %240 = vmatpush1.bf16.msra.mxu0 0
      %241 = vmatprep.subr.bf16.mxu0 0
      %242 = vmatpush1.bf16.msra.mxu0 0
      %243 = vmatprep.subr.bf16.mxu0 0
      %244 = vmatpush1.bf16.msra.mxu0 0
      %245 = vmatprep.subr.bf16.mxu0 0
      %246 = vmatpush1.bf16.msra.mxu0 0
      %247 = vmatprep.subr.bf16.mxu0 0
      %248 = vmatpush1.bf16.msra.mxu0 0
      %249 = vmatprep.mubr.bf16.mxu0 0
      %250 = vmatmul.mubr.bf16.gmra.mrb[0].mxu0 %v202
      %v251 = vpop.f32.mrb[0].mxu0
      %v252 = vadd.f32 0.0, %v251
      %v253 = vpop.f32.mrb[0].mxu0
      %v254 = vpop.f32.mrb[0].mxu0
      %v255 = vadd.f32 0.0, %v254
      %v256 = vpop.f32.mrb[0].mxu0
      %257 = vmatprep.mubr.bf16.mxu0 0
      %258 = vmatmul.mubr.bf16.gmra.mrb[0].mxu0 %v205
      %v259 = vpop.f32.mrb[0].mxu0
      %v260 = vadd.f32 0.0, %v259
      %v261 = vpop.f32.mrb[0].mxu0
      %v262 = vpop.f32.mrb[0].mxu0
      %v263 = vadd.f32 0.0, %v262
      %v264 = vpop.f32.mrb[0].mxu0
      %265 = vmatprep.mubr.bf16.mxu0 0
      %266 = vmatmul.mubr.bf16.gmra.mrb[0].mxu0 %v208
      %v267 = vpop.f32.mrb[0].mxu0
      %v268 = vadd.f32 0.0, %v267
      %v269 = vpop.f32.mrb[0].mxu0
      %v270 = vpop.f32.mrb[0].mxu0
      %v271 = vadd.f32 0.0, %v270
      %v272 = vpop.f32.mrb[0].mxu0
      %273 = vmatprep.mubr.bf16.mxu0 0
      %274 = vmatmul.mubr.bf16.gmra.mrb[0].mxu0 %v211
      %v275 = vpop.f32.mrb[0].mxu0
      %v276 = vadd.f32 0.0, %v275
      %v277 = vpop.f32.mrb[0].mxu0
      %v278 = vpop.f32.mrb[0].mxu0
      %v279 = vadd.f32 0.0, %v278
      %v280 = vpop.f32.mrb[0].mxu0
      %281 = vdwg.mxu0
      %v283 = vsel %vm200, %v180, 0
      %v286 = vsel %vm200, %v181, 0
      %v289 = vsel %vm200, %v182, 0
      %v292 = vsel %vm200, %v183, 0
      %v295 = vsel %vm213, %v184, 0
      %297 = vmatprep.subr.bf16.mxu0 0
      %298 = vmatpush1.bf16.msra.mxu0 %v295
      %299 = vmatprep.subr.bf16.mxu0 0
      %300 = vmatpush1.bf16.msra.mxu0 0
      %301 = vmatprep.subr.bf16.mxu0 0
      %302 = vmatpush1.bf16.msra.mxu0 0
      %303 = vmatprep.subr.bf16.mxu0 0
      %304 = vmatpush1.bf16.msra.mxu0 0
      %305 = vmatprep.subr.bf16.mxu0 0
      %306 = vmatpush1.bf16.msra.mxu0 0
      %307 = vmatprep.subr.bf16.mxu0 0
      %308 = vmatpush1.bf16.msra.mxu0 0
      %309 = vmatprep.subr.bf16.mxu0 0
      %310 = vmatpush1.bf16.msra.mxu0 0
      %311 = vmatprep.subr.bf16.mxu0 0
      %312 = vmatpush1.bf16.msra.mxu0 0
      %313 = vmatprep.subr.bf16.mxu0 0
      %314 = vmatpush1.bf16.msra.mxu0 0
      %315 = vmatprep.subr.bf16.mxu0 0
      %316 = vmatpush1.bf16.msra.mxu0 0
      %317 = vmatprep.subr.bf16.mxu0 0
      %318 = vmatpush1.bf16.msra.mxu0 0
      %319 = vmatprep.subr.bf16.mxu0 0
      %320 = vmatpush1.bf16.msra.mxu0 0
      %321 = vmatprep.subr.bf16.mxu0 0
      %322 = vmatpush1.bf16.msra.mxu0 0
      %323 = vmatprep.subr.bf16.mxu0 0
      %324 = vmatpush1.bf16.msra.mxu0 0
      %325 = vmatprep.subr.bf16.mxu0 0
      %326 = vmatpush1.bf16.msra.mxu0 0
      %327 = vmatprep.subr.bf16.mxu0 0
      %328 = vmatpush1.bf16.msra.mxu0 0
      %329 = vmatprep.mubr.bf16.mxu0 0
      %330 = vmatmul.mubr.bf16.gmra.mrb[0].mxu0 %v283
      %v331 = vpop.f32.mrb[0].mxu0
      %v332 = vadd.f32 %v252, %v331
      %v333 = vpop.f32.mrb[0].mxu0
      %v334 = vpop.f32.mrb[0].mxu0
      %v335 = vadd.f32 %v255, %v334
      %v336 = vpop.f32.mrb[0].mxu0
      %337 = vmatprep.mubr.bf16.mxu0 0
      %338 = vmatmul.mubr.bf16.gmra.mrb[0].mxu0 %v286
      %v339 = vpop.f32.mrb[0].mxu0
      %v340 = vadd.f32 %v260, %v339
      %v341 = vpop.f32.mrb[0].mxu0
      %v342 = vpop.f32.mrb[0].mxu0
      %v343 = vadd.f32 %v263, %v342
      %v344 = vpop.f32.mrb[0].mxu0
      %345 = vmatprep.mubr.bf16.mxu0 0
      %346 = vmatmul.mubr.bf16.gmra.mrb[0].mxu0 %v289
      %v347 = vpop.f32.mrb[0].mxu0
      %v348 = vadd.f32 %v268, %v347
      %v349 = vpop.f32.mrb[0].mxu0
      %v350 = vpop.f32.mrb[0].mxu0
      %v351 = vadd.f32 %v271, %v350
      %v352 = vpop.f32.mrb[0].mxu0
      %353 = vmatprep.mubr.bf16.mxu0 0
      %354 = vmatmul.mubr.bf16.gmra.mrb[0].mxu0 %v292
      %v355 = vpop.f32.mrb[0].mxu0
      %v356 = vadd.f32 %v276, %v355
      %v357 = vpop.f32.mrb[0].mxu0
      %v358 = vpop.f32.mrb[0].mxu0
      %v359 = vadd.f32 %v279, %v358
      %v360 = vpop.f32.mrb[0].mxu0
      %361 = vdwg.mxu0
      %v362 = vld [vmem:[%s165 + $0x1] sm:$0xff]
      %v363 = vld [vmem:[%s165 + $0x11] sm:$0xff]
      %v364 = vld [vmem:[%s165 + $0x21] sm:$0xff]
      %v365 = vld [vmem:[%s165 + $0x31] sm:$0xff]
      %v366 = vld [vmem:[%s165 + $0x41] sm:$0xff]
      %v367 = vld [vmem:[%s165 + $0x51] sm:$0xff]
      %v368 = vld [vmem:[%s165 + $0x61] sm:$0xff]
      %v369 = vld [vmem:[%s165 + $0x71] sm:$0xff]
      %v370 = vpack.c.bf16 %v363, %v362
      %v371 = vpack.c.bf16 %v365, %v364
      %v372 = vpack.c.bf16 %v367, %v366
      %v373 = vpack.c.bf16 %v369, %v368
      %s374 = scalar_lea.vmem %s1, 4
      %v375 = vld [vmem:[%s374] sm:$0x3]
      %v377 = vsel %vm200, %v370, 0
      %v380 = vsel %vm200, %v371, 0
      %v383 = vsel %vm200, %v372, 0
      %v386 = vsel %vm200, %v373, 0
      %v389 = vsel %vm213, %v375, 0
      %391 = vmatprep.subr.bf16.mxu0 0
      %392 = vmatpush1.bf16.msra.mxu0 %v389
      %393 = vmatprep.subr.bf16.mxu0 0
      %394 = vmatpush1.bf16.msra.mxu0 0
      %395 = vmatprep.subr.bf16.mxu0 0
      %396 = vmatpush1.bf16.msra.mxu0 0
      %397 = vmatprep.subr.bf16.mxu0 0
      %398 = vmatpush1.bf16.msra.mxu0 0
      %399 = vmatprep.subr.bf16.mxu0 0
      %400 = vmatpush1.bf16.msra.mxu0 0
      %401 = vmatprep.subr.bf16.mxu0 0
      %402 = vmatpush1.bf16.msra.mxu0 0
      %403 = vmatprep.subr.bf16.mxu0 0
      %404 = vmatpush1.bf16.msra.mxu0 0
      %405 = vmatprep.subr.bf16.mxu0 0
      %406 = vmatpush1.bf16.msra.mxu0 0
      %407 = vmatprep.subr.bf16.mxu0 0
      %408 = vmatpush1.bf16.msra.mxu0 0
      %409 = vmatprep.subr.bf16.mxu0 0
      %410 = vmatpush1.bf16.msra.mxu0 0
      %411 = vmatprep.subr.bf16.mxu0 0
      %412 = vmatpush1.bf16.msra.mxu0 0
      %413 = vmatprep.subr.bf16.mxu0 0
      %414 = vmatpush1.bf16.msra.mxu0 0
      %415 = vmatprep.subr.bf16.mxu0 0
      %416 = vmatpush1.bf16.msra.mxu0 0
      %417 = vmatprep.subr.bf16.mxu0 0
      %418 = vmatpush1.bf16.msra.mxu0 0
      %419 = vmatprep.subr.bf16.mxu0 0
      %420 = vmatpush1.bf16.msra.mxu0 0
      %421 = vmatprep.subr.bf16.mxu0 0
      %422 = vmatpush1.bf16.msra.mxu0 0
      %423 = vmatprep.mubr.bf16.mxu0 0
      %424 = vmatmul.mubr.bf16.gmra.mrb[0].mxu0 %v377
      %v425 = vpop.f32.mrb[0].mxu0
      %v426 = vadd.f32 0.0, %v425
      %v427 = vpop.f32.mrb[0].mxu0
      %v428 = vpop.f32.mrb[0].mxu0
      %v429 = vadd.f32 0.0, %v428
      %v430 = vpop.f32.mrb[0].mxu0
      %431 = vmatprep.mubr.bf16.mxu0 0
      %432 = vmatmul.mubr.bf16.gmra.mrb[0].mxu0 %v380
      %v433 = vpop.f32.mrb[0].mxu0
      %v434 = vadd.f32 0.0, %v433
      %v435 = vpop.f32.mrb[0].mxu0
      %v436 = vpop.f32.mrb[0].mxu0
      %v437 = vadd.f32 0.0, %v436
      %v438 = vpop.f32.mrb[0].mxu0
      %439 = vmatprep.mubr.bf16.mxu0 0
      %440 = vmatmul.mubr.bf16.gmra.mrb[0].mxu0 %v383
      %v441 = vpop.f32.mrb[0].mxu0
      %v442 = vadd.f32 0.0, %v441
      %v443 = vpop.f32.mrb[0].mxu0
      %v444 = vpop.f32.mrb[0].mxu0
      %v445 = vadd.f32 0.0, %v444
      %v446 = vpop.f32.mrb[0].mxu0
      %447 = vmatprep.mubr.bf16.mxu0 0
      %448 = vmatmul.mubr.bf16.gmra.mrb[0].mxu0 %v386
      %v449 = vpop.f32.mrb[0].mxu0
      %v450 = vadd.f32 0.0, %v449
      %v451 = vpop.f32.mrb[0].mxu0
      %v452 = vpop.f32.mrb[0].mxu0
      %v453 = vadd.f32 0.0, %v452
      %v454 = vpop.f32.mrb[0].mxu0
      %455 = vdwg.mxu0
      %v456 = vadd.f32 %v332, %v426
      %v457 = vadd.f32 %v335, %v429
      %v458 = vadd.f32 %v340, %v434
      %v459 = vadd.f32 %v343, %v437
      %v460 = vadd.f32 %v348, %v442
      %v461 = vadd.f32 %v351, %v445
      %v462 = vadd.f32 %v356, %v450
      %v463 = vadd.f32 %v359, %v453
      %s464 = scalar_lea.vmem %s165, 288
      %v465 = vld [vmem:[%s464] sm:$0xff]
      %v466 = vld [vmem:[%s464 + $0x10] sm:$0xff]
      %v467 = vld [vmem:[%s464 + $0x20] sm:$0xff]
      %v468 = vld [vmem:[%s464 + $0x30] sm:$0xff]
      %v469 = vld [vmem:[%s464 + $0x40] sm:$0xff]
      %v470 = vld [vmem:[%s464 + $0x50] sm:$0xff]
      %v471 = vld [vmem:[%s464 + $0x60] sm:$0xff]
      %v472 = vld [vmem:[%s464 + $0x70] sm:$0xff]
      %v473 = vpack.c.bf16 %v466, %v465
      %v474 = vpack.c.bf16 %v468, %v467
      %v475 = vpack.c.bf16 %v470, %v469
      %v476 = vpack.c.bf16 %v472, %v471
      %s477 = scalar_lea.vmem %s1, 6
      %v478 = vld [vmem:[%s477] sm:$0x3]
      %v480 = vsel %vm200, %v473, 0
      %v483 = vsel %vm200, %v474, 0
      %v486 = vsel %vm200, %v475, 0
      %v489 = vsel %vm200, %v476, 0
      %v492 = vsel %vm213, %v478, 0
      %494 = vmatprep.subr.bf16.mxu0 0
      %495 = vmatpush1.bf16.msra.mxu0 %v492
      %496 = vmatprep.subr.bf16.mxu0 0
      %497 = vmatpush1.bf16.msra.mxu0 0
      %498 = vmatprep.subr.bf16.mxu0 0
      %499 = vmatpush1.bf16.msra.mxu0 0
      %500 = vmatprep.subr.bf16.mxu0 0
      %501 = vmatpush1.bf16.msra.mxu0 0
      %502 = vmatprep.subr.bf16.mxu0 0
      %503 = vmatpush1.bf16.msra.mxu0 0
      %504 = vmatprep.subr.bf16.mxu0 0
      %505 = vmatpush1.bf16.msra.mxu0 0
      %506 = vmatprep.subr.bf16.mxu0 0
      %507 = vmatpush1.bf16.msra.mxu0 0
      %508 = vmatprep.subr.bf16.mxu0 0
      %509 = vmatpush1.bf16.msra.mxu0 0
      %510 = vmatprep.subr.bf16.mxu0 0
      %511 = vmatpush1.bf16.msra.mxu0 0
      %512 = vmatprep.subr.bf16.mxu0 0
      %513 = vmatpush1.bf16.msra.mxu0 0
      %514 = vmatprep.subr.bf16.mxu0 0
      %515 = vmatpush1.bf16.msra.mxu0 0
      %516 = vmatprep.subr.bf16.mxu0 0
      %517 = vmatpush1.bf16.msra.mxu0 0
      %518 = vmatprep.subr.bf16.mxu0 0
      %519 = vmatpush1.bf16.msra.mxu0 0
      %520 = vmatprep.subr.bf16.mxu0 0
      %521 = vmatpush1.bf16.msra.mxu0 0
      %522 = vmatprep.subr.bf16.mxu0 0
      %523 = vmatpush1.bf16.msra.mxu0 0
      %524 = vmatprep.subr.bf16.mxu0 0
      %525 = vmatpush1.bf16.msra.mxu0 0
      %526 = vmatprep.mubr.bf16.mxu0 0
      %527 = vmatmul.mubr.bf16.gmra.mrb[0].mxu0 %v480
      %v528 = vpop.f32.mrb[0].mxu0
      %v529 = vadd.f32 0.0, %v528
      %v530 = vpop.f32.mrb[0].mxu0
      %v531 = vpop.f32.mrb[0].mxu0
      %v532 = vadd.f32 0.0, %v531
      %v533 = vpop.f32.mrb[0].mxu0
      %534 = vmatprep.mubr.bf16.mxu0 0
      %535 = vmatmul.mubr.bf16.gmra.mrb[0].mxu0 %v483
      %v536 = vpop.f32.mrb[0].mxu0
      %v537 = vadd.f32 0.0, %v536
      %v538 = vpop.f32.mrb[0].mxu0
      %v539 = vpop.f32.mrb[0].mxu0
      %v540 = vadd.f32 0.0, %v539
      %v541 = vpop.f32.mrb[0].mxu0
      %542 = vmatprep.mubr.bf16.mxu0 0
      %543 = vmatmul.mubr.bf16.gmra.mrb[0].mxu0 %v486
      %v544 = vpop.f32.mrb[0].mxu0
      %v545 = vadd.f32 0.0, %v544
      %v546 = vpop.f32.mrb[0].mxu0
      %v547 = vpop.f32.mrb[0].mxu0
      %v548 = vadd.f32 0.0, %v547
      %v549 = vpop.f32.mrb[0].mxu0
      %550 = vmatprep.mubr.bf16.mxu0 0
      %551 = vmatmul.mubr.bf16.gmra.mrb[0].mxu0 %v489
      %v552 = vpop.f32.mrb[0].mxu0
      %v553 = vadd.f32 0.0, %v552
      %v554 = vpop.f32.mrb[0].mxu0
      %v555 = vpop.f32.mrb[0].mxu0
      %v556 = vadd.f32 0.0, %v555
      %v557 = vpop.f32.mrb[0].mxu0
      %558 = vdwg.mxu0
      %v559 = vadd.f32 %v456, %v529
      %v560 = vadd.f32 %v457, %v532
      %v561 = vadd.f32 %v458, %v537
      %v562 = vadd.f32 %v459, %v540
      %v563 = vadd.f32 %v460, %v545
      %v564 = vadd.f32 %v461, %v548
      %v565 = vadd.f32 %v462, %v553
      %v566 = vadd.f32 %v463, %v556
      %s567 = scalar_lea.vmem %s165, 432
      %v568 = vld [vmem:[%s567] sm:$0xff]
      %v569 = vld [vmem:[%s567 + $0x10] sm:$0xff]
      %v570 = vld [vmem:[%s567 + $0x20] sm:$0xff]
      %v571 = vld [vmem:[%s567 + $0x30] sm:$0xff]
      %v572 = vld [vmem:[%s567 + $0x40] sm:$0xff]
      %v573 = vld [vmem:[%s567 + $0x50] sm:$0xff]
      %v574 = vld [vmem:[%s567 + $0x60] sm:$0xff]
      %v575 = vld [vmem:[%s567 + $0x70] sm:$0xff]
      %v576 = vpack.c.bf16 %v569, %v568
      %v577 = vpack.c.bf16 %v571, %v570
      %v578 = vpack.c.bf16 %v573, %v572
      %v579 = vpack.c.bf16 %v575, %v574
      %s580 = scalar_lea.vmem %s1, 8
      %v581 = vld [vmem:[%s580] sm:$0x3]
      %v583 = vsel %vm200, %v576, 0
      %v586 = vsel %vm200, %v577, 0
      %v589 = vsel %vm200, %v578, 0
      %v592 = vsel %vm200, %v579, 0
      %v595 = vsel %vm213, %v581, 0
      %597 = vmatprep.subr.bf16.mxu0 0
      %598 = vmatpush1.bf16.msra.mxu0 %v595
      %599 = vmatprep.subr.bf16.mxu0 0
      %600 = vmatpush1.bf16.msra.mxu0 0
      %601 = vmatprep.subr.bf16.mxu0 0
      %602 = vmatpush1.bf16.msra.mxu0 0
      %603 = vmatprep.subr.bf16.mxu0 0
      %604 = vmatpush1.bf16.msra.mxu0 0
      %605 = vmatprep.subr.bf16.mxu0 0
      %606 = vmatpush1.bf16.msra.mxu0 0
      %607 = vmatprep.subr.bf16.mxu0 0
      %608 = vmatpush1.bf16.msra.mxu0 0
      %609 = vmatprep.subr.bf16.mxu0 0
      %610 = vmatpush1.bf16.msra.mxu0 0
      %611 = vmatprep.subr.bf16.mxu0 0
      %612 = vmatpush1.bf16.msra.mxu0 0
      %613 = vmatprep.subr.bf16.mxu0 0
      %614 = vmatpush1.bf16.msra.mxu0 0
      %615 = vmatprep.subr.bf16.mxu0 0
      %616 = vmatpush1.bf16.msra.mxu0 0
      %617 = vmatprep.subr.bf16.mxu0 0
      %618 = vmatpush1.bf16.msra.mxu0 0
      %619 = vmatprep.subr.bf16.mxu0 0
      %620 = vmatpush1.bf16.msra.mxu0 0
      %621 = vmatprep.subr.bf16.mxu0 0
      %622 = vmatpush1.bf16.msra.mxu0 0
      %623 = vmatprep.subr.bf16.mxu0 0
      %624 = vmatpush1.bf16.msra.mxu0 0
      %625 = vmatprep.subr.bf16.mxu0 0
      %626 = vmatpush1.bf16.msra.mxu0 0
      %627 = vmatprep.subr.bf16.mxu0 0
      %628 = vmatpush1.bf16.msra.mxu0 0
      %629 = vmatprep.mubr.bf16.mxu0 0
      %630 = vmatmul.mubr.bf16.gmra.mrb[0].mxu0 %v583
      %v631 = vpop.f32.mrb[0].mxu0
      %v632 = vadd.f32 0.0, %v631
      %v633 = vpop.f32.mrb[0].mxu0
      %v634 = vpop.f32.mrb[0].mxu0
      %v635 = vadd.f32 0.0, %v634
      %v636 = vpop.f32.mrb[0].mxu0
      %637 = vmatprep.mubr.bf16.mxu0 0
      %638 = vmatmul.mubr.bf16.gmra.mrb[0].mxu0 %v586
      %v639 = vpop.f32.mrb[0].mxu0
      %v640 = vadd.f32 0.0, %v639
      %v641 = vpop.f32.mrb[0].mxu0
      %v642 = vpop.f32.mrb[0].mxu0
      %v643 = vadd.f32 0.0, %v642
      %v644 = vpop.f32.mrb[0].mxu0
      %645 = vmatprep.mubr.bf16.mxu0 0
      %646 = vmatmul.mubr.bf16.gmra.mrb[0].mxu0 %v589
      %v647 = vpop.f32.mrb[0].mxu0
      %v648 = vadd.f32 0.0, %v647
      %v649 = vpop.f32.mrb[0].mxu0
      %v650 = vpop.f32.mrb[0].mxu0
      %v651 = vadd.f32 0.0, %v650
      %v652 = vpop.f32.mrb[0].mxu0
      %653 = vmatprep.mubr.bf16.mxu0 0
      %654 = vmatmul.mubr.bf16.gmra.mrb[0].mxu0 %v592
      %v655 = vpop.f32.mrb[0].mxu0
      %v656 = vadd.f32 0.0, %v655
      %v657 = vpop.f32.mrb[0].mxu0
      %v658 = vpop.f32.mrb[0].mxu0
      %v659 = vadd.f32 0.0, %v658
      %v660 = vpop.f32.mrb[0].mxu0
      %661 = vdwg.mxu0
      %v662 = vadd.f32 %v559, %v632
      %v663 = vadd.f32 %v560, %v635
      %v664 = vadd.f32 %v561, %v640
      %v665 = vadd.f32 %v562, %v643
      %v666 = vadd.f32 %v563, %v648
      %v667 = vadd.f32 %v564, %v651
      %v668 = vadd.f32 %v565, %v656
      %v669 = vadd.f32 %v566, %v659
      %v670 = vld [vmem:[%s464 + $0x1] sm:$0xff]
      %v671 = vld [vmem:[%s464 + $0x11] sm:$0xff]
      %v672 = vld [vmem:[%s464 + $0x21] sm:$0xff]
      %v673 = vld [vmem:[%s464 + $0x31] sm:$0xff]
      %v674 = vld [vmem:[%s464 + $0x41] sm:$0xff]
      %v675 = vld [vmem:[%s464 + $0x51] sm:$0xff]
      %v676 = vld [vmem:[%s464 + $0x61] sm:$0xff]
      %v677 = vld [vmem:[%s464 + $0x71] sm:$0xff]
      %v678 = vpack.c.bf16 %v671, %v670
      %v679 = vpack.c.bf16 %v673, %v672
      %v680 = vpack.c.bf16 %v675, %v674
      %v681 = vpack.c.bf16 %v677, %v676
      %s682 = scalar_lea.vmem %s1, 10
      %v683 = vld [vmem:[%s682] sm:$0x3]
      %v685 = vsel %vm200, %v678, 0
      %v688 = vsel %vm200, %v679, 0
      %v691 = vsel %vm200, %v680, 0
      %v694 = vsel %vm200, %v681, 0
      %v697 = vsel %vm213, %v683, 0
      %699 = vmatprep.subr.bf16.mxu0 0
      %700 = vmatpush1.bf16.msra.mxu0 %v697
      %701 = vmatprep.subr.bf16.mxu0 0
      %702 = vmatpush1.bf16.msra.mxu0 0
      %703 = vmatprep.subr.bf16.mxu0 0
      %704 = vmatpush1.bf16.msra.mxu0 0
      %705 = vmatprep.subr.bf16.mxu0 0
      %706 = vmatpush1.bf16.msra.mxu0 0
      %707 = vmatprep.subr.bf16.mxu0 0
      %708 = vmatpush1.bf16.msra.mxu0 0
      %709 = vmatprep.subr.bf16.mxu0 0
      %710 = vmatpush1.bf16.msra.mxu0 0
      %711 = vmatprep.subr.bf16.mxu0 0
      %712 = vmatpush1.bf16.msra.mxu0 0
      %713 = vmatprep.subr.bf16.mxu0 0
      %714 = vmatpush1.bf16.msra.mxu0 0
      %715 = vmatprep.subr.bf16.mxu0 0
      %716 = vmatpush1.bf16.msra.mxu0 0
      %717 = vmatprep.subr.bf16.mxu0 0
      %718 = vmatpush1.bf16.msra.mxu0 0
      %719 = vmatprep.subr.bf16.mxu0 0
      %720 = vmatpush1.bf16.msra.mxu0 0
      %721 = vmatprep.subr.bf16.mxu0 0
      %722 = vmatpush1.bf16.msra.mxu0 0
      %723 = vmatprep.subr.bf16.mxu0 0
      %724 = vmatpush1.bf16.msra.mxu0 0
      %725 = vmatprep.subr.bf16.mxu0 0
      %726 = vmatpush1.bf16.msra.mxu0 0
      %727 = vmatprep.subr.bf16.mxu0 0
      %728 = vmatpush1.bf16.msra.mxu0 0
      %729 = vmatprep.subr.bf16.mxu0 0
      %730 = vmatpush1.bf16.msra.mxu0 0
      %731 = vmatprep.mubr.bf16.mxu0 0
      %732 = vmatmul.mubr.bf16.gmra.mrb[0].mxu0 %v685
      %v733 = vpop.f32.mrb[0].mxu0
      %v734 = vadd.f32 0.0, %v733
      %v735 = vpop.f32.mrb[0].mxu0
      %v736 = vpop.f32.mrb[0].mxu0
      %v737 = vadd.f32 0.0, %v736
      %v738 = vpop.f32.mrb[0].mxu0
      %739 = vmatprep.mubr.bf16.mxu0 0
      %740 = vmatmul.mubr.bf16.gmra.mrb[0].mxu0 %v688
      %v741 = vpop.f32.mrb[0].mxu0
      %v742 = vadd.f32 0.0, %v741
      %v743 = vpop.f32.mrb[0].mxu0
      %v744 = vpop.f32.mrb[0].mxu0
      %v745 = vadd.f32 0.0, %v744
      %v746 = vpop.f32.mrb[0].mxu0
      %747 = vmatprep.mubr.bf16.mxu0 0
      %748 = vmatmul.mubr.bf16.gmra.mrb[0].mxu0 %v691
      %v749 = vpop.f32.mrb[0].mxu0
      %v750 = vadd.f32 0.0, %v749
      %v751 = vpop.f32.mrb[0].mxu0
      %v752 = vpop.f32.mrb[0].mxu0
      %v753 = vadd.f32 0.0, %v752
      %v754 = vpop.f32.mrb[0].mxu0
      %755 = vmatprep.mubr.bf16.mxu0 0
      %756 = vmatmul.mubr.bf16.gmra.mrb[0].mxu0 %v694
      %v757 = vpop.f32.mrb[0].mxu0
      %v758 = vadd.f32 0.0, %v757
      %v759 = vpop.f32.mrb[0].mxu0
      %v760 = vpop.f32.mrb[0].mxu0
      %v761 = vadd.f32 0.0, %v760
      %v762 = vpop.f32.mrb[0].mxu0
      %763 = vdwg.mxu0
      %v764 = vadd.f32 %v662, %v734
      %v765 = vadd.f32 %v663, %v737
      %v766 = vadd.f32 %v664, %v742
      %v767 = vadd.f32 %v665, %v745
      %v768 = vadd.f32 %v666, %v750
      %v769 = vadd.f32 %v667, %v753
      %v770 = vadd.f32 %v668, %v758
      %v771 = vadd.f32 %v669, %v761
      %s772 = scalar_lea.vmem %s165, 16
      %v773 = vld [vmem:[%s772] sm:$0xff]
      %v774 = vld [vmem:[%s772 + $0x10] sm:$0xff]
      %v775 = vld [vmem:[%s772 + $0x20] sm:$0xff]
      %v776 = vld [vmem:[%s772 + $0x30] sm:$0xff]
      %v777 = vld [vmem:[%s772 + $0x40] sm:$0xff]
      %v778 = vld [vmem:[%s772 + $0x50] sm:$0xff]
      %v779 = vld [vmem:[%s772 + $0x60] sm:$0xff]
      %v780 = vld [vmem:[%s772 + $0x70] sm:$0xff]
      %v781 = vpack.c.bf16 %v774, %v773
      %v782 = vpack.c.bf16 %v776, %v775
      %v783 = vpack.c.bf16 %v778, %v777
      %v784 = vpack.c.bf16 %v780, %v779
      %s785 = scalar_lea.vmem %s1, 12
      %v786 = vld [vmem:[%s785] sm:$0x3]
      %v788 = vsel %vm200, %v781, 0
      %v791 = vsel %vm200, %v782, 0
      %v794 = vsel %vm200, %v783, 0
      %v797 = vsel %vm200, %v784, 0
      %v800 = vsel %vm213, %v786, 0
      %802 = vmatprep.subr.bf16.mxu0 0
      %803 = vmatpush1.bf16.msra.mxu0 %v800
      %804 = vmatprep.subr.bf16.mxu0 0
      %805 = vmatpush1.bf16.msra.mxu0 0
      %806 = vmatprep.subr.bf16.mxu0 0
      %807 = vmatpush1.bf16.msra.mxu0 0
      %808 = vmatprep.subr.bf16.mxu0 0
      %809 = vmatpush1.bf16.msra.mxu0 0
      %810 = vmatprep.subr.bf16.mxu0 0
      %811 = vmatpush1.bf16.msra.mxu0 0
      %812 = vmatprep.subr.bf16.mxu0 0
      %813 = vmatpush1.bf16.msra.mxu0 0
      %814 = vmatprep.subr.bf16.mxu0 0
      %815 = vmatpush1.bf16.msra.mxu0 0
      %816 = vmatprep.subr.bf16.mxu0 0
      %817 = vmatpush1.bf16.msra.mxu0 0
      %818 = vmatprep.subr.bf16.mxu0 0
      %819 = vmatpush1.bf16.msra.mxu0 0
      %820 = vmatprep.subr.bf16.mxu0 0
      %821 = vmatpush1.bf16.msra.mxu0 0
      %822 = vmatprep.subr.bf16.mxu0 0
      %823 = vmatpush1.bf16.msra.mxu0 0
      %824 = vmatprep.subr.bf16.mxu0 0
      %825 = vmatpush1.bf16.msra.mxu0 0
      %826 = vmatprep.subr.bf16.mxu0 0
      %827 = vmatpush1.bf16.msra.mxu0 0
      %828 = vmatprep.subr.bf16.mxu0 0
      %829 = vmatpush1.bf16.msra.mxu0 0
      %830 = vmatprep.subr.bf16.mxu0 0
      %831 = vmatpush1.bf16.msra.mxu0 0
      %832 = vmatprep.subr.bf16.mxu0 0
      %833 = vmatpush1.bf16.msra.mxu0 0
      %834 = vmatprep.mubr.bf16.mxu0 0
      %835 = vmatmul.mubr.bf16.gmra.mrb[0].mxu0 %v788
      %v836 = vpop.f32.mrb[0].mxu0
      %v837 = vadd.f32 0.0, %v836
      %v838 = vpop.f32.mrb[0].mxu0
      %v839 = vpop.f32.mrb[0].mxu0
      %v840 = vadd.f32 0.0, %v839
      %v841 = vpop.f32.mrb[0].mxu0
      %842 = vmatprep.mubr.bf16.mxu0 0
      %843 = vmatmul.mubr.bf16.gmra.mrb[0].mxu0 %v791
      %v844 = vpop.f32.mrb[0].mxu0
      %v845 = vadd.f32 0.0, %v844
      %v846 = vpop.f32.mrb[0].mxu0
      %v847 = vpop.f32.mrb[0].mxu0
      %v848 = vadd.f32 0.0, %v847
      %v849 = vpop.f32.mrb[0].mxu0
      %850 = vmatprep.mubr.bf16.mxu0 0
      %851 = vmatmul.mubr.bf16.gmra.mrb[0].mxu0 %v794
      %v852 = vpop.f32.mrb[0].mxu0
      %v853 = vadd.f32 0.0, %v852
      %v854 = vpop.f32.mrb[0].mxu0
      %v855 = vpop.f32.mrb[0].mxu0
      %v856 = vadd.f32 0.0, %v855
      %v857 = vpop.f32.mrb[0].mxu0
      %858 = vmatprep.mubr.bf16.mxu0 0
      %859 = vmatmul.mubr.bf16.gmra.mrb[0].mxu0 %v797
      %v860 = vpop.f32.mrb[0].mxu0
      %v861 = vadd.f32 0.0, %v860
      %v862 = vpop.f32.mrb[0].mxu0
      %v863 = vpop.f32.mrb[0].mxu0
      %v864 = vadd.f32 0.0, %v863
      %v865 = vpop.f32.mrb[0].mxu0
      %866 = vdwg.mxu0
      %v867 = vadd.f32 %v764, %v837
      %v868 = vadd.f32 %v765, %v840
      %v869 = vadd.f32 %v766, %v845
      %v870 = vadd.f32 %v767, %v848
      %v871 = vadd.f32 %v768, %v853
      %v872 = vadd.f32 %v769, %v856
      %v873 = vadd.f32 %v770, %v861
      %v874 = vadd.f32 %v771, %v864
      %s875 = scalar_lea.vmem %s165, 160
      %v876 = vld [vmem:[%s875] sm:$0xff]
      %v877 = vld [vmem:[%s875 + $0x10] sm:$0xff]
      %v878 = vld [vmem:[%s875 + $0x20] sm:$0xff]
      %v879 = vld [vmem:[%s875 + $0x30] sm:$0xff]
      %v880 = vld [vmem:[%s875 + $0x40] sm:$0xff]
      %v881 = vld [vmem:[%s875 + $0x50] sm:$0xff]
      %v882 = vld [vmem:[%s875 + $0x60] sm:$0xff]
      %v883 = vld [vmem:[%s875 + $0x70] sm:$0xff]
      %v884 = vpack.c.bf16 %v877, %v876
      %v885 = vpack.c.bf16 %v879, %v878
      %v886 = vpack.c.bf16 %v881, %v880
      %v887 = vpack.c.bf16 %v883, %v882
      %s888 = scalar_lea.vmem %s1, 14
      %v889 = vld [vmem:[%s888] sm:$0x3]
      %v891 = vsel %vm200, %v884, 0
      %v894 = vsel %vm200, %v885, 0
      %v897 = vsel %vm200, %v886, 0
      %v900 = vsel %vm200, %v887, 0
      %v903 = vsel %vm213, %v889, 0
      %905 = vmatprep.subr.bf16.mxu0 0
      %906 = vmatpush1.bf16.msra.mxu0 %v903
      %907 = vmatprep.subr.bf16.mxu0 0
      %908 = vmatpush1.bf16.msra.mxu0 0
      %909 = vmatprep.subr.bf16.mxu0 0
      %910 = vmatpush1.bf16.msra.mxu0 0
      %911 = vmatprep.subr.bf16.mxu0 0
      %912 = vmatpush1.bf16.msra.mxu0 0
      %913 = vmatprep.subr.bf16.mxu0 0
      %914 = vmatpush1.bf16.msra.mxu0 0
      %915 = vmatprep.subr.bf16.mxu0 0
      %916 = vmatpush1.bf16.msra.mxu0 0
      %917 = vmatprep.subr.bf16.mxu0 0
      %918 = vmatpush1.bf16.msra.mxu0 0
      %919 = vmatprep.subr.bf16.mxu0 0
      %920 = vmatpush1.bf16.msra.mxu0 0
      %921 = vmatprep.subr.bf16.mxu0 0
      %922 = vmatpush1.bf16.msra.mxu0 0
      %923 = vmatprep.subr.bf16.mxu0 0
      %924 = vmatpush1.bf16.msra.mxu0 0
      %925 = vmatprep.subr.bf16.mxu0 0
      %926 = vmatpush1.bf16.msra.mxu0 0
      %927 = vmatprep.subr.bf16.mxu0 0
      %928 = vmatpush1.bf16.msra.mxu0 0
      %929 = vmatprep.subr.bf16.mxu0 0
      %930 = vmatpush1.bf16.msra.mxu0 0
      %931 = vmatprep.subr.bf16.mxu0 0
      %932 = vmatpush1.bf16.msra.mxu0 0
      %933 = vmatprep.subr.bf16.mxu0 0
      %934 = vmatpush1.bf16.msra.mxu0 0
      %935 = vmatprep.subr.bf16.mxu0 0
      %936 = vmatpush1.bf16.msra.mxu0 0
      %937 = vmatprep.mubr.bf16.mxu0 0
      %938 = vmatmul.mubr.bf16.gmra.mrb[0].mxu0 %v891
      %v939 = vpop.f32.mrb[0].mxu0
      %v940 = vadd.f32 0.0, %v939
      %v941 = vpop.f32.mrb[0].mxu0
      %v942 = vpop.f32.mrb[0].mxu0
      %v943 = vadd.f32 0.0, %v942
      %v944 = vpop.f32.mrb[0].mxu0
      %945 = vmatprep.mubr.bf16.mxu0 0
      %946 = vmatmul.mubr.bf16.gmra.mrb[0].mxu0 %v894
      %v947 = vpop.f32.mrb[0].mxu0
      %v948 = vadd.f32 0.0, %v947
      %v949 = vpop.f32.mrb[0].mxu0
      %v950 = vpop.f32.mrb[0].mxu0
      %v951 = vadd.f32 0.0, %v950
      %v952 = vpop.f32.mrb[0].mxu0
      %953 = vmatprep.mubr.bf16.mxu0 0
      %954 = vmatmul.mubr.bf16.gmra.mrb[0].mxu0 %v897
      %v955 = vpop.f32.mrb[0].mxu0
      %v956 = vadd.f32 0.0, %v955
      %v957 = vpop.f32.mrb[0].mxu0
      %v958 = vpop.f32.mrb[0].mxu0
      %v959 = vadd.f32 0.0, %v958
      %v960 = vpop.f32.mrb[0].mxu0
      %961 = vmatprep.mubr.bf16.mxu0 0
      %962 = vmatmul.mubr.bf16.gmra.mrb[0].mxu0 %v900
      %v963 = vpop.f32.mrb[0].mxu0
      %v964 = vadd.f32 0.0, %v963
      %v965 = vpop.f32.mrb[0].mxu0
      %v966 = vpop.f32.mrb[0].mxu0
      %v967 = vadd.f32 0.0, %v966
      %v968 = vpop.f32.mrb[0].mxu0
      %969 = vdwg.mxu0
      %v970 = vadd.f32 %v867, %v940
      %v971 = vadd.f32 %v868, %v943
      %v972 = vadd.f32 %v869, %v948
      %v973 = vadd.f32 %v870, %v951
      %v974 = vadd.f32 %v871, %v956
      %v975 = vadd.f32 %v872, %v959
      %v976 = vadd.f32 %v873, %v964
      %v977 = vadd.f32 %v874, %v967
      %v978 = vld [vmem:[%s772 + $0x1] sm:$0xff]
      %v979 = vld [vmem:[%s772 + $0x11] sm:$0xff]
      %v980 = vld [vmem:[%s772 + $0x21] sm:$0xff]
      %v981 = vld [vmem:[%s772 + $0x31] sm:$0xff]
      %v982 = vld [vmem:[%s772 + $0x41] sm:$0xff]
      %v983 = vld [vmem:[%s772 + $0x51] sm:$0xff]
      %v984 = vld [vmem:[%s772 + $0x61] sm:$0xff]
      %v985 = vld [vmem:[%s772 + $0x71] sm:$0xff]
      %v986 = vpack.c.bf16 %v979, %v978
      %v987 = vpack.c.bf16 %v981, %v980
      %v988 = vpack.c.bf16 %v983, %v982
      %v989 = vpack.c.bf16 %v985, %v984
      %s990 = scalar_lea.vmem %s1, 16
      %v991 = vld [vmem:[%s990] sm:$0x3]
      %v993 = vsel %vm200, %v986, 0
      %v996 = vsel %vm200, %v987, 0
      %v999 = vsel %vm200, %v988, 0
      %v1002 = vsel %vm200, %v989, 0
      %v1005 = vsel %vm213, %v991, 0
      %1007 = vmatprep.subr.bf16.mxu0 0
      %1008 = vmatpush1.bf16.msra.mxu0 %v1005
      %1009 = vmatprep.subr.bf16.mxu0 0
      %1010 = vmatpush1.bf16.msra.mxu0 0
      %1011 = vmatprep.subr.bf16.mxu0 0
      %1012 = vmatpush1.bf16.msra.mxu0 0
      %1013 = vmatprep.subr.bf16.mxu0 0
      %1014 = vmatpush1.bf16.msra.mxu0 0
      %1015 = vmatprep.subr.bf16.mxu0 0
      %1016 = vmatpush1.bf16.msra.mxu0 0
      %1017 = vmatprep.subr.bf16.mxu0 0
      %1018 = vmatpush1.bf16.msra.mxu0 0
      %1019 = vmatprep.subr.bf16.mxu0 0
      %1020 = vmatpush1.bf16.msra.mxu0 0
      %1021 = vmatprep.subr.bf16.mxu0 0
      %1022 = vmatpush1.bf16.msra.mxu0 0
      %1023 = vmatprep.subr.bf16.mxu0 0
      %1024 = vmatpush1.bf16.msra.mxu0 0
      %1025 = vmatprep.subr.bf16.mxu0 0
      %1026 = vmatpush1.bf16.msra.mxu0 0
      %1027 = vmatprep.subr.bf16.mxu0 0
      %1028 = vmatpush1.bf16.msra.mxu0 0
      %1029 = vmatprep.subr.bf16.mxu0 0
      %1030 = vmatpush1.bf16.msra.mxu0 0
      %1031 = vmatprep.subr.bf16.mxu0 0
      %1032 = vmatpush1.bf16.msra.mxu0 0
      %1033 = vmatprep.subr.bf16.mxu0 0
      %1034 = vmatpush1.bf16.msra.mxu0 0
      %1035 = vmatprep.subr.bf16.mxu0 0
      %1036 = vmatpush1.bf16.msra.mxu0 0
      %1037 = vmatprep.subr.bf16.mxu0 0
      %1038 = vmatpush1.bf16.msra.mxu0 0
      %1039 = vmatprep.mubr.bf16.mxu0 0
      %1040 = vmatmul.mubr.bf16.gmra.mrb[0].mxu0 %v993
      %v1041 = vpop.f32.mrb[0].mxu0
      %v1042 = vadd.f32 0.0, %v1041
      %v1043 = vpop.f32.mrb[0].mxu0
      %v1044 = vpop.f32.mrb[0].mxu0
      %v1045 = vadd.f32 0.0, %v1044
      %v1046 = vpop.f32.mrb[0].mxu0
      %1047 = vmatprep.mubr.bf16.mxu0 0
      %1048 = vmatmul.mubr.bf16.gmra.mrb[0].mxu0 %v996
      %v1049 = vpop.f32.mrb[0].mxu0
      %v1050 = vadd.f32 0.0, %v1049
      %v1051 = vpop.f32.mrb[0].mxu0
      %v1052 = vpop.f32.mrb[0].mxu0
      %v1053 = vadd.f32 0.0, %v1052
      %v1054 = vpop.f32.mrb[0].mxu0
      %1055 = vmatprep.mubr.bf16.mxu0 0
      %1056 = vmatmul.mubr.bf16.gmra.mrb[0].mxu0 %v999
      %v1057 = vpop.f32.mrb[0].mxu0
      %v1058 = vadd.f32 0.0, %v1057
      %v1059 = vpop.f32.mrb[0].mxu0
      %v1060 = vpop.f32.mrb[0].mxu0
      %v1061 = vadd.f32 0.0, %v1060
      %v1062 = vpop.f32.mrb[0].mxu0
      %1063 = vmatprep.mubr.bf16.mxu0 0
      %1064 = vmatmul.mubr.bf16.gmra.mrb[0].mxu0 %v1002
      %v1065 = vpop.f32.mrb[0].mxu0
      %v1066 = vadd.f32 0.0, %v1065
      %v1067 = vpop.f32.mrb[0].mxu0
      %v1068 = vpop.f32.mrb[0].mxu0
      %v1069 = vadd.f32 0.0, %v1068
      %v1070 = vpop.f32.mrb[0].mxu0
      %1071 = vdwg.mxu0
      %v1072 = vadd.f32 %v970, %v1042
      %v1073 = vadd.f32 %v971, %v1045
      %v1074 = vadd.f32 %v972, %v1050
      %v1075 = vadd.f32 %v973, %v1053
      %v1076 = vadd.f32 %v974, %v1058
      %v1077 = vadd.f32 %v975, %v1061
      %v1078 = vadd.f32 %v976, %v1066
      %v1079 = vadd.f32 %v977, %v1069
      %v1080 = vld [vmem:[%s2] sm:$0x1]
      %v1082 = vlaneseq
      %v1083 = vshrl.u32 %v1082, 7
      %v1084 = vsub.s32 0, %v1083
      %v1085 = vrot.slane %v1080, %v1084
      %v1087 = vadd.f32 %v1072, %v1085
      %v1088 = vadd.f32 %v1073, %v1085
      %v1089 = vadd.f32 %v1074, %v1085
      %v1090 = vadd.f32 %v1075, %v1085
      %v1091 = vadd.f32 %v1076, %v1085
      %v1092 = vadd.f32 %v1077, %v1085
      %v1093 = vadd.f32 %v1078, %v1085
      %v1094 = vadd.f32 %v1079, %v1085
      %v1095 = vmax.f32 %v1087, 0.0
      %v1096 = vmax.f32 %v1088, 0.0
      %v1097 = vmax.f32 %v1089, 0.0
      %v1098 = vmax.f32 %v1090, 0.0
      %v1099 = vmax.f32 %v1091, 0.0
      %v1100 = vmax.f32 %v1092, 0.0
      %v1101 = vmax.f32 %v1093, 0.0
      %v1102 = vmax.f32 %v1094, 0.0
      %v1103 = vpack.c.bf16 %v1096, %v1095
      %v1104 = vpack.c.bf16 %v1098, %v1097
      %v1105 = vpack.c.bf16 %v1100, %v1099
      %v1106 = vpack.c.bf16 %v1102, %v1101
      %v1111 = vunpack.c.l.b16 %v1103
      %v1112 = vunpack.c.h.b16 %v1103
      %v1113 = vunpack.c.l.b16 %v1104
      %v1114 = vunpack.c.h.b16 %v1104
      %v1115 = vunpack.c.l.b16 %v1105
      %v1116 = vunpack.c.h.b16 %v1105
      %v1117 = vunpack.c.l.b16 %v1106
      %v1118 = vunpack.c.h.b16 %v1106
      %v1119 = vpack.c.b16 %v1111, %v1111
      %v1120 = vpack.c.b16 %v1112, %v1112
      %v1121 = vpack.c.b16 %v1113, %v1113
      %v1122 = vpack.c.b16 %v1114, %v1114
      %v1123 = vpack.c.b16 %v1115, %v1115
      %v1124 = vpack.c.b16 %v1116, %v1116
      %v1125 = vpack.c.b16 %v1117, %v1117
      %v1126 = vpack.c.b16 %v1118, %v1118
      %1135 = vst [vmem:[%s170] sm:$0xf] %v1119
      %1136 = vst [vmem:[%s170 + $0x4] sm:$0xf] %v1120
      %1137 = vst [vmem:[%s170 + $0x8] sm:$0xf] %v1121
      %1138 = vst [vmem:[%s170 + $0xc] sm:$0xf] %v1122
      %1139 = vst [vmem:[%s170 + $0x10] sm:$0xf] %v1123
      %1140 = vst [vmem:[%s170 + $0x14] sm:$0xf] %v1124
      %1141 = vst [vmem:[%s170 + $0x18] sm:$0xf] %v1125
      %1142 = vst [vmem:[%s170 + $0x1c] sm:$0xf] %v1126
      %p1143 = scmp.lt.s32.totalorder %s14, 1
      %s1144 = scalar_select %p1143, %s14, 1
      %s1145 = smul.addr %s1144, 8
      %s1146 = smul.addr %s1145, 4
      %s1147 = scalar_lea.vmem %s3, %s1146
      // Predicated region
      $region33: #{basic_block_forward.3} parent=31 // pred_check
        %p1148 = pneg %p100
      $region34: #{basic_block_forward.3} parent=31 // pred_check_branch
        %1150 = sbr.rel (%p1148) target = $region36
      $region35: #{basic_block_forward.3} parent=31 // pred_region
        _
      $region36: #{basic_block_forward.3} parent=31 // pred_fallthru
        _
    $region32: #{basic_block_forward.3} parent=5 // pred_fallthru
      _
    %p1151 = scmp.le.s32.totalorder 2, %s9
    // Predicated region
    $region37: #{basic_block_forward.3} parent=5 // pred_check
      %p1152 = pneg %p1151
    $region38: #{basic_block_forward.3} parent=5 // pred_check_branch
      %1154 = sbr.rel (%p1152) target = $region40
    $region39: #{basic_block_forward.3} parent=5 // pred_region
      %s1155 = ssub.s32 %s9, 2
      // Predicated region
      $region41: #{basic_block_forward.3} parent=39 // pred_check
        %p1156 = pneg %p106
      $region42: #{basic_block_forward.3} parent=39 // pred_check_branch
        %1158 = sbr.rel (%p1156) target = $region44
      $region43: #{basic_block_forward.3} parent=39 // pred_region
        %p1159 = scmp.lt.s32.totalorder %s15, 1
        %s1160 = scalar_select %p1159, %s15, 1
        %s1161 = smul.addr %s1160, 8
        %s1162 = smul.addr %s1161, 4
        %s1163 = scalar_lea.vmem %s3, %s1162
      $region44: #{basic_block_forward.3} parent=39 // pred_fallthru
        _
    $region40: #{basic_block_forward.3} parent=5 // pred_fallthru
      _
  $region6: #{basic_block_forward.3} parent=0 // loop_footer
    %s13 = sadd.s32 1, %s9
  $region7: #{basic_block_forward.3} parent=0 // loop_footer_branch
    %8 = sbr.rel target = $region3
  $region8: #{basic_block_forward.3} parent=0 // loop_exit
    _

// kernel: basic_block_forward.5
$region0: #{basic_block_forward.5}
  #allocation0 [shape = 'u32[]', space=smem, size = 0x4, offset = 0x4, fixed_abs, tag = 'smem constant byte address 0x4 - core index']
  #allocation1 [shape = 'u32[144,128]{1,0:T(1,128)}', space=vmem, size = 0x12000, scoped, tag = 'internal scratch']
  %s0 = inlined_call_operand.vmem [shape: f32[2,1,10,10,8], index: 0, kind: input, shape index: {}]
  %s1 = inlined_call_operand.vmem [shape: bf16[9,8,128], index: 1, kind: input, shape index: {}]
  %s2 = inlined_call_operand.vmem [shape: f32[1,128], index: 2, kind: input, shape index: {}]
  %s3 = inlined_call_operand.vmem [shape: bf16[2,64,128], index: 3, kind: input, shape index: {}]
  %s4 = inlined_call_operand.vmem [shape: f32[2,64,128], index: 4, kind: output, shape index: {}]
  %s5 = sld [smem:[#allocation0]]
  $region49: #{basic_block_forward.5} parent=0
    _
  %s7 = ssub.s32 1, %s5
  %s8 = scalar_select 0, %s7, %s5
  loop: start=0, step=1, limit=4
  $region2: #{basic_block_forward.5} parent=0 // loop_pre_header
    _
  $region3: #{basic_block_forward.5} parent=0 // loop_header
    %s10 = sphi 0, %s14
    %p11 = scmp.ge.s32.totalorder %s10, 4
    %s20 = sphi 0, %s22
    %s23 = sphi 0, %s20
    %s24 = sphi 0, %s23
    %s40 = sphi 0, %s24
    %s44 = sphi 0, %s44
    %s46 = sphi 0, %s44
    %s47 = sphi 0, %s46
    %s61 = sphi 0, %s47
    %s65 = sphi 0, %s65
    %s67 = sphi 0, %s65
    %s68 = sphi 0, %s67
    %s82 = sphi 0, %s68
    %s88 = sphi 0, %s90
    %s91 = sphi 0, %s88
    %s92 = sphi 0, %s91
    %s108 = sphi 0, %s92
    %s114 = sphi 0, %s116
    %s117 = sphi 0, %s114
    %s118 = sphi 0, %s117
    %s134 = sphi 0, %s118
  $region4: #{basic_block_forward.5} parent=0 // loop_header_branch
    %13 = sbr.rel (%p11) target = $region8
  $region5: #{basic_block_forward.5} parent=0 // loop_body
    %s15 = ssub.s32 %s10, 1
    %s16 = ssub.s32 %s10, 2
    %s17 = sadd.s32 %s10, 1
    %s18 = ssub.s32 %s10, %s17
    %p19 = scmp.eq.s32.totalorder %s18, 0
    %s21 = sadd.s32 %s20, 1
    %s22 = scalar_select %p19, %s20, %s21
    %p25 = pneg %p19
    %p26 = scmp.eq.s32.totalorder %s10, 1
    %p27 = por %p25, %p26
    %p28 = scmp.ne.s32.totalorder %s20, %s23
    %p29 = scmp.eq.s32.totalorder %s10, 0
    %p30 = por %p28, %p29
    %p31 = scmp.ne.s32.totalorder %s20, %s23
    %p32 = scmp.eq.s32.totalorder %s15, 1
    %p33 = por %p31, %p32
    %p34 = scmp.ne.s32.totalorder %s23, %s24
    %p35 = scmp.eq.s32.totalorder %s15, 0
    %p36 = por %p34, %p35
    %p37 = scmp.ne.s32.totalorder %s23, %s24
    %p38 = scmp.eq.s32.totalorder %s16, 1
    %p39 = por %p37, %p38
    %p41 = scmp.ne.s32.totalorder %s24, %s40
    %p42 = scmp.eq.s32.totalorder %s16, 0
    %p43 = por %p41, %p42
    %s45 = sadd.s32 %s44, 1
    %p48 = scmp.eq.s32.totalorder %s10, 1
    %p49 = scmp.ne.s32.totalorder %s44, %s46
    %p50 = scmp.eq.s32.totalorder %s10, 0
    %p51 = por %p49, %p50
    %p52 = scmp.ne.s32.totalorder %s44, %s46
    %p53 = scmp.eq.s32.totalorder %s15, 1
    %p54 = por %p52, %p53
    %p55 = scmp.ne.s32.totalorder %s46, %s47
    %p56 = scmp.eq.s32.totalorder %s15, 0
    %p57 = por %p55, %p56
    %p58 = scmp.ne.s32.totalorder %s46, %s47
    %p59 = scmp.eq.s32.totalorder %s16, 1
    %p60 = por %p58, %p59
    %p62 = scmp.ne.s32.totalorder %s47, %s61
    %p63 = scmp.eq.s32.totalorder %s16, 0
    %p64 = por %p62, %p63
    %s66 = sadd.s32 %s65, 1
    %p69 = scmp.eq.s32.totalorder %s10, 1
    %p70 = scmp.ne.s32.totalorder %s65, %s67
    %p71 = scmp.eq.s32.totalorder %s10, 0
    %p72 = por %p70, %p71
    %p73 = scmp.ne.s32.totalorder %s65, %s67
    %p74 = scmp.eq.s32.totalorder %s15, 1
    %p75 = por %p73, %p74
    %p76 = scmp.ne.s32.totalorder %s67, %s68
    %p77 = scmp.eq.s32.totalorder %s15, 0
    %p78 = por %p76, %p77
    %p79 = scmp.ne.s32.totalorder %s67, %s68
    %p80 = scmp.eq.s32.totalorder %s16, 1
    %p81 = por %p79, %p80
    %p83 = scmp.ne.s32.totalorder %s68, %s82
    %p84 = scmp.eq.s32.totalorder %s16, 0
    %p85 = por %p83, %p84
    %s86 = ssub.s32 %s10, %s17
    %p87 = scmp.eq.s32.totalorder %s86, 0
    %s89 = sadd.s32 %s88, 1
    %s90 = scalar_select %p87, %s88, %s89
    %p93 = pneg %p87
    %p94 = scmp.eq.s32.totalorder %s10, 1
    %p95 = por %p93, %p94
    %p96 = scmp.ne.s32.totalorder %s88, %s91
    %p97 = scmp.eq.s32.totalorder %s10, 0
    %p98 = por %p96, %p97
    %p99 = scmp.ne.s32.totalorder %s88, %s91
    %p100 = scmp.eq.s32.totalorder %s15, 1
    %p101 = por %p99, %p100
    %p102 = scmp.ne.s32.totalorder %s91, %s92
    %p103 = scmp.eq.s32.totalorder %s15, 0
    %p104 = por %p102, %p103
    %p105 = scmp.ne.s32.totalorder %s91, %s92
    %p106 = scmp.eq.s32.totalorder %s16, 1
    %p107 = por %p105, %p106
    %p109 = scmp.ne.s32.totalorder %s92, %s108
    %p110 = scmp.eq.s32.totalorder %s16, 0
    %p111 = por %p109, %p110
    %s112 = ssub.s32 %s10, %s17
    %p113 = scmp.eq.s32.totalorder %s112, 0
    %s115 = sadd.s32 %s114, 1
    %s116 = scalar_select %p113, %s114, %s115
    %p119 = pneg %p113
    %p120 = scmp.eq.s32.totalorder %s10, 1
    %p121 = por %p119, %p120
    %p122 = scmp.ne.s32.totalorder %s114, %s117
    %p123 = scmp.eq.s32.totalorder %s10, 0
    %p124 = por %p122, %p123
    %p125 = scmp.ne.s32.totalorder %s114, %s117
    %p126 = scmp.eq.s32.totalorder %s15, 1
    %p127 = por %p125, %p126
    %p128 = scmp.ne.s32.totalorder %s117, %s118
    %p129 = scmp.eq.s32.totalorder %s15, 0
    %p130 = por %p128, %p129
    %p131 = scmp.ne.s32.totalorder %s117, %s118
    %p132 = scmp.eq.s32.totalorder %s16, 1
    %p133 = por %p131, %p132
    %p135 = scmp.ne.s32.totalorder %s118, %s134
    %p136 = scmp.eq.s32.totalorder %s16, 0
    %p137 = por %p135, %p136
    %p138 = scmp.le.s32.totalorder 1, %s10
    %p139 = scmp.lt.s32.totalorder %s10, 3
    %p140 = pnand %p138, %p139
    %p141 = pneg %p140
    // Predicated region
    $region9: #{basic_block_forward.5} parent=5 // pred_check
      _
    $region10: #{basic_block_forward.5} parent=5 // pred_check_branch
      %143 = sbr.rel (%p140) target = $region12
    $region11: #{basic_block_forward.5} parent=5 // pred_region
      %s144 = ssub.s32 %s10, 1
      // Predicated region
      $region13: #{basic_block_forward.5} parent=11 // pred_check
        %p145 = pneg %p57
      $region14: #{basic_block_forward.5} parent=11 // pred_check_branch
        %147 = sbr.rel (%p145) target = $region16
      $region15: #{basic_block_forward.5} parent=11 // pred_region
        _
      $region16: #{basic_block_forward.5} parent=11 // pred_fallthru
        _
      // Predicated region
      $region17: #{basic_block_forward.5} parent=11 // pred_check
        %p148 = pneg %p78
      $region18: #{basic_block_forward.5} parent=11 // pred_check_branch
        %150 = sbr.rel (%p148) target = $region20
      $region19: #{basic_block_forward.5} parent=11 // pred_region
        _
      $region20: #{basic_block_forward.5} parent=11 // pred_fallthru
        _
    $region12: #{basic_block_forward.5} parent=5 // pred_fallthru
      _
    %p151 = scmp.lt.s32.totalorder %s10, 2
    // Predicated region
    $region21: #{basic_block_forward.5} parent=5 // pred_check
      %p152 = pneg %p151
    $region22: #{basic_block_forward.5} parent=5 // pred_check_branch
      %154 = sbr.rel (%p152) target = $region24
    $region23: #{basic_block_forward.5} parent=5 // pred_region
      // Predicated region
      $region25: #{basic_block_forward.5} parent=23 // pred_check
        %p155 = pneg %p30
      $region26: #{basic_block_forward.5} parent=23 // pred_check_branch
        %157 = sbr.rel (%p155) target = $region28
      $region27: #{basic_block_forward.5} parent=23 // pred_region
        %p158 = scmp.lt.s32.totalorder %s10, 1
        %s159 = scalar_select %p158, %s10, 1
        %s160 = smul.addr %s159, 20
        %s161 = smul.addr %s160, 8
        %s162 = scalar_lea.vmem %s0, %s161
      $region28: #{basic_block_forward.5} parent=23 // pred_fallthru
        _
      // Predicated region
      $region29: #{basic_block_forward.5} parent=23 // pred_check
        %p163 = pneg %p98
      $region30: #{basic_block_forward.5} parent=23 // pred_check_branch
        %165 = sbr.rel (%p163) target = $region32
      $region31: #{basic_block_forward.5} parent=23 // pred_region
        %p166 = scmp.lt.s32.totalorder %s10, 1
        %s167 = scalar_select %p166, %s10, 1
        %s168 = smul.addr %s167, 8
        %s169 = smul.addr %s168, 4
        %s170 = scalar_lea.vmem %s3, %s169
      $region32: #{basic_block_forward.5} parent=23 // pred_fallthru
        _
    $region24: #{basic_block_forward.5} parent=5 // pred_fallthru
      _
    %p171 = scmp.le.s32.totalorder 1, %s10
    %p172 = scmp.lt.s32.totalorder %s10, 3
    %p173 = pnand %p171, %p172
    %p174 = pneg %p173
    // Predicated region
    $region33: #{basic_block_forward.5} parent=5 // pred_check
      _
    $region34: #{basic_block_forward.5} parent=5 // pred_check_branch
      %176 = sbr.rel (%p173) target = $region36
    $region35: #{basic_block_forward.5} parent=5 // pred_region
      %s177 = ssub.s32 %s10, 1
      %p178 = scmp.lt.s32.totalorder %s15, 1
      %s179 = scalar_select %p178, %s15, 1
      %s180 = smul.addr %s179, 20
      %s181 = smul.addr %s180, 8
      %s182 = scalar_lea.vmem %s0, %s181
      %p183 = pneg %p36
      %p184 = pneg %p33
      %p185 = pneg %p57
      %p186 = pneg %p54
      %p187 = pneg %p78
      %p188 = pneg %p75
      %p189 = scmp.lt.s32.totalorder %s15, 1
      %s190 = scalar_select %p189, %s15, 1
      %s191 = smul.addr %s190, 8
      %s192 = smul.addr %s191, 4
      %s193 = scalar_lea.vmem %s3, %s192
      %p194 = pneg %p104
      %p195 = pneg %p101
      %p196 = pneg %p130
      %p197 = pneg %p127
      %p198 = scmp.lt.s32.totalorder %s15, 1
      %s199 = scalar_select %p198, %s15, 1
      %s200 = smul.addr %s199, 8
      %s201 = smul.addr %s200, 8
      %s202 = scalar_lea.vmem %s4, %s201
      %p203 = scmp.lt.s32.totalorder %s15, 1
      %s204 = scalar_select %p203, %s15, 1
      %s205 = smul.addr %s204, 20
      %s206 = smul.addr %s205, 8
      %s207 = scalar_lea.vmem %s0, %s206
      %p208 = scmp.lt.s32.totalorder %s15, 1
      %s209 = scalar_select %p208, %s15, 1
      %s210 = smul.addr %s209, 8
      %s211 = smul.addr %s210, 4
      %s212 = scalar_lea.vmem %s3, %s211
      %p213 = scmp.lt.s32.totalorder %s15, 1
      %s214 = scalar_select %p213, %s15, 1
      %s215 = smul.addr %s214, 8
      %s216 = smul.addr %s215, 8
      %s217 = scalar_lea.vmem %s4, %s216
      %v219 = vld [vmem:[%s207] sm:$0xff]
      %v220 = vld [vmem:[%s207 + $0x10] sm:$0xff]
      %v221 = vld [vmem:[%s207 + $0x20] sm:$0xff]
      %v222 = vld [vmem:[%s207 + $0x30] sm:$0xff]
      %v223 = vld [vmem:[%s207 + $0x40] sm:$0xff]
      %v224 = vld [vmem:[%s207 + $0x50] sm:$0xff]
      %v225 = vld [vmem:[%s207 + $0x60] sm:$0xff]
      %v226 = vld [vmem:[%s207 + $0x70] sm:$0xff]
      %v227 = vpack.c.bf16 %v220, %v219
      %v228 = vpack.c.bf16 %v222, %v221
      %v229 = vpack.c.bf16 %v224, %v223
      %v230 = vpack.c.bf16 %v226, %v225
      %v231 = vld [vmem:[%s1] sm:$0xf]
      %v232 = vld [vmem:[%s207 + $0x1] sm:$0xff]
      %v233 = vld [vmem:[%s207 + $0x11] sm:$0xff]
      %v234 = vld [vmem:[%s207 + $0x21] sm:$0xff]
      %v235 = vld [vmem:[%s207 + $0x31] sm:$0xff]
      %v236 = vld [vmem:[%s207 + $0x41] sm:$0xff]
      %v237 = vld [vmem:[%s207 + $0x51] sm:$0xff]
      %v238 = vld [vmem:[%s207 + $0x61] sm:$0xff]
      %v239 = vld [vmem:[%s207 + $0x71] sm:$0xff]
      %v240 = vpack.c.bf16 %v233, %v232
      %v241 = vpack.c.bf16 %v235, %v234
      %v242 = vpack.c.bf16 %v237, %v236
      %v243 = vpack.c.bf16 %v239, %v238
      %s244 = scalar_lea.vmem %s1, 4
      %v245 = vld [vmem:[%s244] sm:$0xf]
      %vm246 = vcmask 64512
      %v248 = vsel %vm246, %v240, 0
      %v251 = vsel %vm246, %v241, 0
      %v254 = vsel %vm246, %v242, 0
      %v257 = vsel %vm246, %v243, 0
      %vm259 = vcmask 1043456
      %v261 = vsel %vm259, %v245, 0
      %263 = vmatprep.subr.bf16.mxu0 0
      %264 = vmatpush1.bf16.msra.mxu0 %v261
      %265 = vmatprep.subr.bf16.mxu0 0
      %266 = vmatpush1.bf16.msra.mxu0 0
      %267 = vmatprep.subr.bf16.mxu0 0
      %268 = vmatpush1.bf16.msra.mxu0 0
      %269 = vmatprep.subr.bf16.mxu0 0
      %270 = vmatpush1.bf16.msra.mxu0 0
      %271 = vmatprep.subr.bf16.mxu0 0
      %272 = vmatpush1.bf16.msra.mxu0 0
      %273 = vmatprep.subr.bf16.mxu0 0
      %274 = vmatpush1.bf16.msra.mxu0 0
      %275 = vmatprep.subr.bf16.mxu0 0
      %276 = vmatpush1.bf16.msra.mxu0 0
      %277 = vmatprep.subr.bf16.mxu0 0
      %278 = vmatpush1.bf16.msra.mxu0 0
      %279 = vmatprep.subr.bf16.mxu0 0
      %280 = vmatpush1.bf16.msra.mxu0 0
      %281 = vmatprep.subr.bf16.mxu0 0
      %282 = vmatpush1.bf16.msra.mxu0 0
      %283 = vmatprep.subr.bf16.mxu0 0
      %284 = vmatpush1.bf16.msra.mxu0 0
      %285 = vmatprep.subr.bf16.mxu0 0
      %286 = vmatpush1.bf16.msra.mxu0 0
      %287 = vmatprep.subr.bf16.mxu0 0
      %288 = vmatpush1.bf16.msra.mxu0 0
      %289 = vmatprep.subr.bf16.mxu0 0
      %290 = vmatpush1.bf16.msra.mxu0 0
      %291 = vmatprep.subr.bf16.mxu0 0
      %292 = vmatpush1.bf16.msra.mxu0 0
      %293 = vmatprep.subr.bf16.mxu0 0
      %294 = vmatpush1.bf16.msra.mxu0 0
      %295 = vmatprep.mubr.bf16.mxu0 0
      %296 = vmatmul.mubr.bf16.gmra.mrb[0].mxu0 %v248
      %v297 = vpop.f32.mrb[0].mxu0
      %v298 = vadd.f32 0.0, %v297
      %v299 = vpop.f32.mrb[0].mxu0
      %v300 = vpop.f32.mrb[0].mxu0
      %v301 = vadd.f32 0.0, %v300
      %v302 = vpop.f32.mrb[0].mxu0
      %303 = vmatprep.mubr.bf16.mxu0 0
      %304 = vmatmul.mubr.bf16.gmra.mrb[0].mxu0 %v251
      %v305 = vpop.f32.mrb[0].mxu0
      %v306 = vadd.f32 0.0, %v305
      %v307 = vpop.f32.mrb[0].mxu0
      %v308 = vpop.f32.mrb[0].mxu0
      %v309 = vadd.f32 0.0, %v308
      %v310 = vpop.f32.mrb[0].mxu0
      %311 = vmatprep.mubr.bf16.mxu0 0
      %312 = vmatmul.mubr.bf16.gmra.mrb[0].mxu0 %v254
      %v313 = vpop.f32.mrb[0].mxu0
      %v314 = vadd.f32 0.0, %v313
      %v315 = vpop.f32.mrb[0].mxu0
      %v316 = vpop.f32.mrb[0].mxu0
      %v317 = vadd.f32 0.0, %v316
      %v318 = vpop.f32.mrb[0].mxu0
      %319 = vmatprep.mubr.bf16.mxu0 0
      %320 = vmatmul.mubr.bf16.gmra.mrb[0].mxu0 %v257
      %v321 = vpop.f32.mrb[0].mxu0
      %v322 = vadd.f32 0.0, %v321
      %v323 = vpop.f32.mrb[0].mxu0
      %v324 = vpop.f32.mrb[0].mxu0
      %v325 = vadd.f32 0.0, %v324
      %v326 = vpop.f32.mrb[0].mxu0
      %327 = vdwg.mxu0
      %v329 = vsel %vm246, %v227, 0
      %v332 = vsel %vm246, %v228, 0
      %v335 = vsel %vm246, %v229, 0
      %v338 = vsel %vm246, %v230, 0
      %v341 = vsel %vm259, %v231, 0
      %343 = vmatprep.subr.bf16.mxu0 0
      %344 = vmatpush1.bf16.msra.mxu0 %v341
      %345 = vmatprep.subr.bf16.mxu0 0
      %346 = vmatpush1.bf16.msra.mxu0 0
      %347 = vmatprep.subr.bf16.mxu0 0
      %348 = vmatpush1.bf16.msra.mxu0 0
      %349 = vmatprep.subr.bf16.mxu0 0
      %350 = vmatpush1.bf16.msra.mxu0 0
      %351 = vmatprep.subr.bf16.mxu0 0
      %352 = vmatpush1.bf16.msra.mxu0 0
      %353 = vmatprep.subr.bf16.mxu0 0
      %354 = vmatpush1.bf16.msra.mxu0 0
      %355 = vmatprep.subr.bf16.mxu0 0
      %356 = vmatpush1.bf16.msra.mxu0 0
      %357 = vmatprep.subr.bf16.mxu0 0
      %358 = vmatpush1.bf16.msra.mxu0 0
      %359 = vmatprep.subr.bf16.mxu0 0
      %360 = vmatpush1.bf16.msra.mxu0 0
      %361 = vmatprep.subr.bf16.mxu0 0
      %362 = vmatpush1.bf16.msra.mxu0 0
      %363 = vmatprep.subr.bf16.mxu0 0
      %364 = vmatpush1.bf16.msra.mxu0 0
      %365 = vmatprep.subr.bf16.mxu0 0
      %366 = vmatpush1.bf16.msra.mxu0 0
      %367 = vmatprep.subr.bf16.mxu0 0
      %368 = vmatpush1.bf16.msra.mxu0 0
      %369 = vmatprep.subr.bf16.mxu0 0
      %370 = vmatpush1.bf16.msra.mxu0 0
      %371 = vmatprep.subr.bf16.mxu0 0
      %372 = vmatpush1.bf16.msra.mxu0 0
      %373 = vmatprep.subr.bf16.mxu0 0
      %374 = vmatpush1.bf16.msra.mxu0 0
      %375 = vmatprep.mubr.bf16.mxu0 0
      %376 = vmatmul.mubr.bf16.gmra.mrb[0].mxu0 %v329
      %v377 = vpop.f32.mrb[0].mxu0
      %v378 = vadd.f32 %v298, %v377
      %v379 = vpop.f32.mrb[0].mxu0
      %v380 = vpop.f32.mrb[0].mxu0
      %v381 = vadd.f32 %v301, %v380
      %v382 = vpop.f32.mrb[0].mxu0
      %383 = vmatprep.mubr.bf16.mxu0 0
      %384 = vmatmul.mubr.bf16.gmra.mrb[0].mxu0 %v332
      %v385 = vpop.f32.mrb[0].mxu0
      %v386 = vadd.f32 %v306, %v385
      %v387 = vpop.f32.mrb[0].mxu0
      %v388 = vpop.f32.mrb[0].mxu0
      %v389 = vadd.f32 %v309, %v388
      %v390 = vpop.f32.mrb[0].mxu0
      %391 = vmatprep.mubr.bf16.mxu0 0
      %392 = vmatmul.mubr.bf16.gmra.mrb[0].mxu0 %v335
      %v393 = vpop.f32.mrb[0].mxu0
      %v394 = vadd.f32 %v314, %v393
      %v395 = vpop.f32.mrb[0].mxu0
      %v396 = vpop.f32.mrb[0].mxu0
      %v397 = vadd.f32 %v317, %v396
      %v398 = vpop.f32.mrb[0].mxu0
      %399 = vmatprep.mubr.bf16.mxu0 0
      %400 = vmatmul.mubr.bf16.gmra.mrb[0].mxu0 %v338
      %v401 = vpop.f32.mrb[0].mxu0
      %v402 = vadd.f32 %v322, %v401
      %v403 = vpop.f32.mrb[0].mxu0
      %v404 = vpop.f32.mrb[0].mxu0
      %v405 = vadd.f32 %v325, %v404
      %v406 = vpop.f32.mrb[0].mxu0
      %407 = vdwg.mxu0
      %v408 = vld [vmem:[%s207 + $0x2] sm:$0xff]
      %v409 = vld [vmem:[%s207 + $0x12] sm:$0xff]
      %v410 = vld [vmem:[%s207 + $0x22] sm:$0xff]
      %v411 = vld [vmem:[%s207 + $0x32] sm:$0xff]
      %v412 = vld [vmem:[%s207 + $0x42] sm:$0xff]
      %v413 = vld [vmem:[%s207 + $0x52] sm:$0xff]
      %v414 = vld [vmem:[%s207 + $0x62] sm:$0xff]
      %v415 = vld [vmem:[%s207 + $0x72] sm:$0xff]
      %v416 = vpack.c.bf16 %v409, %v408
      %v417 = vpack.c.bf16 %v411, %v410
      %v418 = vpack.c.bf16 %v413, %v412
      %v419 = vpack.c.bf16 %v415, %v414
      %s420 = scalar_lea.vmem %s1, 8
      %v421 = vld [vmem:[%s420] sm:$0xf]
      %v423 = vsel %vm246, %v416, 0
      %v426 = vsel %vm246, %v417, 0
      %v429 = vsel %vm246, %v418, 0
      %v432 = vsel %vm246, %v419, 0
      %v435 = vsel %vm259, %v421, 0
      %437 = vmatprep.subr.bf16.mxu0 0
      %438 = vmatpush1.bf16.msra.mxu0 %v435
      %439 = vmatprep.subr.bf16.mxu0 0
      %440 = vmatpush1.bf16.msra.mxu0 0
      %441 = vmatprep.subr.bf16.mxu0 0
      %442 = vmatpush1.bf16.msra.mxu0 0
      %443 = vmatprep.subr.bf16.mxu0 0
      %444 = vmatpush1.bf16.msra.mxu0 0
      %445 = vmatprep.subr.bf16.mxu0 0
      %446 = vmatpush1.bf16.msra.mxu0 0
      %447 = vmatprep.subr.bf16.mxu0 0
      %448 = vmatpush1.bf16.msra.mxu0 0
      %449 = vmatprep.subr.bf16.mxu0 0
      %450 = vmatpush1.bf16.msra.mxu0 0
      %451 = vmatprep.subr.bf16.mxu0 0
      %452 = vmatpush1.bf16.msra.mxu0 0
      %453 = vmatprep.subr.bf16.mxu0 0
      %454 = vmatpush1.bf16.msra.mxu0 0
      %455 = vmatprep.subr.bf16.mxu0 0
      %456 = vmatpush1.bf16.msra.mxu0 0
      %457 = vmatprep.subr.bf16.mxu0 0
      %458 = vmatpush1.bf16.msra.mxu0 0
      %459 = vmatprep.subr.bf16.mxu0 0
      %460 = vmatpush1.bf16.msra.mxu0 0
      %461 = vmatprep.subr.bf16.mxu0 0
      %462 = vmatpush1.bf16.msra.mxu0 0
      %463 = vmatprep.subr.bf16.mxu0 0
      %464 = vmatpush1.bf16.msra.mxu0 0
      %465 = vmatprep.subr.bf16.mxu0 0
      %466 = vmatpush1.bf16.msra.mxu0 0
      %467 = vmatprep.subr.bf16.mxu0 0
      %468 = vmatpush1.bf16.msra.mxu0 0
      %469 = vmatprep.mubr.bf16.mxu0 0
      %470 = vmatmul.mubr.bf16.gmra.mrb[0].mxu0 %v423
      %v471 = vpop.f32.mrb[0].mxu0
      %v472 = vadd.f32 0.0, %v471
      %v473 = vpop.f32.mrb[0].mxu0
      %v474 = vpop.f32.mrb[0].mxu0
      %v475 = vadd.f32 0.0, %v474
      %v476 = vpop.f32.mrb[0].mxu0
      %477 = vmatprep.mubr.bf16.mxu0 0
      %478 = vmatmul.mubr.bf16.gmra.mrb[0].mxu0 %v426
      %v479 = vpop.f32.mrb[0].mxu0
      %v480 = vadd.f32 0.0, %v479
      %v481 = vpop.f32.mrb[0].mxu0
      %v482 = vpop.f32.mrb[0].mxu0
      %v483 = vadd.f32 0.0, %v482
      %v484 = vpop.f32.mrb[0].mxu0
      %485 = vmatprep.mubr.bf16.mxu0 0
      %486 = vmatmul.mubr.bf16.gmra.mrb[0].mxu0 %v429
      %v487 = vpop.f32.mrb[0].mxu0
      %v488 = vadd.f32 0.0, %v487
      %v489 = vpop.f32.mrb[0].mxu0
      %v490 = vpop.f32.mrb[0].mxu0
      %v491 = vadd.f32 0.0, %v490
      %v492 = vpop.f32.mrb[0].mxu0
      %493 = vmatprep.mubr.bf16.mxu0 0
      %494 = vmatmul.mubr.bf16.gmra.mrb[0].mxu0 %v432
      %v495 = vpop.f32.mrb[0].mxu0
      %v496 = vadd.f32 0.0, %v495
      %v497 = vpop.f32.mrb[0].mxu0
      %v498 = vpop.f32.mrb[0].mxu0
      %v499 = vadd.f32 0.0, %v498
      %v500 = vpop.f32.mrb[0].mxu0
      %501 = vdwg.mxu0
      %v502 = vadd.f32 %v378, %v472
      %v503 = vadd.f32 %v381, %v475
      %v504 = vadd.f32 %v386, %v480
      %v505 = vadd.f32 %v389, %v483
      %v506 = vadd.f32 %v394, %v488
      %v507 = vadd.f32 %v397, %v491
      %v508 = vadd.f32 %v402, %v496
      %v509 = vadd.f32 %v405, %v499
      %s510 = scalar_lea.vmem %s207, 16
      %v511 = vld [vmem:[%s510] sm:$0xff]
      %v512 = vld [vmem:[%s510 + $0x10] sm:$0xff]
      %v513 = vld [vmem:[%s510 + $0x20] sm:$0xff]
      %v514 = vld [vmem:[%s510 + $0x30] sm:$0xff]
      %v515 = vld [vmem:[%s510 + $0x40] sm:$0xff]
      %v516 = vld [vmem:[%s510 + $0x50] sm:$0xff]
      %v517 = vld [vmem:[%s510 + $0x60] sm:$0xff]
      %v518 = vld [vmem:[%s510 + $0x70] sm:$0xff]
      %v519 = vpack.c.bf16 %v512, %v511
      %v520 = vpack.c.bf16 %v514, %v513
      %v521 = vpack.c.bf16 %v516, %v515
      %v522 = vpack.c.bf16 %v518, %v517
      %s523 = scalar_lea.vmem %s1, 12
      %v524 = vld [vmem:[%s523] sm:$0xf]
      %v526 = vsel %vm246, %v519, 0
      %v529 = vsel %vm246, %v520, 0
      %v532 = vsel %vm246, %v521, 0
      %v535 = vsel %vm246, %v522, 0
      %v538 = vsel %vm259, %v524, 0
      %540 = vmatprep.subr.bf16.mxu0 0
      %541 = vmatpush1.bf16.msra.mxu0 %v538
      %542 = vmatprep.subr.bf16.mxu0 0
      %543 = vmatpush1.bf16.msra.mxu0 0
      %544 = vmatprep.subr.bf16.mxu0 0
      %545 = vmatpush1.bf16.msra.mxu0 0
      %546 = vmatprep.subr.bf16.mxu0 0
      %547 = vmatpush1.bf16.msra.mxu0 0
      %548 = vmatprep.subr.bf16.mxu0 0
      %549 = vmatpush1.bf16.msra.mxu0 0
      %550 = vmatprep.subr.bf16.mxu0 0
      %551 = vmatpush1.bf16.msra.mxu0 0
      %552 = vmatprep.subr.bf16.mxu0 0
      %553 = vmatpush1.bf16.msra.mxu0 0
      %554 = vmatprep.subr.bf16.mxu0 0
      %555 = vmatpush1.bf16.msra.mxu0 0
      %556 = vmatprep.subr.bf16.mxu0 0
      %557 = vmatpush1.bf16.msra.mxu0 0
      %558 = vmatprep.subr.bf16.mxu0 0
      %559 = vmatpush1.bf16.msra.mxu0 0
      %560 = vmatprep.subr.bf16.mxu0 0
      %561 = vmatpush1.bf16.msra.mxu0 0
      %562 = vmatprep.subr.bf16.mxu0 0
      %563 = vmatpush1.bf16.msra.mxu0 0
      %564 = vmatprep.subr.bf16.mxu0 0
      %565 = vmatpush1.bf16.msra.mxu0 0
      %566 = vmatprep.subr.bf16.mxu0 0
      %567 = vmatpush1.bf16.msra.mxu0 0
      %568 = vmatprep.subr.bf16.mxu0 0
      %569 = vmatpush1.bf16.msra.mxu0 0
      %570 = vmatprep.subr.bf16.mxu0 0
      %571 = vmatpush1.bf16.msra.mxu0 0
      %572 = vmatprep.mubr.bf16.mxu0 0
      %573 = vmatmul.mubr.bf16.gmra.mrb[0].mxu0 %v526
      %v574 = vpop.f32.mrb[0].mxu0
      %v575 = vadd.f32 0.0, %v574
      %v576 = vpop.f32.mrb[0].mxu0
      %v577 = vpop.f32.mrb[0].mxu0
      %v578 = vadd.f32 0.0, %v577
      %v579 = vpop.f32.mrb[0].mxu0
      %580 = vmatprep.mubr.bf16.mxu0 0
      %581 = vmatmul.mubr.bf16.gmra.mrb[0].mxu0 %v529
      %v582 = vpop.f32.mrb[0].mxu0
      %v583 = vadd.f32 0.0, %v582
      %v584 = vpop.f32.mrb[0].mxu0
      %v585 = vpop.f32.mrb[0].mxu0
      %v586 = vadd.f32 0.0, %v585
      %v587 = vpop.f32.mrb[0].mxu0
      %588 = vmatprep.mubr.bf16.mxu0 0
      %589 = vmatmul.mubr.bf16.gmra.mrb[0].mxu0 %v532
      %v590 = vpop.f32.mrb[0].mxu0
      %v591 = vadd.f32 0.0, %v590
      %v592 = vpop.f32.mrb[0].mxu0
      %v593 = vpop.f32.mrb[0].mxu0
      %v594 = vadd.f32 0.0, %v593
      %v595 = vpop.f32.mrb[0].mxu0
      %596 = vmatprep.mubr.bf16.mxu0 0
      %597 = vmatmul.mubr.bf16.gmra.mrb[0].mxu0 %v535
      %v598 = vpop.f32.mrb[0].mxu0
      %v599 = vadd.f32 0.0, %v598
      %v600 = vpop.f32.mrb[0].mxu0
      %v601 = vpop.f32.mrb[0].mxu0
      %v602 = vadd.f32 0.0, %v601
      %v603 = vpop.f32.mrb[0].mxu0
      %604 = vdwg.mxu0
      %v605 = vadd.f32 %v502, %v575
      %v606 = vadd.f32 %v503, %v578
      %v607 = vadd.f32 %v504, %v583
      %v608 = vadd.f32 %v505, %v586
      %v609 = vadd.f32 %v506, %v591
      %v610 = vadd.f32 %v507, %v594
      %v611 = vadd.f32 %v508, %v599
      %v612 = vadd.f32 %v509, %v602
      %v613 = vld [vmem:[%s510 + $0x1] sm:$0xff]
      %v614 = vld [vmem:[%s510 + $0x11] sm:$0xff]
      %v615 = vld [vmem:[%s510 + $0x21] sm:$0xff]
      %v616 = vld [vmem:[%s510 + $0x31] sm:$0xff]
      %v617 = vld [vmem:[%s510 + $0x41] sm:$0xff]
      %v618 = vld [vmem:[%s510 + $0x51] sm:$0xff]
      %v619 = vld [vmem:[%s510 + $0x61] sm:$0xff]
      %v620 = vld [vmem:[%s510 + $0x71] sm:$0xff]
      %v621 = vpack.c.bf16 %v614, %v613
      %v622 = vpack.c.bf16 %v616, %v615
      %v623 = vpack.c.bf16 %v618, %v617
      %v624 = vpack.c.bf16 %v620, %v619
      %s625 = scalar_lea.vmem %s1, 16
      %v626 = vld [vmem:[%s625] sm:$0xf]
      %v628 = vsel %vm246, %v621, 0
      %v631 = vsel %vm246, %v622, 0
      %v634 = vsel %vm246, %v623, 0
      %v637 = vsel %vm246, %v624, 0
      %v640 = vsel %vm259, %v626, 0
      %642 = vmatprep.subr.bf16.mxu0 0
      %643 = vmatpush1.bf16.msra.mxu0 %v640
      %644 = vmatprep.subr.bf16.mxu0 0
      %645 = vmatpush1.bf16.msra.mxu0 0
      %646 = vmatprep.subr.bf16.mxu0 0
      %647 = vmatpush1.bf16.msra.mxu0 0
      %648 = vmatprep.subr.bf16.mxu0 0
      %649 = vmatpush1.bf16.msra.mxu0 0
      %650 = vmatprep.subr.bf16.mxu0 0
      %651 = vmatpush1.bf16.msra.mxu0 0
      %652 = vmatprep.subr.bf16.mxu0 0
      %653 = vmatpush1.bf16.msra.mxu0 0
      %654 = vmatprep.subr.bf16.mxu0 0
      %655 = vmatpush1.bf16.msra.mxu0 0
      %656 = vmatprep.subr.bf16.mxu0 0
      %657 = vmatpush1.bf16.msra.mxu0 0
      %658 = vmatprep.subr.bf16.mxu0 0
      %659 = vmatpush1.bf16.msra.mxu0 0
      %660 = vmatprep.subr.bf16.mxu0 0
      %661 = vmatpush1.bf16.msra.mxu0 0
      %662 = vmatprep.subr.bf16.mxu0 0
      %663 = vmatpush1.bf16.msra.mxu0 0
      %664 = vmatprep.subr.bf16.mxu0 0
      %665 = vmatpush1.bf16.msra.mxu0 0
      %666 = vmatprep.subr.bf16.mxu0 0
      %667 = vmatpush1.bf16.msra.mxu0 0
      %668 = vmatprep.subr.bf16.mxu0 0
      %669 = vmatpush1.bf16.msra.mxu0 0
      %670 = vmatprep.subr.bf16.mxu0 0
      %671 = vmatpush1.bf16.msra.mxu0 0
      %672 = vmatprep.subr.bf16.mxu0 0
      %673 = vmatpush1.bf16.msra.mxu0 0
      %674 = vmatprep.mubr.bf16.mxu0 0
      %675 = vmatmul.mubr.bf16.gmra.mrb[0].mxu0 %v628
      %v676 = vpop.f32.mrb[0].mxu0
      %v677 = vadd.f32 0.0, %v676
      %v678 = vpop.f32.mrb[0].mxu0
      %v679 = vpop.f32.mrb[0].mxu0
      %v680 = vadd.f32 0.0, %v679
      %v681 = vpop.f32.mrb[0].mxu0
      %682 = vmatprep.mubr.bf16.mxu0 0
      %683 = vmatmul.mubr.bf16.gmra.mrb[0].mxu0 %v631
      %v684 = vpop.f32.mrb[0].mxu0
      %v685 = vadd.f32 0.0, %v684
      %v686 = vpop.f32.mrb[0].mxu0
      %v687 = vpop.f32.mrb[0].mxu0
      %v688 = vadd.f32 0.0, %v687
      %v689 = vpop.f32.mrb[0].mxu0
      %690 = vmatprep.mubr.bf16.mxu0 0
      %691 = vmatmul.mubr.bf16.gmra.mrb[0].mxu0 %v634
      %v692 = vpop.f32.mrb[0].mxu0
      %v693 = vadd.f32 0.0, %v692
      %v694 = vpop.f32.mrb[0].mxu0
      %v695 = vpop.f32.mrb[0].mxu0
      %v696 = vadd.f32 0.0, %v695
      %v697 = vpop.f32.mrb[0].mxu0
      %698 = vmatprep.mubr.bf16.mxu0 0
      %699 = vmatmul.mubr.bf16.gmra.mrb[0].mxu0 %v637
      %v700 = vpop.f32.mrb[0].mxu0
      %v701 = vadd.f32 0.0, %v700
      %v702 = vpop.f32.mrb[0].mxu0
      %v703 = vpop.f32.mrb[0].mxu0
      %v704 = vadd.f32 0.0, %v703
      %v705 = vpop.f32.mrb[0].mxu0
      %706 = vdwg.mxu0
      %v707 = vadd.f32 %v605, %v677
      %v708 = vadd.f32 %v606, %v680
      %v709 = vadd.f32 %v607, %v685
      %v710 = vadd.f32 %v608, %v688
      %v711 = vadd.f32 %v609, %v693
      %v712 = vadd.f32 %v610, %v696
      %v713 = vadd.f32 %v611, %v701
      %v714 = vadd.f32 %v612, %v704
      %v715 = vld [vmem:[%s510 + $0x2] sm:$0xff]
      %v716 = vld [vmem:[%s510 + $0x12] sm:$0xff]
      %v717 = vld [vmem:[%s510 + $0x22] sm:$0xff]
      %v718 = vld [vmem:[%s510 + $0x32] sm:$0xff]
      %v719 = vld [vmem:[%s510 + $0x42] sm:$0xff]
      %v720 = vld [vmem:[%s510 + $0x52] sm:$0xff]
      %v721 = vld [vmem:[%s510 + $0x62] sm:$0xff]
      %v722 = vld [vmem:[%s510 + $0x72] sm:$0xff]
      %v723 = vpack.c.bf16 %v716, %v715
      %v724 = vpack.c.bf16 %v718, %v717
      %v725 = vpack.c.bf16 %v720, %v719
      %v726 = vpack.c.bf16 %v722, %v721
      %s727 = scalar_lea.vmem %s1, 20
      %v728 = vld [vmem:[%s727] sm:$0xf]
      %v730 = vsel %vm246, %v723, 0
      %v733 = vsel %vm246, %v724, 0
      %v736 = vsel %vm246, %v725, 0
      %v739 = vsel %vm246, %v726, 0
      %v742 = vsel %vm259, %v728, 0
      %744 = vmatprep.subr.bf16.mxu0 0
      %745 = vmatpush1.bf16.msra.mxu0 %v742
      %746 = vmatprep.subr.bf16.mxu0 0
      %747 = vmatpush1.bf16.msra.mxu0 0
      %748 = vmatprep.subr.bf16.mxu0 0
      %749 = vmatpush1.bf16.msra.mxu0 0
      %750 = vmatprep.subr.bf16.mxu0 0
      %751 = vmatpush1.bf16.msra.mxu0 0
      %752 = vmatprep.subr.bf16.mxu0 0
      %753 = vmatpush1.bf16.msra.mxu0 0
      %754 = vmatprep.subr.bf16.mxu0 0
      %755 = vmatpush1.bf16.msra.mxu0 0
      %756 = vmatprep.subr.bf16.mxu0 0
      %757 = vmatpush1.bf16.msra.mxu0 0
      %758 = vmatprep.subr.bf16.mxu0 0
      %759 = vmatpush1.bf16.msra.mxu0 0
      %760 = vmatprep.subr.bf16.mxu0 0
      %761 = vmatpush1.bf16.msra.mxu0 0
      %762 = vmatprep.subr.bf16.mxu0 0
      %763 = vmatpush1.bf16.msra.mxu0 0
      %764 = vmatprep.subr.bf16.mxu0 0
      %765 = vmatpush1.bf16.msra.mxu0 0
      %766 = vmatprep.subr.bf16.mxu0 0
      %767 = vmatpush1.bf16.msra.mxu0 0
      %768 = vmatprep.subr.bf16.mxu0 0
      %769 = vmatpush1.bf16.msra.mxu0 0
      %770 = vmatprep.subr.bf16.mxu0 0
      %771 = vmatpush1.bf16.msra.mxu0 0
      %772 = vmatprep.subr.bf16.mxu0 0
      %773 = vmatpush1.bf16.msra.mxu0 0
      %774 = vmatprep.subr.bf16.mxu0 0
      %775 = vmatpush1.bf16.msra.mxu0 0
      %776 = vmatprep.mubr.bf16.mxu0 0
      %777 = vmatmul.mubr.bf16.gmra.mrb[0].mxu0 %v730
      %v778 = vpop.f32.mrb[0].mxu0
      %v779 = vadd.f32 0.0, %v778
      %v780 = vpop.f32.mrb[0].mxu0
      %v781 = vpop.f32.mrb[0].mxu0
      %v782 = vadd.f32 0.0, %v781
      %v783 = vpop.f32.mrb[0].mxu0
      %784 = vmatprep.mubr.bf16.mxu0 0
      %785 = vmatmul.mubr.bf16.gmra.mrb[0].mxu0 %v733
      %v786 = vpop.f32.mrb[0].mxu0
      %v787 = vadd.f32 0.0, %v786
      %v788 = vpop.f32.mrb[0].mxu0
      %v789 = vpop.f32.mrb[0].mxu0
      %v790 = vadd.f32 0.0, %v789
      %v791 = vpop.f32.mrb[0].mxu0
      %792 = vmatprep.mubr.bf16.mxu0 0
      %793 = vmatmul.mubr.bf16.gmra.mrb[0].mxu0 %v736
      %v794 = vpop.f32.mrb[0].mxu0
      %v795 = vadd.f32 0.0, %v794
      %v796 = vpop.f32.mrb[0].mxu0
      %v797 = vpop.f32.mrb[0].mxu0
      %v798 = vadd.f32 0.0, %v797
      %v799 = vpop.f32.mrb[0].mxu0
      %800 = vmatprep.mubr.bf16.mxu0 0
      %801 = vmatmul.mubr.bf16.gmra.mrb[0].mxu0 %v739
      %v802 = vpop.f32.mrb[0].mxu0
      %v803 = vadd.f32 0.0, %v802
      %v804 = vpop.f32.mrb[0].mxu0
      %v805 = vpop.f32.mrb[0].mxu0
      %v806 = vadd.f32 0.0, %v805
      %v807 = vpop.f32.mrb[0].mxu0
      %808 = vdwg.mxu0
      %v809 = vadd.f32 %v707, %v779
      %v810 = vadd.f32 %v708, %v782
      %v811 = vadd.f32 %v709, %v787
      %v812 = vadd.f32 %v710, %v790
      %v813 = vadd.f32 %v711, %v795
      %v814 = vadd.f32 %v712, %v798
      %v815 = vadd.f32 %v713, %v803
      %v816 = vadd.f32 %v714, %v806
      %s817 = scalar_lea.vmem %s207, 32
      %v818 = vld [vmem:[%s817] sm:$0xff]
      %v819 = vld [vmem:[%s817 + $0x10] sm:$0xff]
      %v820 = vld [vmem:[%s817 + $0x20] sm:$0xff]
      %v821 = vld [vmem:[%s817 + $0x30] sm:$0xff]
      %v822 = vld [vmem:[%s817 + $0x40] sm:$0xff]
      %v823 = vld [vmem:[%s817 + $0x50] sm:$0xff]
      %v824 = vld [vmem:[%s817 + $0x60] sm:$0xff]
      %v825 = vld [vmem:[%s817 + $0x70] sm:$0xff]
      %v826 = vpack.c.bf16 %v819, %v818
      %v827 = vpack.c.bf16 %v821, %v820
      %v828 = vpack.c.bf16 %v823, %v822
      %v829 = vpack.c.bf16 %v825, %v824
      %s830 = scalar_lea.vmem %s1, 24
      %v831 = vld [vmem:[%s830] sm:$0xf]
      %v833 = vsel %vm246, %v826, 0
      %v836 = vsel %vm246, %v827, 0
      %v839 = vsel %vm246, %v828, 0
      %v842 = vsel %vm246, %v829, 0
      %v845 = vsel %vm259, %v831, 0
      %847 = vmatprep.subr.bf16.mxu0 0
      %848 = vmatpush1.bf16.msra.mxu0 %v845
      %849 = vmatprep.subr.bf16.mxu0 0
      %850 = vmatpush1.bf16.msra.mxu0 0
      %851 = vmatprep.subr.bf16.mxu0 0
      %852 = vmatpush1.bf16.msra.mxu0 0
      %853 = vmatprep.subr.bf16.mxu0 0
      %854 = vmatpush1.bf16.msra.mxu0 0
      %855 = vmatprep.subr.bf16.mxu0 0
      %856 = vmatpush1.bf16.msra.mxu0 0
      %857 = vmatprep.subr.bf16.mxu0 0
      %858 = vmatpush1.bf16.msra.mxu0 0
      %859 = vmatprep.subr.bf16.mxu0 0
      %860 = vmatpush1.bf16.msra.mxu0 0
      %861 = vmatprep.subr.bf16.mxu0 0
      %862 = vmatpush1.bf16.msra.mxu0 0
      %863 = vmatprep.subr.bf16.mxu0 0
      %864 = vmatpush1.bf16.msra.mxu0 0
      %865 = vmatprep.subr.bf16.mxu0 0
      %866 = vmatpush1.bf16.msra.mxu0 0
      %867 = vmatprep.subr.bf16.mxu0 0
      %868 = vmatpush1.bf16.msra.mxu0 0
      %869 = vmatprep.subr.bf16.mxu0 0
      %870 = vmatpush1.bf16.msra.mxu0 0
      %871 = vmatprep.subr.bf16.mxu0 0
      %872 = vmatpush1.bf16.msra.mxu0 0
      %873 = vmatprep.subr.bf16.mxu0 0
      %874 = vmatpush1.bf16.msra.mxu0 0
      %875 = vmatprep.subr.bf16.mxu0 0
      %876 = vmatpush1.bf16.msra.mxu0 0
      %877 = vmatprep.subr.bf16.mxu0 0
      %878 = vmatpush1.bf16.msra.mxu0 0
      %879 = vmatprep.mubr.bf16.mxu0 0
      %880 = vmatmul.mubr.bf16.gmra.mrb[0].mxu0 %v833
      %v881 = vpop.f32.mrb[0].mxu0
      %v882 = vadd.f32 0.0, %v881
      %v883 = vpop.f32.mrb[0].mxu0
      %v884 = vpop.f32.mrb[0].mxu0
      %v885 = vadd.f32 0.0, %v884
      %v886 = vpop.f32.mrb[0].mxu0
      %887 = vmatprep.mubr.bf16.mxu0 0
      %888 = vmatmul.mubr.bf16.gmra.mrb[0].mxu0 %v836
      %v889 = vpop.f32.mrb[0].mxu0
      %v890 = vadd.f32 0.0, %v889
      %v891 = vpop.f32.mrb[0].mxu0
      %v892 = vpop.f32.mrb[0].mxu0
      %v893 = vadd.f32 0.0, %v892
      %v894 = vpop.f32.mrb[0].mxu0
      %895 = vmatprep.mubr.bf16.mxu0 0
      %896 = vmatmul.mubr.bf16.gmra.mrb[0].mxu0 %v839
      %v897 = vpop.f32.mrb[0].mxu0
      %v898 = vadd.f32 0.0, %v897
      %v899 = vpop.f32.mrb[0].mxu0
      %v900 = vpop.f32.mrb[0].mxu0
      %v901 = vadd.f32 0.0, %v900
      %v902 = vpop.f32.mrb[0].mxu0
      %903 = vmatprep.mubr.bf16.mxu0 0
      %904 = vmatmul.mubr.bf16.gmra.mrb[0].mxu0 %v842
      %v905 = vpop.f32.mrb[0].mxu0
      %v906 = vadd.f32 0.0, %v905
      %v907 = vpop.f32.mrb[0].mxu0
      %v908 = vpop.f32.mrb[0].mxu0
      %v909 = vadd.f32 0.0, %v908
      %v910 = vpop.f32.mrb[0].mxu0
      %911 = vdwg.mxu0
      %v912 = vadd.f32 %v809, %v882
      %v913 = vadd.f32 %v810, %v885
      %v914 = vadd.f32 %v811, %v890
      %v915 = vadd.f32 %v812, %v893
      %v916 = vadd.f32 %v813, %v898
      %v917 = vadd.f32 %v814, %v901
      %v918 = vadd.f32 %v815, %v906
      %v919 = vadd.f32 %v816, %v909
      %v920 = vld [vmem:[%s817 + $0x1] sm:$0xff]
      %v921 = vld [vmem:[%s817 + $0x11] sm:$0xff]
      %v922 = vld [vmem:[%s817 + $0x21] sm:$0xff]
      %v923 = vld [vmem:[%s817 + $0x31] sm:$0xff]
      %v924 = vld [vmem:[%s817 + $0x41] sm:$0xff]
      %v925 = vld [vmem:[%s817 + $0x51] sm:$0xff]
      %v926 = vld [vmem:[%s817 + $0x61] sm:$0xff]
      %v927 = vld [vmem:[%s817 + $0x71] sm:$0xff]
      %v928 = vpack.c.bf16 %v921, %v920
      %v929 = vpack.c.bf16 %v923, %v922
      %v930 = vpack.c.bf16 %v925, %v924
      %v931 = vpack.c.bf16 %v927, %v926
      %s932 = scalar_lea.vmem %s1, 28
      %v933 = vld [vmem:[%s932] sm:$0xf]
      %v935 = vsel %vm246, %v928, 0
      %v938 = vsel %vm246, %v929, 0
      %v941 = vsel %vm246, %v930, 0
      %v944 = vsel %vm246, %v931, 0
      %v947 = vsel %vm259, %v933, 0
      %949 = vmatprep.subr.bf16.mxu0 0
      %950 = vmatpush1.bf16.msra.mxu0 %v947
      %951 = vmatprep.subr.bf16.mxu0 0
      %952 = vmatpush1.bf16.msra.mxu0 0
      %953 = vmatprep.subr.bf16.mxu0 0
      %954 = vmatpush1.bf16.msra.mxu0 0
      %955 = vmatprep.subr.bf16.mxu0 0
      %956 = vmatpush1.bf16.msra.mxu0 0
      %957 = vmatprep.subr.bf16.mxu0 0
      %958 = vmatpush1.bf16.msra.mxu0 0
      %959 = vmatprep.subr.bf16.mxu0 0
      %960 = vmatpush1.bf16.msra.mxu0 0
      %961 = vmatprep.subr.bf16.mxu0 0
      %962 = vmatpush1.bf16.msra.mxu0 0
      %963 = vmatprep.subr.bf16.mxu0 0
      %964 = vmatpush1.bf16.msra.mxu0 0
      %965 = vmatprep.subr.bf16.mxu0 0
      %966 = vmatpush1.bf16.msra.mxu0 0
      %967 = vmatprep.subr.bf16.mxu0 0
      %968 = vmatpush1.bf16.msra.mxu0 0
      %969 = vmatprep.subr.bf16.mxu0 0
      %970 = vmatpush1.bf16.msra.mxu0 0
      %971 = vmatprep.subr.bf16.mxu0 0
      %972 = vmatpush1.bf16.msra.mxu0 0
      %973 = vmatprep.subr.bf16.mxu0 0
      %974 = vmatpush1.bf16.msra.mxu0 0
      %975 = vmatprep.subr.bf16.mxu0 0
      %976 = vmatpush1.bf16.msra.mxu0 0
      %977 = vmatprep.subr.bf16.mxu0 0
      %978 = vmatpush1.bf16.msra.mxu0 0
      %979 = vmatprep.subr.bf16.mxu0 0
      %980 = vmatpush1.bf16.msra.mxu0 0
      %981 = vmatprep.mubr.bf16.mxu0 0
      %982 = vmatmul.mubr.bf16.gmra.mrb[0].mxu0 %v935
      %v983 = vpop.f32.mrb[0].mxu0
      %v984 = vadd.f32 0.0, %v983
      %v985 = vpop.f32.mrb[0].mxu0
      %v986 = vpop.f32.mrb[0].mxu0
      %v987 = vadd.f32 0.0, %v986
      %v988 = vpop.f32.mrb[0].mxu0
      %989 = vmatprep.mubr.bf16.mxu0 0
      %990 = vmatmul.mubr.bf16.gmra.mrb[0].mxu0 %v938
      %v991 = vpop.f32.mrb[0].mxu0
      %v992 = vadd.f32 0.0, %v991
      %v993 = vpop.f32.mrb[0].mxu0
      %v994 = vpop.f32.mrb[0].mxu0
      %v995 = vadd.f32 0.0, %v994
      %v996 = vpop.f32.mrb[0].mxu0
      %997 = vmatprep.mubr.bf16.mxu0 0
      %998 = vmatmul.mubr.bf16.gmra.mrb[0].mxu0 %v941
      %v999 = vpop.f32.mrb[0].mxu0
      %v1000 = vadd.f32 0.0, %v999
      %v1001 = vpop.f32.mrb[0].mxu0
      %v1002 = vpop.f32.mrb[0].mxu0
      %v1003 = vadd.f32 0.0, %v1002
      %v1004 = vpop.f32.mrb[0].mxu0
      %1005 = vmatprep.mubr.bf16.mxu0 0
      %1006 = vmatmul.mubr.bf16.gmra.mrb[0].mxu0 %v944
      %v1007 = vpop.f32.mrb[0].mxu0
      %v1008 = vadd.f32 0.0, %v1007
      %v1009 = vpop.f32.mrb[0].mxu0
      %v1010 = vpop.f32.mrb[0].mxu0
      %v1011 = vadd.f32 0.0, %v1010
      %v1012 = vpop.f32.mrb[0].mxu0
      %1013 = vdwg.mxu0
      %v1014 = vadd.f32 %v912, %v984
      %v1015 = vadd.f32 %v913, %v987
      %v1016 = vadd.f32 %v914, %v992
      %v1017 = vadd.f32 %v915, %v995
      %v1018 = vadd.f32 %v916, %v1000
      %v1019 = vadd.f32 %v917, %v1003
      %v1020 = vadd.f32 %v918, %v1008
      %v1021 = vadd.f32 %v919, %v1011
      %v1022 = vld [vmem:[%s817 + $0x2] sm:$0xff]
      %v1023 = vld [vmem:[%s817 + $0x12] sm:$0xff]
      %v1024 = vld [vmem:[%s817 + $0x22] sm:$0xff]
      %v1025 = vld [vmem:[%s817 + $0x32] sm:$0xff]
      %v1026 = vld [vmem:[%s817 + $0x42] sm:$0xff]
      %v1027 = vld [vmem:[%s817 + $0x52] sm:$0xff]
      %v1028 = vld [vmem:[%s817 + $0x62] sm:$0xff]
      %v1029 = vld [vmem:[%s817 + $0x72] sm:$0xff]
      %v1030 = vpack.c.bf16 %v1023, %v1022
      %v1031 = vpack.c.bf16 %v1025, %v1024
      %v1032 = vpack.c.bf16 %v1027, %v1026
      %v1033 = vpack.c.bf16 %v1029, %v1028
      %s1034 = scalar_lea.vmem %s1, 32
      %v1035 = vld [vmem:[%s1034] sm:$0xf]
      %v1037 = vsel %vm246, %v1030, 0
      %v1040 = vsel %vm246, %v1031, 0
      %v1043 = vsel %vm246, %v1032, 0
      %v1046 = vsel %vm246, %v1033, 0
      %v1049 = vsel %vm259, %v1035, 0
      %1051 = vmatprep.subr.bf16.mxu0 0
      %1052 = vmatpush1.bf16.msra.mxu0 %v1049
      %1053 = vmatprep.subr.bf16.mxu0 0
      %1054 = vmatpush1.bf16.msra.mxu0 0
      %1055 = vmatprep.subr.bf16.mxu0 0
      %1056 = vmatpush1.bf16.msra.mxu0 0
      %1057 = vmatprep.subr.bf16.mxu0 0
      %1058 = vmatpush1.bf16.msra.mxu0 0
      %1059 = vmatprep.subr.bf16.mxu0 0
      %1060 = vmatpush1.bf16.msra.mxu0 0
      %1061 = vmatprep.subr.bf16.mxu0 0
      %1062 = vmatpush1.bf16.msra.mxu0 0
      %1063 = vmatprep.subr.bf16.mxu0 0
      %1064 = vmatpush1.bf16.msra.mxu0 0
      %1065 = vmatprep.subr.bf16.mxu0 0
      %1066 = vmatpush1.bf16.msra.mxu0 0
      %1067 = vmatprep.subr.bf16.mxu0 0
      %1068 = vmatpush1.bf16.msra.mxu0 0
      %1069 = vmatprep.subr.bf16.mxu0 0
      %1070 = vmatpush1.bf16.msra.mxu0 0
      %1071 = vmatprep.subr.bf16.mxu0 0
      %1072 = vmatpush1.bf16.msra.mxu0 0
      %1073 = vmatprep.subr.bf16.mxu0 0
      %1074 = vmatpush1.bf16.msra.mxu0 0
      %1075 = vmatprep.subr.bf16.mxu0 0
      %1076 = vmatpush1.bf16.msra.mxu0 0
      %1077 = vmatprep.subr.bf16.mxu0 0
      %1078 = vmatpush1.bf16.msra.mxu0 0
      %1079 = vmatprep.subr.bf16.mxu0 0
      %1080 = vmatpush1.bf16.msra.mxu0 0
      %1081 = vmatprep.subr.bf16.mxu0 0
      %1082 = vmatpush1.bf16.msra.mxu0 0
      %1083 = vmatprep.mubr.bf16.mxu0 0
      %1084 = vmatmul.mubr.bf16.gmra.mrb[0].mxu0 %v1037
      %v1085 = vpop.f32.mrb[0].mxu0
      %v1086 = vadd.f32 0.0, %v1085
      %v1087 = vpop.f32.mrb[0].mxu0
      %v1088 = vpop.f32.mrb[0].mxu0
      %v1089 = vadd.f32 0.0, %v1088
      %v1090 = vpop.f32.mrb[0].mxu0
      %1091 = vmatprep.mubr.bf16.mxu0 0
      %1092 = vmatmul.mubr.bf16.gmra.mrb[0].mxu0 %v1040
      %v1093 = vpop.f32.mrb[0].mxu0
      %v1094 = vadd.f32 0.0, %v1093
      %v1095 = vpop.f32.mrb[0].mxu0
      %v1096 = vpop.f32.mrb[0].mxu0
      %v1097 = vadd.f32 0.0, %v1096
      %v1098 = vpop.f32.mrb[0].mxu0
      %1099 = vmatprep.mubr.bf16.mxu0 0
      %1100 = vmatmul.mubr.bf16.gmra.mrb[0].mxu0 %v1043
      %v1101 = vpop.f32.mrb[0].mxu0
      %v1102 = vadd.f32 0.0, %v1101
      %v1103 = vpop.f32.mrb[0].mxu0
      %v1104 = vpop.f32.mrb[0].mxu0
      %v1105 = vadd.f32 0.0, %v1104
      %v1106 = vpop.f32.mrb[0].mxu0
      %1107 = vmatprep.mubr.bf16.mxu0 0
      %1108 = vmatmul.mubr.bf16.gmra.mrb[0].mxu0 %v1046
      %v1109 = vpop.f32.mrb[0].mxu0
      %v1110 = vadd.f32 0.0, %v1109
      %v1111 = vpop.f32.mrb[0].mxu0
      %v1112 = vpop.f32.mrb[0].mxu0
      %v1113 = vadd.f32 0.0, %v1112
      %v1114 = vpop.f32.mrb[0].mxu0
      %1115 = vdwg.mxu0
      %v1116 = vadd.f32 %v1014, %v1086
      %v1117 = vadd.f32 %v1015, %v1089
      %v1118 = vadd.f32 %v1016, %v1094
      %v1119 = vadd.f32 %v1017, %v1097
      %v1120 = vadd.f32 %v1018, %v1102
      %v1121 = vadd.f32 %v1019, %v1105
      %v1122 = vadd.f32 %v1020, %v1110
      %v1123 = vadd.f32 %v1021, %v1113
      %v1124 = vld [vmem:[%s2] sm:$0x1]
      %v1126 = vlaneseq
      %v1127 = vshrl.u32 %v1126, 7
      %v1128 = vsub.s32 0, %v1127
      %v1129 = vrot.slane %v1124, %v1128
      %v1131 = vadd.f32 %v1116, %v1129
      %v1132 = vadd.f32 %v1117, %v1129
      %v1133 = vadd.f32 %v1118, %v1129
      %v1134 = vadd.f32 %v1119, %v1129
      %v1135 = vadd.f32 %v1120, %v1129
      %v1136 = vadd.f32 %v1121, %v1129
      %v1137 = vadd.f32 %v1122, %v1129
      %v1138 = vadd.f32 %v1123, %v1129
      %v1139 = vld [vmem:[%s212] sm:$0xf]
      %v1140 = vld [vmem:[%s212 + $0x4] sm:$0xf]
      %v1141 = vld [vmem:[%s212 + $0x8] sm:$0xf]
      %v1142 = vld [vmem:[%s212 + $0xc] sm:$0xf]
      %v1143 = vld [vmem:[%s212 + $0x10] sm:$0xf]
      %v1144 = vld [vmem:[%s212 + $0x14] sm:$0xf]
      %v1145 = vld [vmem:[%s212 + $0x18] sm:$0xf]
      %v1146 = vld [vmem:[%s212 + $0x1c] sm:$0xf]
      %v1147 = vunpack.c.l.bf16 %v1139
      %v1148 = vunpack.c.l.bf16 %v1140
      %v1149 = vunpack.c.l.bf16 %v1141
      %v1150 = vunpack.c.l.bf16 %v1142
      %v1151 = vunpack.c.l.bf16 %v1143
      %v1152 = vunpack.c.l.bf16 %v1144
      %v1153 = vunpack.c.l.bf16 %v1145
      %v1154 = vunpack.c.l.bf16 %v1146
      %v1155 = vadd.f32 %v1131, %v1147
      %v1156 = vadd.f32 %v1132, %v1148
      %v1157 = vadd.f32 %v1133, %v1149
      %v1158 = vadd.f32 %v1134, %v1150
      %v1159 = vadd.f32 %v1135, %v1151
      %v1160 = vadd.f32 %v1136, %v1152
      %v1161 = vadd.f32 %v1137, %v1153
      %v1162 = vadd.f32 %v1138, %v1154
      %v1163 = vmax.f32 %v1155, 0.0
      %v1164 = vmax.f32 %v1156, 0.0
      %v1165 = vmax.f32 %v1157, 0.0
      %v1166 = vmax.f32 %v1158, 0.0
      %v1167 = vmax.f32 %v1159, 0.0
      %v1168 = vmax.f32 %v1160, 0.0
      %v1169 = vmax.f32 %v1161, 0.0
      %v1170 = vmax.f32 %v1162, 0.0
      %1171 = vst [vmem:[%s217] sm:$0xff] %v1163
      %1172 = vst [vmem:[%s217 + $0x8] sm:$0xff] %v1164
      %1173 = vst [vmem:[%s217 + $0x10] sm:$0xff] %v1165
      %1174 = vst [vmem:[%s217 + $0x18] sm:$0xff] %v1166
      %1175 = vst [vmem:[%s217 + $0x20] sm:$0xff] %v1167
      %1176 = vst [vmem:[%s217 + $0x28] sm:$0xff] %v1168
      %1177 = vst [vmem:[%s217 + $0x30] sm:$0xff] %v1169
      %1178 = vst [vmem:[%s217 + $0x38] sm:$0xff] %v1170
      %p1179 = scmp.lt.s32.totalorder %s15, 1
      %s1180 = scalar_select %p1179, %s15, 1
      %s1181 = smul.addr %s1180, 8
      %s1182 = smul.addr %s1181, 8
      %s1183 = scalar_lea.vmem %s4, %s1182
      // Predicated region
      $region37: #{basic_block_forward.5} parent=35 // pred_check
        %p1184 = pneg %p127
      $region38: #{basic_block_forward.5} parent=35 // pred_check_branch
        %1186 = sbr.rel (%p1184) target = $region40
      $region39: #{basic_block_forward.5} parent=35 // pred_region
        _
      $region40: #{basic_block_forward.5} parent=35 // pred_fallthru
        _
    $region36: #{basic_block_forward.5} parent=5 // pred_fallthru
      _
    %p1187 = scmp.le.s32.totalorder 2, %s10
    // Predicated region
    $region41: #{basic_block_forward.5} parent=5 // pred_check
      %p1188 = pneg %p1187
    $region42: #{basic_block_forward.5} parent=5 // pred_check_branch
      %1190 = sbr.rel (%p1188) target = $region44
    $region43: #{basic_block_forward.5} parent=5 // pred_region
      %s1191 = ssub.s32 %s10, 2
      // Predicated region
      $region45: #{basic_block_forward.5} parent=43 // pred_check
        %p1192 = pneg %p133
      $region46: #{basic_block_forward.5} parent=43 // pred_check_branch
        %1194 = sbr.rel (%p1192) target = $region48
      $region47: #{basic_block_forward.5} parent=43 // pred_region
        %p1195 = scmp.lt.s32.totalorder %s16, 1
        %s1196 = scalar_select %p1195, %s16, 1
        %s1197 = smul.addr %s1196, 8
        %s1198 = smul.addr %s1197, 8
        %s1199 = scalar_lea.vmem %s4, %s1198
      $region48: #{basic_block_forward.5} parent=43 // pred_fallthru
        _
    $region44: #{basic_block_forward.5} parent=5 // pred_fallthru
      _
  $region6: #{basic_block_forward.5} parent=0 // loop_footer
    %s14 = sadd.s32 1, %s10
  $region7: #{basic_block_forward.5} parent=0 // loop_footer_branch
    %9 = sbr.rel target = $region3
  $region8: #{basic_block_forward.5} parent=0 // loop_exit
    _

</llo_original>
